<compile_context>
chip_gen: v6e
topology: v6e:2x2x1
jax: 0.10.0
libtpu: 0.0.40
codegen_flags: <defaults>
</compile_context>

<pallas_src>
import math
from functools import partial

import jax
import jax.numpy as jnp
from jax.experimental import pallas as pl
from jax.experimental.pallas import tpu as pltpu

# ---- hyper-parameters of the synthetic Encoder ------------------------------
D_MODEL = 32
D_FF = 64
NUM_HEADS = 4
NUM_LAYERS = 2
DROPOUT = 0.0          # eval mode: dropout layers are identity
EPS = 1e-6             # LayerNormalization eps in the reference module
NEG_INF = 1e9          # the module's self.inf


# ---- shared LayerNorm math (used inside the kernel) -------------------------
def _layer_norm(x, gamma, beta):
    mu = jnp.mean(x, axis=-1, keepdims=True)
    var = jnp.mean(jnp.square(x - mu), axis=-1, keepdims=True)
    return (x - mu) * jax.lax.rsqrt(var + EPS) * gamma + beta


# ---- fused encoder stack: all layers + final LN in one kernel ---------------
def encoder_stack_kernel(x_ref, mask_ref,
                         ln1_g_ref, ln1_b_ref,
                         wqkv_ref, bqkv_ref, wo_ref, bo_ref,
                         ln2_g_ref, ln2_b_ref,
                         w1_ref, b1_ref, w2_ref, b2_ref,
                         lnf_g_ref, lnf_b_ref,
                         out_ref,
                         *, num_heads, num_layers, batch, seq):
    B, S, H = batch, seq, num_heads
    D = x_ref.shape[-1]
    dk = D // H
    scale = 1.0 / math.sqrt(dk)

    # batch folded: all row-wise ops run on the (B*S, D) slab
    x = x_ref[...].reshape(B * S, D)

    # key-pad masks: compared once, reused by every layer (and every head)
    pads = [(mask_ref[b] == 0.0)[None] for b in range(B)]   # each (1, 1, S)

    for l in range(num_layers):                 # static unroll (small stack)
        # ---- x = x + MHA(LN1(x)) -------------------------------------------
        x1 = _layer_norm(x, ln1_g_ref[l], ln1_b_ref[l])      # (B*S, D)

        # ONE fused, lane-dense Q/K/V projection: (B*S, D) @ (D, 3D)
        qkv = jnp.dot(x1, wqkv_ref[l],
                      preferred_element_type=jnp.float32) + bqkv_ref[l]

        ctx_rows = []
        for b in range(B):                      # static loop, B is tiny
            qkv_b = qkv[b * S:(b + 1) * S]      # (S, 3D) static sublane slice
            # split heads (static lane slices + stack -> (H, S, dk))
            q = jnp.stack([qkv_b[:, h * dk:(h + 1) * dk]
                           for h in range(H)])
            k = jnp.stack([qkv_b[:, D + h * dk:D + (h + 1) * dk]
                           for h in range(H)])
            v = jnp.stack([qkv_b[:, 2 * D + h * dk:2 * D + (h + 1) * dk]
                           for h in range(H)])

            scores = jax.lax.dot_general(       # 'hsd,htd->hst'
                q, k, (((2,), (2,)), ((0,), (0,))),
                preferred_element_type=jnp.float32) * scale   # (H, S, S)
            scores = jnp.where(pads[b], -NEG_INF, scores)     # masked_fill

            # softmax with EUP reciprocal (+1 Newton step -> f32 accuracy)
            m = jnp.max(scores, axis=-1, keepdims=True)
            e = jnp.exp(scores - m)
            den = jnp.sum(e, axis=-1, keepdims=True)
            inv = pl.reciprocal(den, approx=True)
            inv = inv * (2.0 - den * inv)
            probs = e * inv                                   # (H, S, S)

            ctx = jax.lax.dot_general(          # 'hst,htd->hsd'
                probs, v, (((2,), (1,)), ((0,), (0,))),
                preferred_element_type=jnp.float32)           # (H, S, dk)

            # repack heads along lanes -> (S, H*dk) = (S, D)
            ctx_rows.append(jnp.concatenate([ctx[h] for h in range(H)],
                                            axis=1))

        ctx_flat = jnp.concatenate(ctx_rows, axis=0)          # (B*S, D)

        # ONE output-projection matmul: (B*S, D) @ (D, D)
        x = x + jnp.dot(ctx_flat, wo_ref[l],
                        preferred_element_type=jnp.float32) + bo_ref[l]

        # ---- x = x + FFN(LN2(x)) --------------------------------------------
        x2 = _layer_norm(x, ln2_g_ref[l], ln2_b_ref[l])
        h1 = jnp.maximum(
            jnp.dot(x2, w1_ref[l], preferred_element_type=jnp.float32)
            + b1_ref[l], 0.0)
        x = x + jnp.dot(h1, w2_ref[l],
                        preferred_element_type=jnp.float32) + b2_ref[l]

    # ---- final LayerNormalization + single writeback -------------------------
    out = _layer_norm(x, lnf_g_ref[...], lnf_b_ref[...])
    out_ref[...] = out.reshape(B, S, D)


# ---- wrappers ----------------------------------------------------------------
def _pack_layer(p):
    """Repack one layer's PyTorch-layout weights for the fused kernel."""
    wqkv = jnp.concatenate([p["wq"], p["wk"], p["wv"]], axis=1)   # (D, 3D)
    bqkv = jnp.concatenate([p["bq"], p["bk"], p["bv"]], axis=1)   # (1, 3D)
    return (p["ln1_g"], p["ln1_b"], wqkv, bqkv, p["wo"], p["bo"],
            p["ln2_g"], p["ln2_b"], p["w1"], p["b1"], p["w2"], p["b2"])


def encoder_forward(x, e_mask, params):
    """Encoder.forward: N fused EncoderLayers + final LayerNormalization."""
    B, S, D = x.shape
    num_layers = len(params["layers"])

    packed = [_pack_layer(lp) for lp in params["layers"]]
    stacked = [jnp.stack(ws, axis=0) for ws in zip(*packed)]     # leading L axis
    weights = stacked + [params["ln_g"], params["ln_b"]]

    vmem = pl.BlockSpec(memory_space=pltpu.MemorySpace.VMEM)     # full arrays

    return pl.pallas_call(
        partial(encoder_stack_kernel, num_heads=NUM_HEADS,
                num_layers=num_layers, batch=B, seq=S),
        out_shape=jax.ShapeDtypeStruct((B, S, D), jnp.float32),
        in_specs=[vmem] * (2 + len(weights)),
        out_specs=vmem,
    )(x, e_mask, *weights)


# ---- deterministic parameter initialization (PyTorch-default-like) -----------
def _linear(key, fan_in, fan_out):
    kw, kb = jax.random.split(key)
    bound = 1.0 / math.sqrt(fan_in)
    w = jax.random.uniform(kw, (fan_in, fan_out), jnp.float32, -bound, bound)
    b = jax.random.uniform(kb, (1, fan_out), jnp.float32, -bound, bound)
    return w, b


def init_params(key, d_model, d_ff, num_layers):
    layers = []
    for _ in range(num_layers):
        key, kq, kk, kv, ko, k1, k2 = jax.random.split(key, 7)
        wq, bq = _linear(kq, d_model, d_model)
        wk, bk = _linear(kk, d_model, d_model)
        wv, bv = _linear(kv, d_model, d_model)
        wo, bo = _linear(ko, d_model, d_model)
        w1, b1 = _linear(k1, d_model, d_ff)
        w2, b2 = _linear(k2, d_ff, d_model)
        layers.append(dict(
            ln1_g=jnp.ones((1, d_model), jnp.float32),
            ln1_b=jnp.zeros((1, d_model), jnp.float32),
            wq=wq, bq=bq, wk=wk, bk=bk, wv=wv, bv=bv, wo=wo, bo=bo,
            ln2_g=jnp.ones((1, d_model), jnp.float32),
            ln2_b=jnp.zeros((1, d_model), jnp.float32),
            w1=w1, b1=b1, w2=w2, b2=b2))
    return dict(layers=layers,
                ln_g=jnp.ones((1, d_model), jnp.float32),
                ln_b=jnp.zeros((1, d_model), jnp.float32))


# ---- pure-JAX reference (mirrors the PyTorch forward exactly) -----------------
def encoder_ref(x, e_mask, params):
    def ln(t, g, b):
        mu = t.mean(-1, keepdims=True)
        var = ((t - mu) ** 2).mean(-1, keepdims=True)
        return (t - mu) / jnp.sqrt(var + EPS) * g + b

    B, S, D = x.shape
    dk = D // NUM_HEADS
    mask4 = e_mask[:, :, None, :]                                # (B,1,1,S)
    for p in params["layers"]:
        x1 = ln(x, p["ln1_g"], p["ln1_b"])
        q = (x1 @ p["wq"] + p["bq"]).reshape(B, S, NUM_HEADS, dk).transpose(0, 2, 1, 3)
        k = (x1 @ p["wk"] + p["bk"]).reshape(B, S, NUM_HEADS, dk).transpose(0, 2, 1, 3)
        v = (x1 @ p["wv"] + p["bv"]).reshape(B, S, NUM_HEADS, dk).transpose(0, 2, 1, 3)
        scores = (q @ k.transpose(0, 1, 3, 2)) / math.sqrt(dk)
        scores = jnp.where(mask4 == 0.0, -NEG_INF, scores)
        probs = jax.nn.softmax(scores, axis=-1)
        attn = (probs @ v).transpose(0, 2, 1, 3).reshape(B, S, D)
        x = x + attn @ p["wo"] + p["bo"]
        x2 = ln(x, p["ln2_g"], p["ln2_b"])
        x = x + jnp.maximum(x2 @ p["w1"] + p["b1"], 0.0) @ p["w2"] + p["b2"]
    return ln(x, params["ln_g"], params["ln_b"])


if __name__ == "__main__":
    B, S = 2, 8
    key = jax.random.PRNGKey(0)
    k_par, k_x = jax.random.split(key)

    params = init_params(k_par, D_MODEL, D_FF, NUM_LAYERS)
    x = jax.random.normal(k_x, (B, S, D_MODEL), jnp.float32)

    # padding mask: first sequence fully valid, second padded after 5 tokens
    lengths = jnp.array([S, 5])
    e_mask = (jnp.arange(S)[None, :] < lengths[:, None]).astype(jnp.float32)
    e_mask = e_mask.reshape(B, 1, S)

    out = jax.block_until_ready(encoder_forward(x, e_mask, params))

    ref = jax.block_until_ready(encoder_ref(x, e_mask, params))
    assert out.shape == (B, S, D_MODEL)
    assert jnp.allclose(out, ref, rtol=1e-3, atol=1e-3), \
        f"max abs err {jnp.abs(out - ref).max()}"

    print("KERNEL_OK")
</pallas_src>

<mosaic_0001>
module attributes {stable_mosaic.version = 11 : i64} {
  func.func @encoder_stack_kernel(%arg0: memref<2x8x32xf32, #tpu.memory_space<vmem>>, %arg1: memref<2x1x8xf32, #tpu.memory_space<vmem>>, %arg2: memref<2x1x32xf32, #tpu.memory_space<vmem>>, %arg3: memref<2x1x32xf32, #tpu.memory_space<vmem>>, %arg4: memref<2x32x96xf32, #tpu.memory_space<vmem>>, %arg5: memref<2x1x96xf32, #tpu.memory_space<vmem>>, %arg6: memref<2x32x32xf32, #tpu.memory_space<vmem>>, %arg7: memref<2x1x32xf32, #tpu.memory_space<vmem>>, %arg8: memref<2x1x32xf32, #tpu.memory_space<vmem>>, %arg9: memref<2x1x32xf32, #tpu.memory_space<vmem>>, %arg10: memref<2x32x64xf32, #tpu.memory_space<vmem>>, %arg11: memref<2x1x64xf32, #tpu.memory_space<vmem>>, %arg12: memref<2x64x32xf32, #tpu.memory_space<vmem>>, %arg13: memref<2x1x32xf32, #tpu.memory_space<vmem>>, %arg14: memref<1x32xf32, #tpu.memory_space<vmem>>, %arg15: memref<1x32xf32, #tpu.memory_space<vmem>>, %arg16: memref<2x8x32xf32, #tpu.memory_space<vmem>>) attributes {dimension_semantics = [], scalar_prefetch = 0 : i64, scratch_operands = 0 : i64, tpu.core_type = #tpu.core_type<tc>} {
    %c0 = arith.constant 0 : index
    %c0_0 = arith.constant 0 : index
    %c0_1 = arith.constant 0 : index
    %0 = vector.load %arg0[%c0, %c0_0, %c0_1] : memref<2x8x32xf32, #tpu.memory_space<vmem>>, vector<2x8x32xf32>
    %1 = vector.shape_cast %0 : vector<2x8x32xf32> to vector<16x32xf32>
    %c0_2 = arith.constant 0 : index
    %c0_3 = arith.constant 0 : index
    %c0_4 = arith.constant 0 : index
    %2 = vector.load %arg1[%c0_2, %c0_3, %c0_4] : memref<2x1x8xf32, #tpu.memory_space<vmem>>, vector<1x1x8xf32>
    %3 = vector.shape_cast %2 : vector<1x1x8xf32> to vector<1x8xf32>
    %cst = arith.constant 0.000000e+00 : f32
    %4 = vector.broadcast %cst : f32 to vector<1x8xf32>
    %5 = arith.cmpf oeq, %3, %4 : vector<1x8xf32>
    %6 = vector.shape_cast %5 : vector<1x8xi1> to vector<1x1x8xi1>
    %c1 = arith.constant 1 : index
    %c0_5 = arith.constant 0 : index
    %c0_6 = arith.constant 0 : index
    %7 = vector.load %arg1[%c1, %c0_5, %c0_6] : memref<2x1x8xf32, #tpu.memory_space<vmem>>, vector<1x1x8xf32>
    %8 = vector.shape_cast %7 : vector<1x1x8xf32> to vector<1x8xf32>
    %cst_7 = arith.constant 0.000000e+00 : f32
    %9 = vector.broadcast %cst_7 : f32 to vector<1x8xf32>
    %10 = arith.cmpf oeq, %8, %9 : vector<1x8xf32>
    %11 = vector.shape_cast %10 : vector<1x8xi1> to vector<1x1x8xi1>
    %c0_8 = arith.constant 0 : index
    %c0_9 = arith.constant 0 : index
    %c0_10 = arith.constant 0 : index
    %12 = vector.load %arg2[%c0_8, %c0_9, %c0_10] : memref<2x1x32xf32, #tpu.memory_space<vmem>>, vector<1x1x32xf32>
    %13 = vector.shape_cast %12 : vector<1x1x32xf32> to vector<1x32xf32>
    %c0_11 = arith.constant 0 : index
    %c0_12 = arith.constant 0 : index
    %c0_13 = arith.constant 0 : index
    %14 = vector.load %arg3[%c0_11, %c0_12, %c0_13] : memref<2x1x32xf32, #tpu.memory_space<vmem>>, vector<1x1x32xf32>
    %15 = vector.shape_cast %14 : vector<1x1x32xf32> to vector<1x32xf32>
    %cst_14 = arith.constant dense<0.000000e+00> : vector<16xf32>
    %16 = vector.multi_reduction <add>, %1, %cst_14 [1] : vector<16x32xf32> to vector<16xf32>
    %17 = vector.shape_cast %16 : vector<16xf32> to vector<16x1xf32>
    %cst_15 = arith.constant 3.200000e+01 : f32
    %18 = vector.broadcast %cst_15 : f32 to vector<16x1xf32>
    %19 = arith.divf %17, %18 : vector<16x1xf32>
    %20 = vector.broadcast %19 : vector<16x1xf32> to vector<16x32xf32>
    %21 = arith.subf %1, %20 : vector<16x32xf32>
    %22 = arith.mulf %21, %21 : vector<16x32xf32>
    %cst_16 = arith.constant dense<0.000000e+00> : vector<16xf32>
    %23 = vector.multi_reduction <add>, %22, %cst_16 [1] : vector<16x32xf32> to vector<16xf32>
    %24 = vector.shape_cast %23 : vector<16xf32> to vector<16x1xf32>
    %cst_17 = arith.constant 3.200000e+01 : f32
    %25 = vector.broadcast %cst_17 : f32 to vector<16x1xf32>
    %26 = arith.divf %24, %25 : vector<16x1xf32>
    %27 = vector.broadcast %19 : vector<16x1xf32> to vector<16x32xf32>
    %28 = arith.subf %1, %27 : vector<16x32xf32>
    %cst_18 = arith.constant 9.99999997E-7 : f32
    %29 = vector.broadcast %cst_18 : f32 to vector<16x1xf32>
    %30 = arith.addf %26, %29 : vector<16x1xf32>
    %31 = math.rsqrt %30 : vector<16x1xf32>
    %32 = vector.broadcast %31 : vector<16x1xf32> to vector<16x32xf32>
    %33 = arith.mulf %28, %32 : vector<16x32xf32>
    %34 = vector.broadcast %13 : vector<1x32xf32> to vector<16x32xf32>
    %35 = arith.mulf %33, %34 : vector<16x32xf32>
    %36 = vector.broadcast %15 : vector<1x32xf32> to vector<16x32xf32>
    %37 = arith.addf %35, %36 : vector<16x32xf32>
    %c0_19 = arith.constant 0 : index
    %c0_20 = arith.constant 0 : index
    %c0_21 = arith.constant 0 : index
    %38 = vector.load %arg4[%c0_19, %c0_20, %c0_21] : memref<2x32x96xf32, #tpu.memory_space<vmem>>, vector<1x32x96xf32>
    %39 = vector.shape_cast %38 : vector<1x32x96xf32> to vector<32x96xf32>
    %cst_22 = arith.constant dense<0.000000e+00> : vector<16x96xf32>
    %40 = tpu.matmul %37, %39, %cst_22 {dimension_numbers = #tpu.dot_dimension_numbers<[1], [0], [0], [1], [0, 0, 1, 1], [], []>} : vector<16x32xf32>, vector<32x96xf32>, vector<16x96xf32> -> vector<16x96xf32>
    %c0_23 = arith.constant 0 : index
    %c0_24 = arith.constant 0 : index
    %c0_25 = arith.constant 0 : index
    %41 = vector.load %arg5[%c0_23, %c0_24, %c0_25] : memref<2x1x96xf32, #tpu.memory_space<vmem>>, vector<1x1x96xf32>
    %42 = vector.shape_cast %41 : vector<1x1x96xf32> to vector<1x96xf32>
    %43 = vector.broadcast %42 : vector<1x96xf32> to vector<16x96xf32>
    %44 = arith.addf %40, %43 : vector<16x96xf32>
    %45 = vector.extract_strided_slice %44 {offsets = [0, 0], sizes = [8, 96], strides = [1, 1]} : vector<16x96xf32> to vector<8x96xf32>
    %46 = vector.extract_strided_slice %45 {offsets = [0, 0], sizes = [8, 8], strides = [1, 1]} : vector<8x96xf32> to vector<8x8xf32>
    %47 = vector.extract_strided_slice %45 {offsets = [0, 8], sizes = [8, 8], strides = [1, 1]} : vector<8x96xf32> to vector<8x8xf32>
    %48 = vector.extract_strided_slice %45 {offsets = [0, 16], sizes = [8, 8], strides = [1, 1]} : vector<8x96xf32> to vector<8x8xf32>
    %49 = vector.extract_strided_slice %45 {offsets = [0, 24], sizes = [8, 8], strides = [1, 1]} : vector<8x96xf32> to vector<8x8xf32>
    %50 = vector.shape_cast %46 : vector<8x8xf32> to vector<1x8x8xf32>
    %51 = vector.shape_cast %47 : vector<8x8xf32> to vector<1x8x8xf32>
    %52 = vector.shape_cast %48 : vector<8x8xf32> to vector<1x8x8xf32>
    %53 = vector.shape_cast %49 : vector<8x8xf32> to vector<1x8x8xf32>
    %54 = tpu.concatenate %50, %51, %52, %53 in 0 : vector<1x8x8xf32>, vector<1x8x8xf32>, vector<1x8x8xf32>, vector<1x8x8xf32> -> vector<4x8x8xf32>
    %55 = vector.extract_strided_slice %45 {offsets = [0, 32], sizes = [8, 8], strides = [1, 1]} : vector<8x96xf32> to vector<8x8xf32>
    %56 = vector.extract_strided_slice %45 {offsets = [0, 40], sizes = [8, 8], strides = [1, 1]} : vector<8x96xf32> to vector<8x8xf32>
    %57 = vector.extract_strided_slice %45 {offsets = [0, 48], sizes = [8, 8], strides = [1, 1]} : vector<8x96xf32> to vector<8x8xf32>
    %58 = vector.extract_strided_slice %45 {offsets = [0, 56], sizes = [8, 8], strides = [1, 1]} : vector<8x96xf32> to vector<8x8xf32>
    %59 = vector.shape_cast %55 : vector<8x8xf32> to vector<1x8x8xf32>
    %60 = vector.shape_cast %56 : vector<8x8xf32> to vector<1x8x8xf32>
    %61 = vector.shape_cast %57 : vector<8x8xf32> to vector<1x8x8xf32>
    %62 = vector.shape_cast %58 : vector<8x8xf32> to vector<1x8x8xf32>
    %63 = tpu.concatenate %59, %60, %61, %62 in 0 : vector<1x8x8xf32>, vector<1x8x8xf32>, vector<1x8x8xf32>, vector<1x8x8xf32> -> vector<4x8x8xf32>
    %64 = vector.extract_strided_slice %45 {offsets = [0, 64], sizes = [8, 8], strides = [1, 1]} : vector<8x96xf32> to vector<8x8xf32>
    %65 = vector.extract_strided_slice %45 {offsets = [0, 72], sizes = [8, 8], strides = [1, 1]} : vector<8x96xf32> to vector<8x8xf32>
    %66 = vector.extract_strided_slice %45 {offsets = [0, 80], sizes = [8, 8], strides = [1, 1]} : vector<8x96xf32> to vector<8x8xf32>
    %67 = vector.extract_strided_slice %45 {offsets = [0, 88], sizes = [8, 8], strides = [1, 1]} : vector<8x96xf32> to vector<8x8xf32>
    %68 = vector.shape_cast %64 : vector<8x8xf32> to vector<1x8x8xf32>
    %69 = vector.shape_cast %65 : vector<8x8xf32> to vector<1x8x8xf32>
    %70 = vector.shape_cast %66 : vector<8x8xf32> to vector<1x8x8xf32>
    %71 = vector.shape_cast %67 : vector<8x8xf32> to vector<1x8x8xf32>
    %72 = tpu.concatenate %68, %69, %70, %71 in 0 : vector<1x8x8xf32>, vector<1x8x8xf32>, vector<1x8x8xf32>, vector<1x8x8xf32> -> vector<4x8x8xf32>
    %cst_26 = arith.constant dense<0.000000e+00> : vector<4x8x8xf32>
    %73 = tpu.matmul %54, %63, %cst_26 {dimension_numbers = #tpu.dot_dimension_numbers<[2], [2], [1], [1], [0, 0, 0, 1, 1, 1], [0], [0]>} : vector<4x8x8xf32>, vector<4x8x8xf32>, vector<4x8x8xf32> -> vector<4x8x8xf32>
    %cst_27 = arith.constant 0.353553385 : f32
    %74 = vector.broadcast %cst_27 : f32 to vector<4x8x8xf32>
    %75 = arith.mulf %73, %74 : vector<4x8x8xf32>
    %cst_28 = arith.constant -1.000000e+09 : f32
    %76 = vector.shape_cast %6 : vector<1x1x8xi1> to vector<1x1x8xi1>
    %77 = vector.broadcast %76 : vector<1x1x8xi1> to vector<4x8x8xi1>
    %78 = vector.broadcast %cst_28 : f32 to vector<4x8x8xf32>
    %79 = arith.select %77, %78, %75 : vector<4x8x8xi1>, vector<4x8x8xf32>
    %cst_29 = arith.constant dense<0xFF800000> : vector<4x8xf32>
    %80 = vector.multi_reduction <maximumf>, %79, %cst_29 [2] : vector<4x8x8xf32> to vector<4x8xf32>
    %81 = vector.shape_cast %80 : vector<4x8xf32> to vector<4x8x1xf32>
    %82 = vector.broadcast %81 : vector<4x8x1xf32> to vector<4x8x8xf32>
    %83 = arith.subf %79, %82 : vector<4x8x8xf32>
    %84 = math.exp %83 : vector<4x8x8xf32>
    %cst_30 = arith.constant dense<0.000000e+00> : vector<4x8xf32>
    %85 = vector.multi_reduction <add>, %84, %cst_30 [2] : vector<4x8x8xf32> to vector<4x8xf32>
    %86 = vector.shape_cast %85 : vector<4x8xf32> to vector<4x8x1xf32>
    %87 = tpu.reciprocal %86 {approx = true} : vector<4x8x1xf32> -> vector<4x8x1xf32>
    %88 = arith.mulf %86, %87 : vector<4x8x1xf32>
    %cst_31 = arith.constant 2.000000e+00 : f32
    %89 = vector.broadcast %cst_31 : f32 to vector<4x8x1xf32>
    %90 = arith.subf %89, %88 : vector<4x8x1xf32>
    %91 = arith.mulf %87, %90 : vector<4x8x1xf32>
    %92 = vector.broadcast %91 : vector<4x8x1xf32> to vector<4x8x8xf32>
    %93 = arith.mulf %84, %92 : vector<4x8x8xf32>
    %cst_32 = arith.constant dense<0.000000e+00> : vector<4x8x8xf32>
    %94 = tpu.matmul %93, %72, %cst_32 {dimension_numbers = #tpu.dot_dimension_numbers<[2], [1], [1], [2], [0, 0, 0, 1, 1, 2], [0], [0]>} : vector<4x8x8xf32>, vector<4x8x8xf32>, vector<4x8x8xf32> -> vector<4x8x8xf32>
    %95 = vector.extract_strided_slice %94 {offsets = [0, 0, 0], sizes = [1, 8, 8], strides = [1, 1, 1]} : vector<4x8x8xf32> to vector<1x8x8xf32>
    %96 = vector.shape_cast %95 : vector<1x8x8xf32> to vector<8x8xf32>
    %97 = vector.extract_strided_slice %94 {offsets = [1, 0, 0], sizes = [1, 8, 8], strides = [1, 1, 1]} : vector<4x8x8xf32> to vector<1x8x8xf32>
    %98 = vector.shape_cast %97 : vector<1x8x8xf32> to vector<8x8xf32>
    %99 = vector.extract_strided_slice %94 {offsets = [2, 0, 0], sizes = [1, 8, 8], strides = [1, 1, 1]} : vector<4x8x8xf32> to vector<1x8x8xf32>
    %100 = vector.shape_cast %99 : vector<1x8x8xf32> to vector<8x8xf32>
    %101 = vector.extract_strided_slice %94 {offsets = [3, 0, 0], sizes = [1, 8, 8], strides = [1, 1, 1]} : vector<4x8x8xf32> to vector<1x8x8xf32>
    %102 = vector.shape_cast %101 : vector<1x8x8xf32> to vector<8x8xf32>
    %103 = tpu.concatenate %96, %98, %100, %102 in 1 : vector<8x8xf32>, vector<8x8xf32>, vector<8x8xf32>, vector<8x8xf32> -> vector<8x32xf32>
    %104 = vector.extract_strided_slice %44 {offsets = [8, 0], sizes = [8, 96], strides = [1, 1]} : vector<16x96xf32> to vector<8x96xf32>
    %105 = vector.extract_strided_slice %104 {offsets = [0, 0], sizes = [8, 8], strides = [1, 1]} : vector<8x96xf32> to vector<8x8xf32>
    %106 = vector.extract_strided_slice %104 {offsets = [0, 8], sizes = [8, 8], strides = [1, 1]} : vector<8x96xf32> to vector<8x8xf32>
    %107 = vector.extract_strided_slice %104 {offsets = [0, 16], sizes = [8, 8], strides = [1, 1]} : vector<8x96xf32> to vector<8x8xf32>
    %108 = vector.extract_strided_slice %104 {offsets = [0, 24], sizes = [8, 8], strides = [1, 1]} : vector<8x96xf32> to vector<8x8xf32>
    %109 = vector.shape_cast %105 : vector<8x8xf32> to vector<1x8x8xf32>
    %110 = vector.shape_cast %106 : vector<8x8xf32> to vector<1x8x8xf32>
    %111 = vector.shape_cast %107 : vector<8x8xf32> to vector<1x8x8xf32>
    %112 = vector.shape_cast %108 : vector<8x8xf32> to vector<1x8x8xf32>
    %113 = tpu.concatenate %109, %110, %111, %112 in 0 : vector<1x8x8xf32>, vector<1x8x8xf32>, vector<1x8x8xf32>, vector<1x8x8xf32> -> vector<4x8x8xf32>
    %114 = vector.extract_strided_slice %104 {offsets = [0, 32], sizes = [8, 8], strides = [1, 1]} : vector<8x96xf32> to vector<8x8xf32>
    %115 = vector.extract_strided_slice %104 {offsets = [0, 40], sizes = [8, 8], strides = [1, 1]} : vector<8x96xf32> to vector<8x8xf32>
    %116 = vector.extract_strided_slice %104 {offsets = [0, 48], sizes = [8, 8], strides = [1, 1]} : vector<8x96xf32> to vector<8x8xf32>
    %117 = vector.extract_strided_slice %104 {offsets = [0, 56], sizes = [8, 8], strides = [1, 1]} : vector<8x96xf32> to vector<8x8xf32>
    %118 = vector.shape_cast %114 : vector<8x8xf32> to vector<1x8x8xf32>
    %119 = vector.shape_cast %115 : vector<8x8xf32> to vector<1x8x8xf32>
    %120 = vector.shape_cast %116 : vector<8x8xf32> to vector<1x8x8xf32>
    %121 = vector.shape_cast %117 : vector<8x8xf32> to vector<1x8x8xf32>
    %122 = tpu.concatenate %118, %119, %120, %121 in 0 : vector<1x8x8xf32>, vector<1x8x8xf32>, vector<1x8x8xf32>, vector<1x8x8xf32> -> vector<4x8x8xf32>
    %123 = vector.extract_strided_slice %104 {offsets = [0, 64], sizes = [8, 8], strides = [1, 1]} : vector<8x96xf32> to vector<8x8xf32>
    %124 = vector.extract_strided_slice %104 {offsets = [0, 72], sizes = [8, 8], strides = [1, 1]} : vector<8x96xf32> to vector<8x8xf32>
    %125 = vector.extract_strided_slice %104 {offsets = [0, 80], sizes = [8, 8], strides = [1, 1]} : vector<8x96xf32> to vector<8x8xf32>
    %126 = vector.extract_strided_slice %104 {offsets = [0, 88], sizes = [8, 8], strides = [1, 1]} : vector<8x96xf32> to vector<8x8xf32>
    %127 = vector.shape_cast %123 : vector<8x8xf32> to vector<1x8x8xf32>
    %128 = vector.shape_cast %124 : vector<8x8xf32> to vector<1x8x8xf32>
    %129 = vector.shape_cast %125 : vector<8x8xf32> to vector<1x8x8xf32>
    %130 = vector.shape_cast %126 : vector<8x8xf32> to vector<1x8x8xf32>
    %131 = tpu.concatenate %127, %128, %129, %130 in 0 : vector<1x8x8xf32>, vector<1x8x8xf32>, vector<1x8x8xf32>, vector<1x8x8xf32> -> vector<4x8x8xf32>
    %cst_33 = arith.constant dense<0.000000e+00> : vector<4x8x8xf32>
    %132 = tpu.matmul %113, %122, %cst_33 {dimension_numbers = #tpu.dot_dimension_numbers<[2], [2], [1], [1], [0, 0, 0, 1, 1, 1], [0], [0]>} : vector<4x8x8xf32>, vector<4x8x8xf32>, vector<4x8x8xf32> -> vector<4x8x8xf32>
    %cst_34 = arith.constant 0.353553385 : f32
    %133 = vector.broadcast %cst_34 : f32 to vector<4x8x8xf32>
    %134 = arith.mulf %132, %133 : vector<4x8x8xf32>
    %cst_35 = arith.constant -1.000000e+09 : f32
    %135 = vector.shape_cast %11 : vector<1x1x8xi1> to vector<1x1x8xi1>
    %136 = vector.broadcast %135 : vector<1x1x8xi1> to vector<4x8x8xi1>
    %137 = vector.broadcast %cst_35 : f32 to vector<4x8x8xf32>
    %138 = arith.select %136, %137, %134 : vector<4x8x8xi1>, vector<4x8x8xf32>
    %cst_36 = arith.constant dense<0xFF800000> : vector<4x8xf32>
    %139 = vector.multi_reduction <maximumf>, %138, %cst_36 [2] : vector<4x8x8xf32> to vector<4x8xf32>
    %140 = vector.shape_cast %139 : vector<4x8xf32> to vector<4x8x1xf32>
    %141 = vector.broadcast %140 : vector<4x8x1xf32> to vector<4x8x8xf32>
    %142 = arith.subf %138, %141 : vector<4x8x8xf32>
    %143 = math.exp %142 : vector<4x8x8xf32>
    %cst_37 = arith.constant dense<0.000000e+00> : vector<4x8xf32>
    %144 = vector.multi_reduction <add>, %143, %cst_37 [2] : vector<4x8x8xf32> to vector<4x8xf32>
    %145 = vector.shape_cast %144 : vector<4x8xf32> to vector<4x8x1xf32>
    %146 = tpu.reciprocal %145 {approx = true} : vector<4x8x1xf32> -> vector<4x8x1xf32>
    %147 = arith.mulf %145, %146 : vector<4x8x1xf32>
    %cst_38 = arith.constant 2.000000e+00 : f32
    %148 = vector.broadcast %cst_38 : f32 to vector<4x8x1xf32>
    %149 = arith.subf %148, %147 : vector<4x8x1xf32>
    %150 = arith.mulf %146, %149 : vector<4x8x1xf32>
    %151 = vector.broadcast %150 : vector<4x8x1xf32> to vector<4x8x8xf32>
    %152 = arith.mulf %143, %151 : vector<4x8x8xf32>
    %cst_39 = arith.constant dense<0.000000e+00> : vector<4x8x8xf32>
    %153 = tpu.matmul %152, %131, %cst_39 {dimension_numbers = #tpu.dot_dimension_numbers<[2], [1], [1], [2], [0, 0, 0, 1, 1, 2], [0], [0]>} : vector<4x8x8xf32>, vector<4x8x8xf32>, vector<4x8x8xf32> -> vector<4x8x8xf32>
    %154 = vector.extract_strided_slice %153 {offsets = [0, 0, 0], sizes = [1, 8, 8], strides = [1, 1, 1]} : vector<4x8x8xf32> to vector<1x8x8xf32>
    %155 = vector.shape_cast %154 : vector<1x8x8xf32> to vector<8x8xf32>
    %156 = vector.extract_strided_slice %153 {offsets = [1, 0, 0], sizes = [1, 8, 8], strides = [1, 1, 1]} : vector<4x8x8xf32> to vector<1x8x8xf32>
    %157 = vector.shape_cast %156 : vector<1x8x8xf32> to vector<8x8xf32>
    %158 = vector.extract_strided_slice %153 {offsets = [2, 0, 0], sizes = [1, 8, 8], strides = [1, 1, 1]} : vector<4x8x8xf32> to vector<1x8x8xf32>
    %159 = vector.shape_cast %158 : vector<1x8x8xf32> to vector<8x8xf32>
    %160 = vector.extract_strided_slice %153 {offsets = [3, 0, 0], sizes = [1, 8, 8], strides = [1, 1, 1]} : vector<4x8x8xf32> to vector<1x8x8xf32>
    %161 = vector.shape_cast %160 : vector<1x8x8xf32> to vector<8x8xf32>
    %162 = tpu.concatenate %155, %157, %159, %161 in 1 : vector<8x8xf32>, vector<8x8xf32>, vector<8x8xf32>, vector<8x8xf32> -> vector<8x32xf32>
    %163 = tpu.concatenate %103, %162 in 0 : vector<8x32xf32>, vector<8x32xf32> -> vector<16x32xf32>
    %c0_40 = arith.constant 0 : index
    %c0_41 = arith.constant 0 : index
    %c0_42 = arith.constant 0 : index
    %164 = vector.load %arg6[%c0_40, %c0_41, %c0_42] : memref<2x32x32xf32, #tpu.memory_space<vmem>>, vector<1x32x32xf32>
    %165 = vector.shape_cast %164 : vector<1x32x32xf32> to vector<32x32xf32>
    %cst_43 = arith.constant dense<0.000000e+00> : vector<16x32xf32>
    %166 = tpu.matmul %163, %165, %cst_43 {dimension_numbers = #tpu.dot_dimension_numbers<[1], [0], [0], [1], [0, 0, 1, 1], [], []>} : vector<16x32xf32>, vector<32x32xf32>, vector<16x32xf32> -> vector<16x32xf32>
    %167 = arith.addf %1, %166 : vector<16x32xf32>
    %c0_44 = arith.constant 0 : index
    %c0_45 = arith.constant 0 : index
    %c0_46 = arith.constant 0 : index
    %168 = vector.load %arg7[%c0_44, %c0_45, %c0_46] : memref<2x1x32xf32, #tpu.memory_space<vmem>>, vector<1x1x32xf32>
    %169 = vector.shape_cast %168 : vector<1x1x32xf32> to vector<1x32xf32>
    %170 = vector.broadcast %169 : vector<1x32xf32> to vector<16x32xf32>
    %171 = arith.addf %167, %170 : vector<16x32xf32>
    %c0_47 = arith.constant 0 : index
    %c0_48 = arith.constant 0 : index
    %c0_49 = arith.constant 0 : index
    %172 = vector.load %arg8[%c0_47, %c0_48, %c0_49] : memref<2x1x32xf32, #tpu.memory_space<vmem>>, vector<1x1x32xf32>
    %173 = vector.shape_cast %172 : vector<1x1x32xf32> to vector<1x32xf32>
    %c0_50 = arith.constant 0 : index
    %c0_51 = arith.constant 0 : index
    %c0_52 = arith.constant 0 : index
    %174 = vector.load %arg9[%c0_50, %c0_51, %c0_52] : memref<2x1x32xf32, #tpu.memory_space<vmem>>, vector<1x1x32xf32>
    %175 = vector.shape_cast %174 : vector<1x1x32xf32> to vector<1x32xf32>
    %cst_53 = arith.constant dense<0.000000e+00> : vector<16xf32>
    %176 = vector.multi_reduction <add>, %171, %cst_53 [1] : vector<16x32xf32> to vector<16xf32>
    %177 = vector.shape_cast %176 : vector<16xf32> to vector<16x1xf32>
    %cst_54 = arith.constant 3.200000e+01 : f32
    %178 = vector.broadcast %cst_54 : f32 to vector<16x1xf32>
    %179 = arith.divf %177, %178 : vector<16x1xf32>
    %180 = vector.broadcast %179 : vector<16x1xf32> to vector<16x32xf32>
    %181 = arith.subf %171, %180 : vector<16x32xf32>
    %182 = arith.mulf %181, %181 : vector<16x32xf32>
    %cst_55 = arith.constant dense<0.000000e+00> : vector<16xf32>
    %183 = vector.multi_reduction <add>, %182, %cst_55 [1] : vector<16x32xf32> to vector<16xf32>
    %184 = vector.shape_cast %183 : vector<16xf32> to vector<16x1xf32>
    %cst_56 = arith.constant 3.200000e+01 : f32
    %185 = vector.broadcast %cst_56 : f32 to vector<16x1xf32>
    %186 = arith.divf %184, %185 : vector<16x1xf32>
    %187 = vector.broadcast %179 : vector<16x1xf32> to vector<16x32xf32>
    %188 = arith.subf %171, %187 : vector<16x32xf32>
    %cst_57 = arith.constant 9.99999997E-7 : f32
    %189 = vector.broadcast %cst_57 : f32 to vector<16x1xf32>
    %190 = arith.addf %186, %189 : vector<16x1xf32>
    %191 = math.rsqrt %190 : vector<16x1xf32>
    %192 = vector.broadcast %191 : vector<16x1xf32> to vector<16x32xf32>
    %193 = arith.mulf %188, %192 : vector<16x32xf32>
    %194 = vector.broadcast %173 : vector<1x32xf32> to vector<16x32xf32>
    %195 = arith.mulf %193, %194 : vector<16x32xf32>
    %196 = vector.broadcast %175 : vector<1x32xf32> to vector<16x32xf32>
    %197 = arith.addf %195, %196 : vector<16x32xf32>
    %c0_58 = arith.constant 0 : index
    %c0_59 = arith.constant 0 : index
    %c0_60 = arith.constant 0 : index
    %198 = vector.load %arg10[%c0_58, %c0_59, %c0_60] : memref<2x32x64xf32, #tpu.memory_space<vmem>>, vector<1x32x64xf32>
    %199 = vector.shape_cast %198 : vector<1x32x64xf32> to vector<32x64xf32>
    %cst_61 = arith.constant dense<0.000000e+00> : vector<16x64xf32>
    %200 = tpu.matmul %197, %199, %cst_61 {dimension_numbers = #tpu.dot_dimension_numbers<[1], [0], [0], [1], [0, 0, 1, 1], [], []>} : vector<16x32xf32>, vector<32x64xf32>, vector<16x64xf32> -> vector<16x64xf32>
    %c0_62 = arith.constant 0 : index
    %c0_63 = arith.constant 0 : index
    %c0_64 = arith.constant 0 : index
    %201 = vector.load %arg11[%c0_62, %c0_63, %c0_64] : memref<2x1x64xf32, #tpu.memory_space<vmem>>, vector<1x1x64xf32>
    %202 = vector.shape_cast %201 : vector<1x1x64xf32> to vector<1x64xf32>
    %203 = vector.broadcast %202 : vector<1x64xf32> to vector<16x64xf32>
    %204 = arith.addf %200, %203 : vector<16x64xf32>
    %cst_65 = arith.constant 0.000000e+00 : f32
    %205 = vector.broadcast %cst_65 : f32 to vector<16x64xf32>
    %206 = arith.maximumf %204, %205 : vector<16x64xf32>
    %c0_66 = arith.constant 0 : index
    %c0_67 = arith.constant 0 : index
    %c0_68 = arith.constant 0 : index
    %207 = vector.load %arg12[%c0_66, %c0_67, %c0_68] : memref<2x64x32xf32, #tpu.memory_space<vmem>>, vector<1x64x32xf32>
    %208 = vector.shape_cast %207 : vector<1x64x32xf32> to vector<64x32xf32>
    %cst_69 = arith.constant dense<0.000000e+00> : vector<16x32xf32>
    %209 = tpu.matmul %206, %208, %cst_69 {dimension_numbers = #tpu.dot_dimension_numbers<[1], [0], [0], [1], [0, 0, 1, 1], [], []>} : vector<16x64xf32>, vector<64x32xf32>, vector<16x32xf32> -> vector<16x32xf32>
    %210 = arith.addf %171, %209 : vector<16x32xf32>
    %c0_70 = arith.constant 0 : index
    %c0_71 = arith.constant 0 : index
    %c0_72 = arith.constant 0 : index
    %211 = vector.load %arg13[%c0_70, %c0_71, %c0_72] : memref<2x1x32xf32, #tpu.memory_space<vmem>>, vector<1x1x32xf32>
    %212 = vector.shape_cast %211 : vector<1x1x32xf32> to vector<1x32xf32>
    %213 = vector.broadcast %212 : vector<1x32xf32> to vector<16x32xf32>
    %214 = arith.addf %210, %213 : vector<16x32xf32>
    %c1_73 = arith.constant 1 : index
    %c0_74 = arith.constant 0 : index
    %c0_75 = arith.constant 0 : index
    %215 = vector.load %arg2[%c1_73, %c0_74, %c0_75] : memref<2x1x32xf32, #tpu.memory_space<vmem>>, vector<1x1x32xf32>
    %216 = vector.shape_cast %215 : vector<1x1x32xf32> to vector<1x32xf32>
    %c1_76 = arith.constant 1 : index
    %c0_77 = arith.constant 0 : index
    %c0_78 = arith.constant 0 : index
    %217 = vector.load %arg3[%c1_76, %c0_77, %c0_78] : memref<2x1x32xf32, #tpu.memory_space<vmem>>, vector<1x1x32xf32>
    %218 = vector.shape_cast %217 : vector<1x1x32xf32> to vector<1x32xf32>
    %cst_79 = arith.constant dense<0.000000e+00> : vector<16xf32>
    %219 = vector.multi_reduction <add>, %214, %cst_79 [1] : vector<16x32xf32> to vector<16xf32>
    %220 = vector.shape_cast %219 : vector<16xf32> to vector<16x1xf32>
    %cst_80 = arith.constant 3.200000e+01 : f32
    %221 = vector.broadcast %cst_80 : f32 to vector<16x1xf32>
    %222 = arith.divf %220, %221 : vector<16x1xf32>
    %223 = vector.broadcast %222 : vector<16x1xf32> to vector<16x32xf32>
    %224 = arith.subf %214, %223 : vector<16x32xf32>
    %225 = arith.mulf %224, %224 : vector<16x32xf32>
    %cst_81 = arith.constant dense<0.000000e+00> : vector<16xf32>
    %226 = vector.multi_reduction <add>, %225, %cst_81 [1] : vector<16x32xf32> to vector<16xf32>
    %227 = vector.shape_cast %226 : vector<16xf32> to vector<16x1xf32>
    %cst_82 = arith.constant 3.200000e+01 : f32
    %228 = vector.broadcast %cst_82 : f32 to vector<16x1xf32>
    %229 = arith.divf %227, %228 : vector<16x1xf32>
    %230 = vector.broadcast %222 : vector<16x1xf32> to vector<16x32xf32>
    %231 = arith.subf %214, %230 : vector<16x32xf32>
    %cst_83 = arith.constant 9.99999997E-7 : f32
    %232 = vector.broadcast %cst_83 : f32 to vector<16x1xf32>
    %233 = arith.addf %229, %232 : vector<16x1xf32>
    %234 = math.rsqrt %233 : vector<16x1xf32>
    %235 = vector.broadcast %234 : vector<16x1xf32> to vector<16x32xf32>
    %236 = arith.mulf %231, %235 : vector<16x32xf32>
    %237 = vector.broadcast %216 : vector<1x32xf32> to vector<16x32xf32>
    %238 = arith.mulf %236, %237 : vector<16x32xf32>
    %239 = vector.broadcast %218 : vector<1x32xf32> to vector<16x32xf32>
    %240 = arith.addf %238, %239 : vector<16x32xf32>
    %c1_84 = arith.constant 1 : index
    %c0_85 = arith.constant 0 : index
    %c0_86 = arith.constant 0 : index
    %241 = vector.load %arg4[%c1_84, %c0_85, %c0_86] : memref<2x32x96xf32, #tpu.memory_space<vmem>>, vector<1x32x96xf32>
    %242 = vector.shape_cast %241 : vector<1x32x96xf32> to vector<32x96xf32>
    %cst_87 = arith.constant dense<0.000000e+00> : vector<16x96xf32>
    %243 = tpu.matmul %240, %242, %cst_87 {dimension_numbers = #tpu.dot_dimension_numbers<[1], [0], [0], [1], [0, 0, 1, 1], [], []>} : vector<16x32xf32>, vector<32x96xf32>, vector<16x96xf32> -> vector<16x96xf32>
    %c1_88 = arith.constant 1 : index
    %c0_89 = arith.constant 0 : index
    %c0_90 = arith.constant 0 : index
    %244 = vector.load %arg5[%c1_88, %c0_89, %c0_90] : memref<2x1x96xf32, #tpu.memory_space<vmem>>, vector<1x1x96xf32>
    %245 = vector.shape_cast %244 : vector<1x1x96xf32> to vector<1x96xf32>
    %246 = vector.broadcast %245 : vector<1x96xf32> to vector<16x96xf32>
    %247 = arith.addf %243, %246 : vector<16x96xf32>
    %248 = vector.extract_strided_slice %247 {offsets = [0, 0], sizes = [8, 96], strides = [1, 1]} : vector<16x96xf32> to vector<8x96xf32>
    %249 = vector.extract_strided_slice %248 {offsets = [0, 0], sizes = [8, 8], strides = [1, 1]} : vector<8x96xf32> to vector<8x8xf32>
    %250 = vector.extract_strided_slice %248 {offsets = [0, 8], sizes = [8, 8], strides = [1, 1]} : vector<8x96xf32> to vector<8x8xf32>
    %251 = vector.extract_strided_slice %248 {offsets = [0, 16], sizes = [8, 8], strides = [1, 1]} : vector<8x96xf32> to vector<8x8xf32>
    %252 = vector.extract_strided_slice %248 {offsets = [0, 24], sizes = [8, 8], strides = [1, 1]} : vector<8x96xf32> to vector<8x8xf32>
    %253 = vector.shape_cast %249 : vector<8x8xf32> to vector<1x8x8xf32>
    %254 = vector.shape_cast %250 : vector<8x8xf32> to vector<1x8x8xf32>
    %255 = vector.shape_cast %251 : vector<8x8xf32> to vector<1x8x8xf32>
    %256 = vector.shape_cast %252 : vector<8x8xf32> to vector<1x8x8xf32>
    %257 = tpu.concatenate %253, %254, %255, %256 in 0 : vector<1x8x8xf32>, vector<1x8x8xf32>, vector<1x8x8xf32>, vector<1x8x8xf32> -> vector<4x8x8xf32>
    %258 = vector.extract_strided_slice %248 {offsets = [0, 32], sizes = [8, 8], strides = [1, 1]} : vector<8x96xf32> to vector<8x8xf32>
    %259 = vector.extract_strided_slice %248 {offsets = [0, 40], sizes = [8, 8], strides = [1, 1]} : vector<8x96xf32> to vector<8x8xf32>
    %260 = vector.extract_strided_slice %248 {offsets = [0, 48], sizes = [8, 8], strides = [1, 1]} : vector<8x96xf32> to vector<8x8xf32>
    %261 = vector.extract_strided_slice %248 {offsets = [0, 56], sizes = [8, 8], strides = [1, 1]} : vector<8x96xf32> to vector<8x8xf32>
    %262 = vector.shape_cast %258 : vector<8x8xf32> to vector<1x8x8xf32>
    %263 = vector.shape_cast %259 : vector<8x8xf32> to vector<1x8x8xf32>
    %264 = vector.shape_cast %260 : vector<8x8xf32> to vector<1x8x8xf32>
    %265 = vector.shape_cast %261 : vector<8x8xf32> to vector<1x8x8xf32>
    %266 = tpu.concatenate %262, %263, %264, %265 in 0 : vector<1x8x8xf32>, vector<1x8x8xf32>, vector<1x8x8xf32>, vector<1x8x8xf32> -> vector<4x8x8xf32>
    %267 = vector.extract_strided_slice %248 {offsets = [0, 64], sizes = [8, 8], strides = [1, 1]} : vector<8x96xf32> to vector<8x8xf32>
    %268 = vector.extract_strided_slice %248 {offsets = [0, 72], sizes = [8, 8], strides = [1, 1]} : vector<8x96xf32> to vector<8x8xf32>
    %269 = vector.extract_strided_slice %248 {offsets = [0, 80], sizes = [8, 8], strides = [1, 1]} : vector<8x96xf32> to vector<8x8xf32>
    %270 = vector.extract_strided_slice %248 {offsets = [0, 88], sizes = [8, 8], strides = [1, 1]} : vector<8x96xf32> to vector<8x8xf32>
    %271 = vector.shape_cast %267 : vector<8x8xf32> to vector<1x8x8xf32>
    %272 = vector.shape_cast %268 : vector<8x8xf32> to vector<1x8x8xf32>
    %273 = vector.shape_cast %269 : vector<8x8xf32> to vector<1x8x8xf32>
    %274 = vector.shape_cast %270 : vector<8x8xf32> to vector<1x8x8xf32>
    %275 = tpu.concatenate %271, %272, %273, %274 in 0 : vector<1x8x8xf32>, vector<1x8x8xf32>, vector<1x8x8xf32>, vector<1x8x8xf32> -> vector<4x8x8xf32>
    %cst_91 = arith.constant dense<0.000000e+00> : vector<4x8x8xf32>
    %276 = tpu.matmul %257, %266, %cst_91 {dimension_numbers = #tpu.dot_dimension_numbers<[2], [2], [1], [1], [0, 0, 0, 1, 1, 1], [0], [0]>} : vector<4x8x8xf32>, vector<4x8x8xf32>, vector<4x8x8xf32> -> vector<4x8x8xf32>
    %cst_92 = arith.constant 0.353553385 : f32
    %277 = vector.broadcast %cst_92 : f32 to vector<4x8x8xf32>
    %278 = arith.mulf %276, %277 : vector<4x8x8xf32>
    %cst_93 = arith.constant -1.000000e+09 : f32
    %279 = vector.shape_cast %6 : vector<1x1x8xi1> to vector<1x1x8xi1>
    %280 = vector.broadcast %279 : vector<1x1x8xi1> to vector<4x8x8xi1>
    %281 = vector.broadcast %cst_93 : f32 to vector<4x8x8xf32>
    %282 = arith.select %280, %281, %278 : vector<4x8x8xi1>, vector<4x8x8xf32>
    %cst_94 = arith.constant dense<0xFF800000> : vector<4x8xf32>
    %283 = vector.multi_reduction <maximumf>, %282, %cst_94 [2] : vector<4x8x8xf32> to vector<4x8xf32>
    %284 = vector.shape_cast %283 : vector<4x8xf32> to vector<4x8x1xf32>
    %285 = vector.broadcast %284 : vector<4x8x1xf32> to vector<4x8x8xf32>
    %286 = arith.subf %282, %285 : vector<4x8x8xf32>
    %287 = math.exp %286 : vector<4x8x8xf32>
    %cst_95 = arith.constant dense<0.000000e+00> : vector<4x8xf32>
    %288 = vector.multi_reduction <add>, %287, %cst_95 [2] : vector<4x8x8xf32> to vector<4x8xf32>
    %289 = vector.shape_cast %288 : vector<4x8xf32> to vector<4x8x1xf32>
    %290 = tpu.reciprocal %289 {approx = true} : vector<4x8x1xf32> -> vector<4x8x1xf32>
    %291 = arith.mulf %289, %290 : vector<4x8x1xf32>
    %cst_96 = arith.constant 2.000000e+00 : f32
    %292 = vector.broadcast %cst_96 : f32 to vector<4x8x1xf32>
    %293 = arith.subf %292, %291 : vector<4x8x1xf32>
    %294 = arith.mulf %290, %293 : vector<4x8x1xf32>
    %295 = vector.broadcast %294 : vector<4x8x1xf32> to vector<4x8x8xf32>
    %296 = arith.mulf %287, %295 : vector<4x8x8xf32>
    %cst_97 = arith.constant dense<0.000000e+00> : vector<4x8x8xf32>
    %297 = tpu.matmul %296, %275, %cst_97 {dimension_numbers = #tpu.dot_dimension_numbers<[2], [1], [1], [2], [0, 0, 0, 1, 1, 2], [0], [0]>} : vector<4x8x8xf32>, vector<4x8x8xf32>, vector<4x8x8xf32> -> vector<4x8x8xf32>
    %298 = vector.extract_strided_slice %297 {offsets = [0, 0, 0], sizes = [1, 8, 8], strides = [1, 1, 1]} : vector<4x8x8xf32> to vector<1x8x8xf32>
    %299 = vector.shape_cast %298 : vector<1x8x8xf32> to vector<8x8xf32>
    %300 = vector.extract_strided_slice %297 {offsets = [1, 0, 0], sizes = [1, 8, 8], strides = [1, 1, 1]} : vector<4x8x8xf32> to vector<1x8x8xf32>
    %301 = vector.shape_cast %300 : vector<1x8x8xf32> to vector<8x8xf32>
    %302 = vector.extract_strided_slice %297 {offsets = [2, 0, 0], sizes = [1, 8, 8], strides = [1, 1, 1]} : vector<4x8x8xf32> to vector<1x8x8xf32>
    %303 = vector.shape_cast %302 : vector<1x8x8xf32> to vector<8x8xf32>
    %304 = vector.extract_strided_slice %297 {offsets = [3, 0, 0], sizes = [1, 8, 8], strides = [1, 1, 1]} : vector<4x8x8xf32> to vector<1x8x8xf32>
    %305 = vector.shape_cast %304 : vector<1x8x8xf32> to vector<8x8xf32>
    %306 = tpu.concatenate %299, %301, %303, %305 in 1 : vector<8x8xf32>, vector<8x8xf32>, vector<8x8xf32>, vector<8x8xf32> -> vector<8x32xf32>
    %307 = vector.extract_strided_slice %247 {offsets = [8, 0], sizes = [8, 96], strides = [1, 1]} : vector<16x96xf32> to vector<8x96xf32>
    %308 = vector.extract_strided_slice %307 {offsets = [0, 0], sizes = [8, 8], strides = [1, 1]} : vector<8x96xf32> to vector<8x8xf32>
    %309 = vector.extract_strided_slice %307 {offsets = [0, 8], sizes = [8, 8], strides = [1, 1]} : vector<8x96xf32> to vector<8x8xf32>
    %310 = vector.extract_strided_slice %307 {offsets = [0, 16], sizes = [8, 8], strides = [1, 1]} : vector<8x96xf32> to vector<8x8xf32>
    %311 = vector.extract_strided_slice %307 {offsets = [0, 24], sizes = [8, 8], strides = [1, 1]} : vector<8x96xf32> to vector<8x8xf32>
    %312 = vector.shape_cast %308 : vector<8x8xf32> to vector<1x8x8xf32>
    %313 = vector.shape_cast %309 : vector<8x8xf32> to vector<1x8x8xf32>
    %314 = vector.shape_cast %310 : vector<8x8xf32> to vector<1x8x8xf32>
    %315 = vector.shape_cast %311 : vector<8x8xf32> to vector<1x8x8xf32>
    %316 = tpu.concatenate %312, %313, %314, %315 in 0 : vector<1x8x8xf32>, vector<1x8x8xf32>, vector<1x8x8xf32>, vector<1x8x8xf32> -> vector<4x8x8xf32>
    %317 = vector.extract_strided_slice %307 {offsets = [0, 32], sizes = [8, 8], strides = [1, 1]} : vector<8x96xf32> to vector<8x8xf32>
    %318 = vector.extract_strided_slice %307 {offsets = [0, 40], sizes = [8, 8], strides = [1, 1]} : vector<8x96xf32> to vector<8x8xf32>
    %319 = vector.extract_strided_slice %307 {offsets = [0, 48], sizes = [8, 8], strides = [1, 1]} : vector<8x96xf32> to vector<8x8xf32>
    %320 = vector.extract_strided_slice %307 {offsets = [0, 56], sizes = [8, 8], strides = [1, 1]} : vector<8x96xf32> to vector<8x8xf32>
    %321 = vector.shape_cast %317 : vector<8x8xf32> to vector<1x8x8xf32>
    %322 = vector.shape_cast %318 : vector<8x8xf32> to vector<1x8x8xf32>
    %323 = vector.shape_cast %319 : vector<8x8xf32> to vector<1x8x8xf32>
    %324 = vector.shape_cast %320 : vector<8x8xf32> to vector<1x8x8xf32>
    %325 = tpu.concatenate %321, %322, %323, %324 in 0 : vector<1x8x8xf32>, vector<1x8x8xf32>, vector<1x8x8xf32>, vector<1x8x8xf32> -> vector<4x8x8xf32>
    %326 = vector.extract_strided_slice %307 {offsets = [0, 64], sizes = [8, 8], strides = [1, 1]} : vector<8x96xf32> to vector<8x8xf32>
    %327 = vector.extract_strided_slice %307 {offsets = [0, 72], sizes = [8, 8], strides = [1, 1]} : vector<8x96xf32> to vector<8x8xf32>
    %328 = vector.extract_strided_slice %307 {offsets = [0, 80], sizes = [8, 8], strides = [1, 1]} : vector<8x96xf32> to vector<8x8xf32>
    %329 = vector.extract_strided_slice %307 {offsets = [0, 88], sizes = [8, 8], strides = [1, 1]} : vector<8x96xf32> to vector<8x8xf32>
    %330 = vector.shape_cast %326 : vector<8x8xf32> to vector<1x8x8xf32>
    %331 = vector.shape_cast %327 : vector<8x8xf32> to vector<1x8x8xf32>
    %332 = vector.shape_cast %328 : vector<8x8xf32> to vector<1x8x8xf32>
    %333 = vector.shape_cast %329 : vector<8x8xf32> to vector<1x8x8xf32>
    %334 = tpu.concatenate %330, %331, %332, %333 in 0 : vector<1x8x8xf32>, vector<1x8x8xf32>, vector<1x8x8xf32>, vector<1x8x8xf32> -> vector<4x8x8xf32>
    %cst_98 = arith.constant dense<0.000000e+00> : vector<4x8x8xf32>
    %335 = tpu.matmul %316, %325, %cst_98 {dimension_numbers = #tpu.dot_dimension_numbers<[2], [2], [1], [1], [0, 0, 0, 1, 1, 1], [0], [0]>} : vector<4x8x8xf32>, vector<4x8x8xf32>, vector<4x8x8xf32> -> vector<4x8x8xf32>
    %cst_99 = arith.constant 0.353553385 : f32
    %336 = vector.broadcast %cst_99 : f32 to vector<4x8x8xf32>
    %337 = arith.mulf %335, %336 : vector<4x8x8xf32>
    %cst_100 = arith.constant -1.000000e+09 : f32
    %338 = vector.shape_cast %11 : vector<1x1x8xi1> to vector<1x1x8xi1>
    %339 = vector.broadcast %338 : vector<1x1x8xi1> to vector<4x8x8xi1>
    %340 = vector.broadcast %cst_100 : f32 to vector<4x8x8xf32>
    %341 = arith.select %339, %340, %337 : vector<4x8x8xi1>, vector<4x8x8xf32>
    %cst_101 = arith.constant dense<0xFF800000> : vector<4x8xf32>
    %342 = vector.multi_reduction <maximumf>, %341, %cst_101 [2] : vector<4x8x8xf32> to vector<4x8xf32>
    %343 = vector.shape_cast %342 : vector<4x8xf32> to vector<4x8x1xf32>
    %344 = vector.broadcast %343 : vector<4x8x1xf32> to vector<4x8x8xf32>
    %345 = arith.subf %341, %344 : vector<4x8x8xf32>
    %346 = math.exp %345 : vector<4x8x8xf32>
    %cst_102 = arith.constant dense<0.000000e+00> : vector<4x8xf32>
    %347 = vector.multi_reduction <add>, %346, %cst_102 [2] : vector<4x8x8xf32> to vector<4x8xf32>
    %348 = vector.shape_cast %347 : vector<4x8xf32> to vector<4x8x1xf32>
    %349 = tpu.reciprocal %348 {approx = true} : vector<4x8x1xf32> -> vector<4x8x1xf32>
    %350 = arith.mulf %348, %349 : vector<4x8x1xf32>
    %cst_103 = arith.constant 2.000000e+00 : f32
    %351 = vector.broadcast %cst_103 : f32 to vector<4x8x1xf32>
    %352 = arith.subf %351, %350 : vector<4x8x1xf32>
    %353 = arith.mulf %349, %352 : vector<4x8x1xf32>
    %354 = vector.broadcast %353 : vector<4x8x1xf32> to vector<4x8x8xf32>
    %355 = arith.mulf %346, %354 : vector<4x8x8xf32>
    %cst_104 = arith.constant dense<0.000000e+00> : vector<4x8x8xf32>
    %356 = tpu.matmul %355, %334, %cst_104 {dimension_numbers = #tpu.dot_dimension_numbers<[2], [1], [1], [2], [0, 0, 0, 1, 1, 2], [0], [0]>} : vector<4x8x8xf32>, vector<4x8x8xf32>, vector<4x8x8xf32> -> vector<4x8x8xf32>
    %357 = vector.extract_strided_slice %356 {offsets = [0, 0, 0], sizes = [1, 8, 8], strides = [1, 1, 1]} : vector<4x8x8xf32> to vector<1x8x8xf32>
    %358 = vector.shape_cast %357 : vector<1x8x8xf32> to vector<8x8xf32>
    %359 = vector.extract_strided_slice %356 {offsets = [1, 0, 0], sizes = [1, 8, 8], strides = [1, 1, 1]} : vector<4x8x8xf32> to vector<1x8x8xf32>
    %360 = vector.shape_cast %359 : vector<1x8x8xf32> to vector<8x8xf32>
    %361 = vector.extract_strided_slice %356 {offsets = [2, 0, 0], sizes = [1, 8, 8], strides = [1, 1, 1]} : vector<4x8x8xf32> to vector<1x8x8xf32>
    %362 = vector.shape_cast %361 : vector<1x8x8xf32> to vector<8x8xf32>
    %363 = vector.extract_strided_slice %356 {offsets = [3, 0, 0], sizes = [1, 8, 8], strides = [1, 1, 1]} : vector<4x8x8xf32> to vector<1x8x8xf32>
    %364 = vector.shape_cast %363 : vector<1x8x8xf32> to vector<8x8xf32>
    %365 = tpu.concatenate %358, %360, %362, %364 in 1 : vector<8x8xf32>, vector<8x8xf32>, vector<8x8xf32>, vector<8x8xf32> -> vector<8x32xf32>
    %366 = tpu.concatenate %306, %365 in 0 : vector<8x32xf32>, vector<8x32xf32> -> vector<16x32xf32>
    %c1_105 = arith.constant 1 : index
    %c0_106 = arith.constant 0 : index
    %c0_107 = arith.constant 0 : index
    %367 = vector.load %arg6[%c1_105, %c0_106, %c0_107] : memref<2x32x32xf32, #tpu.memory_space<vmem>>, vector<1x32x32xf32>
    %368 = vector.shape_cast %367 : vector<1x32x32xf32> to vector<32x32xf32>
    %cst_108 = arith.constant dense<0.000000e+00> : vector<16x32xf32>
    %369 = tpu.matmul %366, %368, %cst_108 {dimension_numbers = #tpu.dot_dimension_numbers<[1], [0], [0], [1], [0, 0, 1, 1], [], []>} : vector<16x32xf32>, vector<32x32xf32>, vector<16x32xf32> -> vector<16x32xf32>
    %370 = arith.addf %214, %369 : vector<16x32xf32>
    %c1_109 = arith.constant 1 : index
    %c0_110 = arith.constant 0 : index
    %c0_111 = arith.constant 0 : index
    %371 = vector.load %arg7[%c1_109, %c0_110, %c0_111] : memref<2x1x32xf32, #tpu.memory_space<vmem>>, vector<1x1x32xf32>
    %372 = vector.shape_cast %371 : vector<1x1x32xf32> to vector<1x32xf32>
    %373 = vector.broadcast %372 : vector<1x32xf32> to vector<16x32xf32>
    %374 = arith.addf %370, %373 : vector<16x32xf32>
    %c1_112 = arith.constant 1 : index
    %c0_113 = arith.constant 0 : index
    %c0_114 = arith.constant 0 : index
    %375 = vector.load %arg8[%c1_112, %c0_113, %c0_114] : memref<2x1x32xf32, #tpu.memory_space<vmem>>, vector<1x1x32xf32>
    %376 = vector.shape_cast %375 : vector<1x1x32xf32> to vector<1x32xf32>
    %c1_115 = arith.constant 1 : index
    %c0_116 = arith.constant 0 : index
    %c0_117 = arith.constant 0 : index
    %377 = vector.load %arg9[%c1_115, %c0_116, %c0_117] : memref<2x1x32xf32, #tpu.memory_space<vmem>>, vector<1x1x32xf32>
    %378 = vector.shape_cast %377 : vector<1x1x32xf32> to vector<1x32xf32>
    %cst_118 = arith.constant dense<0.000000e+00> : vector<16xf32>
    %379 = vector.multi_reduction <add>, %374, %cst_118 [1] : vector<16x32xf32> to vector<16xf32>
    %380 = vector.shape_cast %379 : vector<16xf32> to vector<16x1xf32>
    %cst_119 = arith.constant 3.200000e+01 : f32
    %381 = vector.broadcast %cst_119 : f32 to vector<16x1xf32>
    %382 = arith.divf %380, %381 : vector<16x1xf32>
    %383 = vector.broadcast %382 : vector<16x1xf32> to vector<16x32xf32>
    %384 = arith.subf %374, %383 : vector<16x32xf32>
    %385 = arith.mulf %384, %384 : vector<16x32xf32>
    %cst_120 = arith.constant dense<0.000000e+00> : vector<16xf32>
    %386 = vector.multi_reduction <add>, %385, %cst_120 [1] : vector<16x32xf32> to vector<16xf32>
    %387 = vector.shape_cast %386 : vector<16xf32> to vector<16x1xf32>
    %cst_121 = arith.constant 3.200000e+01 : f32
    %388 = vector.broadcast %cst_121 : f32 to vector<16x1xf32>
    %389 = arith.divf %387, %388 : vector<16x1xf32>
    %390 = vector.broadcast %382 : vector<16x1xf32> to vector<16x32xf32>
    %391 = arith.subf %374, %390 : vector<16x32xf32>
    %cst_122 = arith.constant 9.99999997E-7 : f32
    %392 = vector.broadcast %cst_122 : f32 to vector<16x1xf32>
    %393 = arith.addf %389, %392 : vector<16x1xf32>
    %394 = math.rsqrt %393 : vector<16x1xf32>
    %395 = vector.broadcast %394 : vector<16x1xf32> to vector<16x32xf32>
    %396 = arith.mulf %391, %395 : vector<16x32xf32>
    %397 = vector.broadcast %376 : vector<1x32xf32> to vector<16x32xf32>
    %398 = arith.mulf %396, %397 : vector<16x32xf32>
    %399 = vector.broadcast %378 : vector<1x32xf32> to vector<16x32xf32>
    %400 = arith.addf %398, %399 : vector<16x32xf32>
    %c1_123 = arith.constant 1 : index
    %c0_124 = arith.constant 0 : index
    %c0_125 = arith.constant 0 : index
    %401 = vector.load %arg10[%c1_123, %c0_124, %c0_125] : memref<2x32x64xf32, #tpu.memory_space<vmem>>, vector<1x32x64xf32>
    %402 = vector.shape_cast %401 : vector<1x32x64xf32> to vector<32x64xf32>
    %cst_126 = arith.constant dense<0.000000e+00> : vector<16x64xf32>
    %403 = tpu.matmul %400, %402, %cst_126 {dimension_numbers = #tpu.dot_dimension_numbers<[1], [0], [0], [1], [0, 0, 1, 1], [], []>} : vector<16x32xf32>, vector<32x64xf32>, vector<16x64xf32> -> vector<16x64xf32>
    %c1_127 = arith.constant 1 : index
    %c0_128 = arith.constant 0 : index
    %c0_129 = arith.constant 0 : index
    %404 = vector.load %arg11[%c1_127, %c0_128, %c0_129] : memref<2x1x64xf32, #tpu.memory_space<vmem>>, vector<1x1x64xf32>
    %405 = vector.shape_cast %404 : vector<1x1x64xf32> to vector<1x64xf32>
    %406 = vector.broadcast %405 : vector<1x64xf32> to vector<16x64xf32>
    %407 = arith.addf %403, %406 : vector<16x64xf32>
    %cst_130 = arith.constant 0.000000e+00 : f32
    %408 = vector.broadcast %cst_130 : f32 to vector<16x64xf32>
    %409 = arith.maximumf %407, %408 : vector<16x64xf32>
    %c1_131 = arith.constant 1 : index
    %c0_132 = arith.constant 0 : index
    %c0_133 = arith.constant 0 : index
    %410 = vector.load %arg12[%c1_131, %c0_132, %c0_133] : memref<2x64x32xf32, #tpu.memory_space<vmem>>, vector<1x64x32xf32>
    %411 = vector.shape_cast %410 : vector<1x64x32xf32> to vector<64x32xf32>
    %cst_134 = arith.constant dense<0.000000e+00> : vector<16x32xf32>
    %412 = tpu.matmul %409, %411, %cst_134 {dimension_numbers = #tpu.dot_dimension_numbers<[1], [0], [0], [1], [0, 0, 1, 1], [], []>} : vector<16x64xf32>, vector<64x32xf32>, vector<16x32xf32> -> vector<16x32xf32>
    %413 = arith.addf %374, %412 : vector<16x32xf32>
    %c1_135 = arith.constant 1 : index
    %c0_136 = arith.constant 0 : index
    %c0_137 = arith.constant 0 : index
    %414 = vector.load %arg13[%c1_135, %c0_136, %c0_137] : memref<2x1x32xf32, #tpu.memory_space<vmem>>, vector<1x1x32xf32>
    %415 = vector.shape_cast %414 : vector<1x1x32xf32> to vector<1x32xf32>
    %416 = vector.broadcast %415 : vector<1x32xf32> to vector<16x32xf32>
    %417 = arith.addf %413, %416 : vector<16x32xf32>
    %c0_138 = arith.constant 0 : index
    %c0_139 = arith.constant 0 : index
    %418 = vector.load %arg14[%c0_138, %c0_139] : memref<1x32xf32, #tpu.memory_space<vmem>>, vector<1x32xf32>
    %c0_140 = arith.constant 0 : index
    %c0_141 = arith.constant 0 : index
    %419 = vector.load %arg15[%c0_140, %c0_141] : memref<1x32xf32, #tpu.memory_space<vmem>>, vector<1x32xf32>
    %cst_142 = arith.constant dense<0.000000e+00> : vector<16xf32>
    %420 = vector.multi_reduction <add>, %417, %cst_142 [1] : vector<16x32xf32> to vector<16xf32>
    %421 = vector.shape_cast %420 : vector<16xf32> to vector<16x1xf32>
    %cst_143 = arith.constant 3.200000e+01 : f32
    %422 = vector.broadcast %cst_143 : f32 to vector<16x1xf32>
    %423 = arith.divf %421, %422 : vector<16x1xf32>
    %424 = vector.broadcast %423 : vector<16x1xf32> to vector<16x32xf32>
    %425 = arith.subf %417, %424 : vector<16x32xf32>
    %426 = arith.mulf %425, %425 : vector<16x32xf32>
    %cst_144 = arith.constant dense<0.000000e+00> : vector<16xf32>
    %427 = vector.multi_reduction <add>, %426, %cst_144 [1] : vector<16x32xf32> to vector<16xf32>
    %428 = vector.shape_cast %427 : vector<16xf32> to vector<16x1xf32>
    %cst_145 = arith.constant 3.200000e+01 : f32
    %429 = vector.broadcast %cst_145 : f32 to vector<16x1xf32>
    %430 = arith.divf %428, %429 : vector<16x1xf32>
    %431 = vector.broadcast %423 : vector<16x1xf32> to vector<16x32xf32>
    %432 = arith.subf %417, %431 : vector<16x32xf32>
    %cst_146 = arith.constant 9.99999997E-7 : f32
    %433 = vector.broadcast %cst_146 : f32 to vector<16x1xf32>
    %434 = arith.addf %430, %433 : vector<16x1xf32>
    %435 = math.rsqrt %434 : vector<16x1xf32>
    %436 = vector.broadcast %435 : vector<16x1xf32> to vector<16x32xf32>
    %437 = arith.mulf %432, %436 : vector<16x32xf32>
    %438 = vector.broadcast %418 : vector<1x32xf32> to vector<16x32xf32>
    %439 = arith.mulf %437, %438 : vector<16x32xf32>
    %440 = vector.broadcast %419 : vector<1x32xf32> to vector<16x32xf32>
    %441 = arith.addf %439, %440 : vector<16x32xf32>
    %442 = vector.shape_cast %441 : vector<16x32xf32> to vector<2x8x32xf32>
    %c0_147 = arith.constant 0 : index
    %c0_148 = arith.constant 0 : index
    %c0_149 = arith.constant 0 : index
    %443 = vector.load %arg16[%c0_147, %c0_148, %c0_149] : memref<2x8x32xf32, #tpu.memory_space<vmem>>, vector<2x8x32xf32>
    tpu.vector_store %arg16[%c0_147, %c0_148, %c0_149], %442 {strides = array<i32>} : memref<2x8x32xf32, #tpu.memory_space<vmem>>, vector<2x8x32xf32>,
    return
  }
}

</mosaic_0001>

<llo_original>
// kernel: tpu_custom_call.1
$region0: #{tpu_custom_call.1}
  #allocation0 [shape = 'u32[]', space=smem, size = 0x4, offset = 0x4, fixed_abs, tag = 'smem constant byte address 0x4 - core index']
  #allocation1 [shape = 'u32[144,128]{1,0:T(1,128)}', space=vmem, size = 0x12000, scoped, tag = 'internal scratch']
  %s0 = inlined_call_operand.hbm [shape: f32[2,8,32], index: 0, kind: input, shape index: {}]
  %s1 = inlined_call_operand.hbm [shape: f32[2,1,8], index: 1, kind: input, shape index: {}]
  %s2 = inlined_call_operand.vmem [shape: f32[2,1,32], index: 2, kind: input, shape index: {}]
  %s3 = inlined_call_operand.hbm [shape: f32[2,1,32], index: 3, kind: input, shape index: {}]
  %s4 = inlined_call_operand.vmem [shape: f32[2,32,96], index: 4, kind: input, shape index: {}]
  %s5 = inlined_call_operand.vmem [shape: f32[2,1,96], index: 5, kind: input, shape index: {}]
  %s6 = inlined_call_operand.vmem [shape: f32[2,32,32], index: 6, kind: input, shape index: {}]
  %s7 = inlined_call_operand.vmem [shape: f32[2,1,32], index: 7, kind: input, shape index: {}]
  %s8 = inlined_call_operand.vmem [shape: f32[2,1,32], index: 8, kind: input, shape index: {}]
  %s9 = inlined_call_operand.vmem [shape: f32[2,1,32], index: 9, kind: input, shape index: {}]
  %s10 = inlined_call_operand.vmem [shape: f32[2,32,64], index: 10, kind: input, shape index: {}]
  %s11 = inlined_call_operand.vmem [shape: f32[2,1,64], index: 11, kind: input, shape index: {}]
  %s12 = inlined_call_operand.vmem [shape: f32[2,64,32], index: 12, kind: input, shape index: {}]
  %s13 = inlined_call_operand.vmem [shape: f32[2,1,32], index: 13, kind: input, shape index: {}]
  %s14 = inlined_call_operand.vmem [shape: f32[1,32], index: 14, kind: input, shape index: {}]
  %s15 = inlined_call_operand.vmem [shape: f32[1,32], index: 15, kind: input, shape index: {}]
  %s16 = inlined_call_operand.hbm [shape: f32[2,8,32], index: 16, kind: output, shape index: {}]
  %s17 = sld [smem:[#allocation0]]
  $region86: #{tpu_custom_call.1} parent=0
    _
  %s19 = ssub.s32 1, %s17
  %s20 = scalar_select 0, %s19, %s17
  $region1: #{tpu_custom_call.1} parent=0
    #allocation2 [shape = 'u8[8192]{0}', space=vmem, size = 0x2000, scoped, tag = 'input window, operand 0, single buffered']
    #allocation3 [shape = 's32[1]{0}', space=sflag, size = 0x4, scoped, tag = 'scoped memory for tpu_custom_call.1']
    #allocation4 [shape = 's32[1]{0}', space=sflag, size = 0x4, scoped, tag = 'scoped memory for tpu_custom_call.1']
    #allocation5 [shape = 'u8[1024]{0}', space=vmem, size = 0x400, scoped, tag = 'input window, operand 1, single buffered']
    #allocation6 [shape = 's32[1]{0}', space=sflag, size = 0x4, scoped, tag = 'scoped memory for tpu_custom_call.1']
    #allocation7 [shape = 'u8[1024]{0}', space=vmem, size = 0x400, scoped, tag = 'input window, operand 3, single buffered']
    #allocation8 [shape = 'u8[8192]{0}', space=vmem, size = 0x2000, scoped, tag = 'output window, operand 0, single buffered']
    %21 = vsyncpa [#allocation3], 0
    %22 = vsyncpa [#allocation6], 0
    %23 = vsyncpa [#allocation4], 0
    // Predicated region
    $region2: #{tpu_custom_call.1} parent=1 // pred_check
      _
    $region3: #{tpu_custom_call.1} parent=1 // pred_check_branch
      %25 = sbr.rel (0) target = $region5
    $region4: #{tpu_custom_call.1} parent=1 // pred_region
      %s27 = ssub.s32 256, 256
      %28 = vsyncadd [#allocation3], %s27
      %s29 = sshll.u32 [#allocation2], 4
      %s30 = int_to_ptr.vmem [resolvable:$true] %s29
      %35 = dma.hbm_to_vmem [thread:$0]  %s0, 256, %s30, [#allocation3], 128, 128, 8
    $region5: #{tpu_custom_call.1} parent=1 // pred_fallthru
      _
    // Predicated region
    $region6: #{tpu_custom_call.1} parent=1 // pred_check
      _
    $region7: #{tpu_custom_call.1} parent=1 // pred_check_branch
      %37 = sbr.rel (0) target = $region9
    $region8: #{tpu_custom_call.1} parent=1 // pred_region
      %s39 = ssub.s32 32, 32
      %40 = vsyncadd [#allocation6], %s39
      %s41 = sshll.u32 [#allocation5], 4
      %s42 = int_to_ptr.vmem [resolvable:$true] %s41
      %47 = dma.hbm_to_vmem [thread:$0]  %s1, 32, %s42, [#allocation6], 16, 16, 1
    $region9: #{tpu_custom_call.1} parent=1 // pred_fallthru
      _
    // Predicated region
    $region10: #{tpu_custom_call.1} parent=1 // pred_check
      _
    $region11: #{tpu_custom_call.1} parent=1 // pred_check_branch
      %49 = sbr.rel (0) target = $region13
    $region12: #{tpu_custom_call.1} parent=1 // pred_region
      _
    $region13: #{tpu_custom_call.1} parent=1 // pred_fallthru
      _
    // Predicated region
    $region14: #{tpu_custom_call.1} parent=1 // pred_check
      _
    $region15: #{tpu_custom_call.1} parent=1 // pred_check_branch
      %51 = sbr.rel (0) target = $region17
    $region16: #{tpu_custom_call.1} parent=1 // pred_region
      %s53 = ssub.s32 32, 32
      %54 = vsyncadd [#allocation6], %s53
      %s55 = sshll.u32 [#allocation7], 4
      %s56 = int_to_ptr.vmem [resolvable:$true] %s55
      %61 = dma.hbm_to_vmem [thread:$0]  %s3, 32, %s56, [#allocation6], 16, 16, 1
    $region17: #{tpu_custom_call.1} parent=1 // pred_fallthru
      _
    // Predicated region
    $region18: #{tpu_custom_call.1} parent=1 // pred_check
      _
    $region19: #{tpu_custom_call.1} parent=1 // pred_check_branch
      %63 = sbr.rel (0) target = $region21
    $region20: #{tpu_custom_call.1} parent=1 // pred_region
      _
    $region21: #{tpu_custom_call.1} parent=1 // pred_fallthru
      _
    // Predicated region
    $region22: #{tpu_custom_call.1} parent=1 // pred_check
      _
    $region23: #{tpu_custom_call.1} parent=1 // pred_check_branch
      %65 = sbr.rel (0) target = $region25
    $region24: #{tpu_custom_call.1} parent=1 // pred_region
      _
    $region25: #{tpu_custom_call.1} parent=1 // pred_fallthru
      _
    // Predicated region
    $region26: #{tpu_custom_call.1} parent=1 // pred_check
      _
    $region27: #{tpu_custom_call.1} parent=1 // pred_check_branch
      %67 = sbr.rel (0) target = $region29
    $region28: #{tpu_custom_call.1} parent=1 // pred_region
      _
    $region29: #{tpu_custom_call.1} parent=1 // pred_fallthru
      _
    // Predicated region
    $region30: #{tpu_custom_call.1} parent=1 // pred_check
      _
    $region31: #{tpu_custom_call.1} parent=1 // pred_check_branch
      %69 = sbr.rel (0) target = $region33
    $region32: #{tpu_custom_call.1} parent=1 // pred_region
      _
    $region33: #{tpu_custom_call.1} parent=1 // pred_fallthru
      _
    // Predicated region
    $region34: #{tpu_custom_call.1} parent=1 // pred_check
      _
    $region35: #{tpu_custom_call.1} parent=1 // pred_check_branch
      %71 = sbr.rel (0) target = $region37
    $region36: #{tpu_custom_call.1} parent=1 // pred_region
      _
    $region37: #{tpu_custom_call.1} parent=1 // pred_fallthru
      _
    // Predicated region
    $region38: #{tpu_custom_call.1} parent=1 // pred_check
      _
    $region39: #{tpu_custom_call.1} parent=1 // pred_check_branch
      %73 = sbr.rel (0) target = $region41
    $region40: #{tpu_custom_call.1} parent=1 // pred_region
      _
    $region41: #{tpu_custom_call.1} parent=1 // pred_fallthru
      _
    // Predicated region
    $region42: #{tpu_custom_call.1} parent=1 // pred_check
      _
    $region43: #{tpu_custom_call.1} parent=1 // pred_check_branch
      %75 = sbr.rel (0) target = $region45
    $region44: #{tpu_custom_call.1} parent=1 // pred_region
      _
    $region45: #{tpu_custom_call.1} parent=1 // pred_fallthru
      _
    // Predicated region
    $region46: #{tpu_custom_call.1} parent=1 // pred_check
      _
    $region47: #{tpu_custom_call.1} parent=1 // pred_check_branch
      %77 = sbr.rel (0) target = $region49
    $region48: #{tpu_custom_call.1} parent=1 // pred_region
      _
    $region49: #{tpu_custom_call.1} parent=1 // pred_fallthru
      _
    // Predicated region
    $region50: #{tpu_custom_call.1} parent=1 // pred_check
      _
    $region51: #{tpu_custom_call.1} parent=1 // pred_check_branch
      %79 = sbr.rel (0) target = $region53
    $region52: #{tpu_custom_call.1} parent=1 // pred_region
      _
    $region53: #{tpu_custom_call.1} parent=1 // pred_fallthru
      _
    // Predicated region
    $region54: #{tpu_custom_call.1} parent=1 // pred_check
      _
    $region55: #{tpu_custom_call.1} parent=1 // pred_check_branch
      %81 = sbr.rel (0) target = $region57
    $region56: #{tpu_custom_call.1} parent=1 // pred_region
      _
    $region57: #{tpu_custom_call.1} parent=1 // pred_fallthru
      _
    // Predicated region
    $region58: #{tpu_custom_call.1} parent=1 // pred_check
      _
    $region59: #{tpu_custom_call.1} parent=1 // pred_check_branch
      %83 = sbr.rel (0) target = $region61
    $region60: #{tpu_custom_call.1} parent=1 // pred_region
      _
    $region61: #{tpu_custom_call.1} parent=1 // pred_fallthru
      _
    // Predicated region
    $region62: #{tpu_custom_call.1} parent=1 // pred_check
      _
    $region63: #{tpu_custom_call.1} parent=1 // pred_check_branch
      %85 = sbr.rel (0) target = $region65
    $region64: #{tpu_custom_call.1} parent=1 // pred_region
      _
    $region65: #{tpu_custom_call.1} parent=1 // pred_fallthru
      _
    // Predicated region
    $region66: #{tpu_custom_call.1} parent=1 // pred_check
      _
    $region67: #{tpu_custom_call.1} parent=1 // pred_check_branch
      %87 = sbr.rel (0) target = $region69
    $region68: #{tpu_custom_call.1} parent=1 // pred_region
      %88 = dma.done [#allocation3], 256
    $region69: #{tpu_custom_call.1} parent=1 // pred_fallthru
      _
    // Predicated region
    $region70: #{tpu_custom_call.1} parent=1 // pred_check
      _
    $region71: #{tpu_custom_call.1} parent=1 // pred_check_branch
      %90 = sbr.rel (0) target = $region73
    $region72: #{tpu_custom_call.1} parent=1 // pred_region
      %91 = dma.done [#allocation6], 32
    $region73: #{tpu_custom_call.1} parent=1 // pred_fallthru
      _
    // Predicated region
    $region74: #{tpu_custom_call.1} parent=1 // pred_check
      _
    $region75: #{tpu_custom_call.1} parent=1 // pred_check_branch
      %93 = sbr.rel (0) target = $region77
    $region76: #{tpu_custom_call.1} parent=1 // pred_region
      %94 = dma.done [#allocation6], 32
    $region77: #{tpu_custom_call.1} parent=1 // pred_fallthru
      _
    %v95 = vld [vmem:[#allocation2] sm:$0xff]
    %v96 = vld [vmem:[#allocation2 + $0x8] sm:$0xff]
    %v97 = vld [vmem:[#allocation5] sm:$0x1]
    %vm98 = vcmp.eq.f32.partialorder %v97, 0.0
    %s99 = scalar_lea.vmem [#allocation5], 1
    %v100 = vld [vmem:[%s99] sm:$0x1]
    %vm101 = vcmp.eq.f32.partialorder %v100, 0.0
    %v102 = vld [vmem:[%s2] sm:$0x1]
    %v103 = vld [vmem:[#allocation7] sm:$0x1]
    %vm104 = vcmask 261120
    %v105 = vsel %vm104, %v95, 0.0
    %106 = vadd.xlane.f32.xlu0 %v105
    %v107 = vpop.xlane.xlu0 %106
    %v108 = vsel %vm104, %v96, 0.0
    %109 = vadd.xlane.f32.xlu0 %v108
    %v110 = vpop.xlane.xlu0 %109
    %v111 = vrcp.pop 32.0
    %v112 = vmul.f32 %v107, %v111
    %v113 = vmul.f32 %v110, %v111
    %v114 = vsub.f32 %v95, %v112
    %v115 = vsub.f32 %v96, %v113
    %v116 = vmul.f32 %v114, %v114
    %v117 = vmul.f32 %v115, %v115
    %v118 = vsel %vm104, %v116, 0.0
    %119 = vadd.xlane.f32.xlu0 %v118
    %v120 = vpop.xlane.xlu0 %119
    %v121 = vsel %vm104, %v117, 0.0
    %122 = vadd.xlane.f32.xlu0 %v121
    %v123 = vpop.xlane.xlu0 %122
    %v124 = vmul.f32 %v120, %v111
    %v125 = vmul.f32 %v123, %v111
    %v126 = vadd.f32 %v124, 1e-06
    %v127 = vadd.f32 %v125, 1e-06
    %v128 = vrsqrt.pop %v126
    %v129 = vrsqrt.pop %v127
    %v130 = vmul.f32 %v114, %v128
    %v131 = vmul.f32 %v115, %v129
    %v133 = vlaneseq
    %v134 = vshrl.u32 %v133, 7
    %v135 = vsub.s32 0, %v134
    %v136 = vrot.slane %v102, %v135
    %v138 = vmul.f32 %v130, %v136
    %v139 = vmul.f32 %v131, %v136
    %v141 = vlaneseq
    %v142 = vshrl.u32 %v141, 7
    %v143 = vsub.s32 0, %v142
    %v144 = vrot.slane %v103, %v143
    %v146 = vadd.f32 %v138, %v144
    %v147 = vadd.f32 %v139, %v144
    %v148 = vld [vmem:[%s4] sm:$0xff]
    %v149 = vld [vmem:[%s4 + $0x8] sm:$0xff]
    %v150 = vld [vmem:[%s4 + $0x10] sm:$0xff]
    %v151 = vld [vmem:[%s4 + $0x18] sm:$0xff]
    %v152 = vld [vmem:[%s5] sm:$0x1]
    %v154 = vlaneseq
    %v155 = vshrl.u32 %v154, 7
    %v156 = vsub.s32 0, %v155
    %v157 = vrot.slane %v152, %v156
    %v160 = vsel %vm104, %v146, 0
    %v163 = vsel %vm104, %v147, 0
    %165 = vmatprep.subr.mxu0 0.0
    %166 = vmatpush1.msra.mxu0 0.0
    %167 = vmatprep.subr.mxu0 0.0
    %168 = vmatpush1.msra.mxu0 0.0
    %169 = vmatprep.subr.mxu0 0.0
    %170 = vmatpush1.msra.mxu0 0.0
    %171 = vmatprep.subr.mxu0 0.0
    %172 = vmatpush1.msra.mxu0 0.0
    %173 = vmatprep.subr.mxu0 0.0
    %174 = vmatpush1.msra.mxu0 0.0
    %175 = vmatprep.subr.mxu0 0.0
    %176 = vmatpush1.msra.mxu0 0.0
    %177 = vmatprep.subr.mxu0 0.0
    %178 = vmatpush1.msra.mxu0 0.0
    %179 = vmatprep.subr.mxu0 0.0
    %180 = vmatpush1.msra.mxu0 0.0
    %181 = vmatprep.subr.mxu0 0.0
    %182 = vmatpush1.msra.mxu0 0.0
    %183 = vmatprep.subr.mxu0 0.0
    %184 = vmatpush1.msra.mxu0 0.0
    %185 = vmatprep.subr.mxu0 0.0
    %186 = vmatpush1.msra.mxu0 0.0
    %187 = vmatprep.subr.mxu0 0.0
    %188 = vmatpush1.msra.mxu0 0.0
    %189 = vmatprep.subr.mxu0 0.0
    %190 = vmatpush1.msra.mxu0 %v151
    %191 = vmatprep.subr.mxu0 0.0
    %192 = vmatpush1.msra.mxu0 %v150
    %193 = vmatprep.subr.mxu0 0.0
    %194 = vmatpush1.msra.mxu0 %v149
    %195 = vmatprep.subr.mxu0 0.0
    %196 = vmatpush1.msra.mxu0 %v148
    %197 = vmatprep.subr.mxu0 0.0
    %198 = vmatpush2.msra.mxu0 0.0
    %199 = vmatprep.subr.mxu0 0.0
    %200 = vmatpush2.msra.mxu0 0.0
    %201 = vmatprep.subr.mxu0 0.0
    %202 = vmatpush2.msra.mxu0 0.0
    %203 = vmatprep.subr.mxu0 0.0
    %204 = vmatpush2.msra.mxu0 0.0
    %205 = vmatprep.subr.mxu0 0.0
    %206 = vmatpush2.msra.mxu0 0.0
    %207 = vmatprep.subr.mxu0 0.0
    %208 = vmatpush2.msra.mxu0 0.0
    %209 = vmatprep.subr.mxu0 0.0
    %210 = vmatpush2.msra.mxu0 0.0
    %211 = vmatprep.subr.mxu0 0.0
    %212 = vmatpush2.msra.mxu0 0.0
    %213 = vmatprep.subr.mxu0 0.0
    %214 = vmatpush2.msra.mxu0 0.0
    %215 = vmatprep.subr.mxu0 0.0
    %216 = vmatpush2.msra.mxu0 0.0
    %217 = vmatprep.subr.mxu0 0.0
    %218 = vmatpush2.msra.mxu0 0.0
    %219 = vmatprep.subr.mxu0 0.0
    %220 = vmatpush2.msra.mxu0 0.0
    %221 = vmatprep.subr.mxu0 0.0
    %222 = vmatpush2.msra.mxu0 0.0
    %223 = vmatprep.subr.mxu0 0.0
    %224 = vmatpush2.msra.mxu0 0.0
    %225 = vmatprep.subr.mxu0 0.0
    %226 = vmatpush2.msra.mxu0 0.0
    %227 = vmatprep.subr.mxu0 0.0
    %228 = vmatpush2.msra.mxu0 0.0
    %229 = vmatprep.mubr.f32.mxu0 0.0
    %230 = vmatmul.mubr.f32.gmra.mxu0 %v160
    %v231 = vpop.f32.mrf.mxu0
    %v232 = vadd.f32 %v157, %v231
    %v233 = vpop.f32.mrf.mxu0
    %234 = vmatprep.mubr.f32.mxu0 0.0
    %235 = vmatmul.mubr.f32.gmra.mxu0 %v163
    %v236 = vpop.f32.mrf.mxu0
    %v237 = vadd.f32 %v157, %v236
    %v238 = vpop.f32.mrf.mxu0
    %239 = vdwg.mxu0
    %241 = vrot.lane.b32.xlu0 %v232, 120
    %v242 = vpop.permute.xlu0 %241
    %243 = vrot.lane.b32.xlu0 %v232, 112
    %v244 = vpop.permute.xlu0 %243
    %245 = vrot.lane.b32.xlu0 %v232, 104
    %v246 = vpop.permute.xlu0 %245
    %247 = vrot.lane.b32.xlu0 %v232, 96
    %v248 = vpop.permute.xlu0 %247
    %vm249 = vcmask 64512
    %v250 = vsel %vm249, %v232, 0
    %v252 = vsel %vm249, %v248, 0
    %254 = vmatprep.subr.mxu0 0.0
    %255 = vmatpush1.xpose.msra.mxu0 0.0
    %256 = vmatprep.subr.mxu0 0.0
    %257 = vmatpush1.xpose.msra.mxu0 0.0
    %258 = vmatprep.subr.mxu0 0.0
    %259 = vmatpush1.xpose.msra.mxu0 0.0
    %260 = vmatprep.subr.mxu0 0.0
    %261 = vmatpush1.xpose.msra.mxu0 0.0
    %262 = vmatprep.subr.mxu0 0.0
    %263 = vmatpush1.xpose.msra.mxu0 0.0
    %264 = vmatprep.subr.mxu0 0.0
    %265 = vmatpush1.xpose.msra.mxu0 0.0
    %266 = vmatprep.subr.mxu0 0.0
    %267 = vmatpush1.xpose.msra.mxu0 0.0
    %268 = vmatprep.subr.mxu0 0.0
    %269 = vmatpush1.xpose.msra.mxu0 0.0
    %270 = vmatprep.subr.mxu0 0.0
    %271 = vmatpush1.xpose.msra.mxu0 0.0
    %272 = vmatprep.subr.mxu0 0.0
    %273 = vmatpush1.xpose.msra.mxu0 0.0
    %274 = vmatprep.subr.mxu0 0.0
    %275 = vmatpush1.xpose.msra.mxu0 0.0
    %276 = vmatprep.subr.mxu0 0.0
    %277 = vmatpush1.xpose.msra.mxu0 0.0
    %278 = vmatprep.subr.mxu0 0.0
    %279 = vmatpush1.xpose.msra.mxu0 0.0
    %280 = vmatprep.subr.mxu0 0.0
    %281 = vmatpush1.xpose.msra.mxu0 0.0
    %282 = vmatprep.subr.mxu0 0.0
    %283 = vmatpush1.xpose.msra.mxu0 0.0
    %284 = vmatprep.subr.mxu0 0.0
    %285 = vmatpush1.xpose.msra.mxu0 %v252
    %286 = vmatprep.subr.mxu0 0.0
    %287 = vmatpush2.xpose.msra.mxu0 0.0
    %288 = vmatprep.subr.mxu0 0.0
    %289 = vmatpush2.xpose.msra.mxu0 0.0
    %290 = vmatprep.subr.mxu0 0.0
    %291 = vmatpush2.xpose.msra.mxu0 0.0
    %292 = vmatprep.subr.mxu0 0.0
    %293 = vmatpush2.xpose.msra.mxu0 0.0
    %294 = vmatprep.subr.mxu0 0.0
    %295 = vmatpush2.xpose.msra.mxu0 0.0
    %296 = vmatprep.subr.mxu0 0.0
    %297 = vmatpush2.xpose.msra.mxu0 0.0
    %298 = vmatprep.subr.mxu0 0.0
    %299 = vmatpush2.xpose.msra.mxu0 0.0
    %300 = vmatprep.subr.mxu0 0.0
    %301 = vmatpush2.xpose.msra.mxu0 0.0
    %302 = vmatprep.subr.mxu0 0.0
    %303 = vmatpush2.xpose.msra.mxu0 0.0
    %304 = vmatprep.subr.mxu0 0.0
    %305 = vmatpush2.xpose.msra.mxu0 0.0
    %306 = vmatprep.subr.mxu0 0.0
    %307 = vmatpush2.xpose.msra.mxu0 0.0
    %308 = vmatprep.subr.mxu0 0.0
    %309 = vmatpush2.xpose.msra.mxu0 0.0
    %310 = vmatprep.subr.mxu0 0.0
    %311 = vmatpush2.xpose.msra.mxu0 0.0
    %312 = vmatprep.subr.mxu0 0.0
    %313 = vmatpush2.xpose.msra.mxu0 0.0
    %314 = vmatprep.subr.mxu0 0.0
    %315 = vmatpush2.xpose.msra.mxu0 0.0
    %316 = vmatprep.subr.mxu0 0.0
    %317 = vmatpush2.xpose.msra.mxu0 0.0
    %318 = vmatprep.mubr.f32.mxu0 0.0
    %319 = vmatmul.mubr.f32.gmra.mxu0 %v250
    %v320 = vpop.f32.mrf.mxu0
    %v321 = vadd.f32 0.0, %v320
    %v322 = vpop.f32.mrf.mxu0
    %323 = vdwg.mxu0
    %324 = vrot.lane.b32.xlu0 %v242, 96
    %v325 = vpop.permute.xlu0 %324
    %v326 = vsel %vm249, %v242, 0
    %v328 = vsel %vm249, %v325, 0
    %330 = vmatprep.subr.mxu0 0.0
    %331 = vmatpush1.xpose.msra.mxu0 0.0
    %332 = vmatprep.subr.mxu0 0.0
    %333 = vmatpush1.xpose.msra.mxu0 0.0
    %334 = vmatprep.subr.mxu0 0.0
    %335 = vmatpush1.xpose.msra.mxu0 0.0
    %336 = vmatprep.subr.mxu0 0.0
    %337 = vmatpush1.xpose.msra.mxu0 0.0
    %338 = vmatprep.subr.mxu0 0.0
    %339 = vmatpush1.xpose.msra.mxu0 0.0
    %340 = vmatprep.subr.mxu0 0.0
    %341 = vmatpush1.xpose.msra.mxu0 0.0
    %342 = vmatprep.subr.mxu0 0.0
    %343 = vmatpush1.xpose.msra.mxu0 0.0
    %344 = vmatprep.subr.mxu0 0.0
    %345 = vmatpush1.xpose.msra.mxu0 0.0
    %346 = vmatprep.subr.mxu0 0.0
    %347 = vmatpush1.xpose.msra.mxu0 0.0
    %348 = vmatprep.subr.mxu0 0.0
    %349 = vmatpush1.xpose.msra.mxu0 0.0
    %350 = vmatprep.subr.mxu0 0.0
    %351 = vmatpush1.xpose.msra.mxu0 0.0
    %352 = vmatprep.subr.mxu0 0.0
    %353 = vmatpush1.xpose.msra.mxu0 0.0
    %354 = vmatprep.subr.mxu0 0.0
    %355 = vmatpush1.xpose.msra.mxu0 0.0
    %356 = vmatprep.subr.mxu0 0.0
    %357 = vmatpush1.xpose.msra.mxu0 0.0
    %358 = vmatprep.subr.mxu0 0.0
    %359 = vmatpush1.xpose.msra.mxu0 0.0
    %360 = vmatprep.subr.mxu0 0.0
    %361 = vmatpush1.xpose.msra.mxu0 %v328
    %362 = vmatprep.subr.mxu0 0.0
    %363 = vmatpush2.xpose.msra.mxu0 0.0
    %364 = vmatprep.subr.mxu0 0.0
    %365 = vmatpush2.xpose.msra.mxu0 0.0
    %366 = vmatprep.subr.mxu0 0.0
    %367 = vmatpush2.xpose.msra.mxu0 0.0
    %368 = vmatprep.subr.mxu0 0.0
    %369 = vmatpush2.xpose.msra.mxu0 0.0
    %370 = vmatprep.subr.mxu0 0.0
    %371 = vmatpush2.xpose.msra.mxu0 0.0
    %372 = vmatprep.subr.mxu0 0.0
    %373 = vmatpush2.xpose.msra.mxu0 0.0
    %374 = vmatprep.subr.mxu0 0.0
    %375 = vmatpush2.xpose.msra.mxu0 0.0
    %376 = vmatprep.subr.mxu0 0.0
    %377 = vmatpush2.xpose.msra.mxu0 0.0
    %378 = vmatprep.subr.mxu0 0.0
    %379 = vmatpush2.xpose.msra.mxu0 0.0
    %380 = vmatprep.subr.mxu0 0.0
    %381 = vmatpush2.xpose.msra.mxu0 0.0
    %382 = vmatprep.subr.mxu0 0.0
    %383 = vmatpush2.xpose.msra.mxu0 0.0
    %384 = vmatprep.subr.mxu0 0.0
    %385 = vmatpush2.xpose.msra.mxu0 0.0
    %386 = vmatprep.subr.mxu0 0.0
    %387 = vmatpush2.xpose.msra.mxu0 0.0
    %388 = vmatprep.subr.mxu0 0.0
    %389 = vmatpush2.xpose.msra.mxu0 0.0
    %390 = vmatprep.subr.mxu0 0.0
    %391 = vmatpush2.xpose.msra.mxu0 0.0
    %392 = vmatprep.subr.mxu0 0.0
    %393 = vmatpush2.xpose.msra.mxu0 0.0
    %394 = vmatprep.mubr.f32.mxu0 0.0
    %395 = vmatmul.mubr.f32.gmra.mxu0 %v326
    %v396 = vpop.f32.mrf.mxu0
    %v397 = vadd.f32 0.0, %v396
    %v398 = vpop.f32.mrf.mxu0
    %399 = vdwg.mxu0
    %400 = vrot.lane.b32.xlu0 %v244, 96
    %v401 = vpop.permute.xlu0 %400
    %v402 = vsel %vm249, %v244, 0
    %v404 = vsel %vm249, %v401, 0
    %406 = vmatprep.subr.mxu0 0.0
    %407 = vmatpush1.xpose.msra.mxu0 0.0
    %408 = vmatprep.subr.mxu0 0.0
    %409 = vmatpush1.xpose.msra.mxu0 0.0
    %410 = vmatprep.subr.mxu0 0.0
    %411 = vmatpush1.xpose.msra.mxu0 0.0
    %412 = vmatprep.subr.mxu0 0.0
    %413 = vmatpush1.xpose.msra.mxu0 0.0
    %414 = vmatprep.subr.mxu0 0.0
    %415 = vmatpush1.xpose.msra.mxu0 0.0
    %416 = vmatprep.subr.mxu0 0.0
    %417 = vmatpush1.xpose.msra.mxu0 0.0
    %418 = vmatprep.subr.mxu0 0.0
    %419 = vmatpush1.xpose.msra.mxu0 0.0
    %420 = vmatprep.subr.mxu0 0.0
    %421 = vmatpush1.xpose.msra.mxu0 0.0
    %422 = vmatprep.subr.mxu0 0.0
    %423 = vmatpush1.xpose.msra.mxu0 0.0
    %424 = vmatprep.subr.mxu0 0.0
    %425 = vmatpush1.xpose.msra.mxu0 0.0
    %426 = vmatprep.subr.mxu0 0.0
    %427 = vmatpush1.xpose.msra.mxu0 0.0
    %428 = vmatprep.subr.mxu0 0.0
    %429 = vmatpush1.xpose.msra.mxu0 0.0
    %430 = vmatprep.subr.mxu0 0.0
    %431 = vmatpush1.xpose.msra.mxu0 0.0
    %432 = vmatprep.subr.mxu0 0.0
    %433 = vmatpush1.xpose.msra.mxu0 0.0
    %434 = vmatprep.subr.mxu0 0.0
    %435 = vmatpush1.xpose.msra.mxu0 0.0
    %436 = vmatprep.subr.mxu0 0.0
    %437 = vmatpush1.xpose.msra.mxu0 %v404
    %438 = vmatprep.subr.mxu0 0.0
    %439 = vmatpush2.xpose.msra.mxu0 0.0
    %440 = vmatprep.subr.mxu0 0.0
    %441 = vmatpush2.xpose.msra.mxu0 0.0
    %442 = vmatprep.subr.mxu0 0.0
    %443 = vmatpush2.xpose.msra.mxu0 0.0
    %444 = vmatprep.subr.mxu0 0.0
    %445 = vmatpush2.xpose.msra.mxu0 0.0
    %446 = vmatprep.subr.mxu0 0.0
    %447 = vmatpush2.xpose.msra.mxu0 0.0
    %448 = vmatprep.subr.mxu0 0.0
    %449 = vmatpush2.xpose.msra.mxu0 0.0
    %450 = vmatprep.subr.mxu0 0.0
    %451 = vmatpush2.xpose.msra.mxu0 0.0
    %452 = vmatprep.subr.mxu0 0.0
    %453 = vmatpush2.xpose.msra.mxu0 0.0
    %454 = vmatprep.subr.mxu0 0.0
    %455 = vmatpush2.xpose.msra.mxu0 0.0
    %456 = vmatprep.subr.mxu0 0.0
    %457 = vmatpush2.xpose.msra.mxu0 0.0
    %458 = vmatprep.subr.mxu0 0.0
    %459 = vmatpush2.xpose.msra.mxu0 0.0
    %460 = vmatprep.subr.mxu0 0.0
    %461 = vmatpush2.xpose.msra.mxu0 0.0
    %462 = vmatprep.subr.mxu0 0.0
    %463 = vmatpush2.xpose.msra.mxu0 0.0
    %464 = vmatprep.subr.mxu0 0.0
    %465 = vmatpush2.xpose.msra.mxu0 0.0
    %466 = vmatprep.subr.mxu0 0.0
    %467 = vmatpush2.xpose.msra.mxu0 0.0
    %468 = vmatprep.subr.mxu0 0.0
    %469 = vmatpush2.xpose.msra.mxu0 0.0
    %470 = vmatprep.mubr.f32.mxu0 0.0
    %471 = vmatmul.mubr.f32.gmra.mxu0 %v402
    %v472 = vpop.f32.mrf.mxu0
    %v473 = vadd.f32 0.0, %v472
    %v474 = vpop.f32.mrf.mxu0
    %475 = vdwg.mxu0
    %476 = vrot.lane.b32.xlu0 %v246, 96
    %v477 = vpop.permute.xlu0 %476
    %v478 = vsel %vm249, %v246, 0
    %v480 = vsel %vm249, %v477, 0
    %482 = vmatprep.subr.mxu0 0.0
    %483 = vmatpush1.xpose.msra.mxu0 0.0
    %484 = vmatprep.subr.mxu0 0.0
    %485 = vmatpush1.xpose.msra.mxu0 0.0
    %486 = vmatprep.subr.mxu0 0.0
    %487 = vmatpush1.xpose.msra.mxu0 0.0
    %488 = vmatprep.subr.mxu0 0.0
    %489 = vmatpush1.xpose.msra.mxu0 0.0
    %490 = vmatprep.subr.mxu0 0.0
    %491 = vmatpush1.xpose.msra.mxu0 0.0
    %492 = vmatprep.subr.mxu0 0.0
    %493 = vmatpush1.xpose.msra.mxu0 0.0
    %494 = vmatprep.subr.mxu0 0.0
    %495 = vmatpush1.xpose.msra.mxu0 0.0
    %496 = vmatprep.subr.mxu0 0.0
    %497 = vmatpush1.xpose.msra.mxu0 0.0
    %498 = vmatprep.subr.mxu0 0.0
    %499 = vmatpush1.xpose.msra.mxu0 0.0
    %500 = vmatprep.subr.mxu0 0.0
    %501 = vmatpush1.xpose.msra.mxu0 0.0
    %502 = vmatprep.subr.mxu0 0.0
    %503 = vmatpush1.xpose.msra.mxu0 0.0
    %504 = vmatprep.subr.mxu0 0.0
    %505 = vmatpush1.xpose.msra.mxu0 0.0
    %506 = vmatprep.subr.mxu0 0.0
    %507 = vmatpush1.xpose.msra.mxu0 0.0
    %508 = vmatprep.subr.mxu0 0.0
    %509 = vmatpush1.xpose.msra.mxu0 0.0
    %510 = vmatprep.subr.mxu0 0.0
    %511 = vmatpush1.xpose.msra.mxu0 0.0
    %512 = vmatprep.subr.mxu0 0.0
    %513 = vmatpush1.xpose.msra.mxu0 %v480
    %514 = vmatprep.subr.mxu0 0.0
    %515 = vmatpush2.xpose.msra.mxu0 0.0
    %516 = vmatprep.subr.mxu0 0.0
    %517 = vmatpush2.xpose.msra.mxu0 0.0
    %518 = vmatprep.subr.mxu0 0.0
    %519 = vmatpush2.xpose.msra.mxu0 0.0
    %520 = vmatprep.subr.mxu0 0.0
    %521 = vmatpush2.xpose.msra.mxu0 0.0
    %522 = vmatprep.subr.mxu0 0.0
    %523 = vmatpush2.xpose.msra.mxu0 0.0
    %524 = vmatprep.subr.mxu0 0.0
    %525 = vmatpush2.xpose.msra.mxu0 0.0
    %526 = vmatprep.subr.mxu0 0.0
    %527 = vmatpush2.xpose.msra.mxu0 0.0
    %528 = vmatprep.subr.mxu0 0.0
    %529 = vmatpush2.xpose.msra.mxu0 0.0
    %530 = vmatprep.subr.mxu0 0.0
    %531 = vmatpush2.xpose.msra.mxu0 0.0
    %532 = vmatprep.subr.mxu0 0.0
    %533 = vmatpush2.xpose.msra.mxu0 0.0
    %534 = vmatprep.subr.mxu0 0.0
    %535 = vmatpush2.xpose.msra.mxu0 0.0
    %536 = vmatprep.subr.mxu0 0.0
    %537 = vmatpush2.xpose.msra.mxu0 0.0
    %538 = vmatprep.subr.mxu0 0.0
    %539 = vmatpush2.xpose.msra.mxu0 0.0
    %540 = vmatprep.subr.mxu0 0.0
    %541 = vmatpush2.xpose.msra.mxu0 0.0
    %542 = vmatprep.subr.mxu0 0.0
    %543 = vmatpush2.xpose.msra.mxu0 0.0
    %544 = vmatprep.subr.mxu0 0.0
    %545 = vmatpush2.xpose.msra.mxu0 0.0
    %546 = vmatprep.mubr.f32.mxu0 0.0
    %547 = vmatmul.mubr.f32.gmra.mxu0 %v478
    %v548 = vpop.f32.mrf.mxu0
    %v549 = vadd.f32 0.0, %v548
    %v550 = vpop.f32.mrf.mxu0
    %551 = vdwg.mxu0
    %v552 = vmul.f32 %v321, 0.35355338
    %v553 = vmul.f32 %v397, 0.35355338
    %v554 = vmul.f32 %v473, 0.35355338
    %v555 = vmul.f32 %v549, 0.35355338
    %v556 = vsel %vm98, 1, 0
    %v557 = vlaneseq
    %v558 = vshrl.u32 %v557, 7
    %v559 = vsub.s32 0, %v558
    %v560 = vrot.slane %v556, %v559
    %vm561 = vcmp.eq.s32.totalorder %v560, 1
    %v562 = vsel %vm561, -1e+09, %v552
    %v563 = vsel %vm561, -1e+09, %v553
    %v564 = vsel %vm561, -1e+09, %v554
    %v565 = vsel %vm561, -1e+09, %v555
    %v566 = vsel %vm249, %v562, -inf
    %567 = vmax.xlane.f32.xlu0 %v566
    %v568 = vpop.xlane.xlu0 %567
    %v569 = vsel %vm249, %v563, -inf
    %570 = vmax.xlane.f32.xlu0 %v569
    %v571 = vpop.xlane.xlu0 %570
    %v572 = vsel %vm249, %v564, -inf
    %573 = vmax.xlane.f32.xlu0 %v572
    %v574 = vpop.xlane.xlu0 %573
    %v575 = vsel %vm249, %v565, -inf
    %576 = vmax.xlane.f32.xlu0 %v575
    %v577 = vpop.xlane.xlu0 %576
    %v578 = vsub.f32 %v562, %v568
    %v579 = vsub.f32 %v563, %v571
    %v580 = vsub.f32 %v564, %v574
    %v581 = vsub.f32 %v565, %v577
    %v582 = vmul.f32 %v578, 1.442695
    %v583 = vpow.pop %v582
    %v584 = vmul.f32 %v579, 1.442695
    %v585 = vpow.pop %v584
    %v586 = vmul.f32 %v580, 1.442695
    %v587 = vpow.pop %v586
    %v588 = vmul.f32 %v581, 1.442695
    %v589 = vpow.pop %v588
    %v590 = vsel %vm249, %v583, 0.0
    %591 = vadd.xlane.f32.xlu0 %v590
    %v592 = vpop.xlane.xlu0 %591
    %v593 = vsel %vm249, %v585, 0.0
    %594 = vadd.xlane.f32.xlu0 %v593
    %v595 = vpop.xlane.xlu0 %594
    %v596 = vsel %vm249, %v587, 0.0
    %597 = vadd.xlane.f32.xlu0 %v596
    %v598 = vpop.xlane.xlu0 %597
    %v599 = vsel %vm249, %v589, 0.0
    %600 = vadd.xlane.f32.xlu0 %v599
    %v601 = vpop.xlane.xlu0 %600
    %v602 = vrcp.pop %v592
    %v603 = vrcp.pop %v595
    %v604 = vrcp.pop %v598
    %v605 = vrcp.pop %v601
    %v606 = vmul.f32 %v592, %v602
    %v607 = vmul.f32 %v595, %v603
    %v608 = vmul.f32 %v598, %v604
    %v609 = vmul.f32 %v601, %v605
    %v610 = vsub.f32 2.0, %v606
    %v611 = vsub.f32 2.0, %v607
    %v612 = vsub.f32 2.0, %v608
    %v613 = vsub.f32 2.0, %v609
    %v614 = vmul.f32 %v602, %v610
    %v615 = vmul.f32 %v603, %v611
    %v616 = vmul.f32 %v604, %v612
    %v617 = vmul.f32 %v605, %v613
    %v618 = vmul.f32 %v583, %v614
    %v619 = vmul.f32 %v585, %v615
    %v620 = vmul.f32 %v587, %v616
    %v621 = vmul.f32 %v589, %v617
    %622 = vrot.lane.b32.xlu0 %v232, 64
    %v623 = vpop.permute.xlu0 %622
    %v626 = vsel %vm249, %v618, 0
    %628 = vmatprep.subr.mxu0 0.0
    %629 = vmatpush1.msra.mxu0 0.0
    %630 = vmatprep.subr.mxu0 0.0
    %631 = vmatpush1.msra.mxu0 0.0
    %632 = vmatprep.subr.mxu0 0.0
    %633 = vmatpush1.msra.mxu0 0.0
    %634 = vmatprep.subr.mxu0 0.0
    %635 = vmatpush1.msra.mxu0 0.0
    %636 = vmatprep.subr.mxu0 0.0
    %637 = vmatpush1.msra.mxu0 0.0
    %638 = vmatprep.subr.mxu0 0.0
    %639 = vmatpush1.msra.mxu0 0.0
    %640 = vmatprep.subr.mxu0 0.0
    %641 = vmatpush1.msra.mxu0 0.0
    %642 = vmatprep.subr.mxu0 0.0
    %643 = vmatpush1.msra.mxu0 0.0
    %644 = vmatprep.subr.mxu0 0.0
    %645 = vmatpush1.msra.mxu0 0.0
    %646 = vmatprep.subr.mxu0 0.0
    %647 = vmatpush1.msra.mxu0 0.0
    %648 = vmatprep.subr.mxu0 0.0
    %649 = vmatpush1.msra.mxu0 0.0
    %650 = vmatprep.subr.mxu0 0.0
    %651 = vmatpush1.msra.mxu0 0.0
    %652 = vmatprep.subr.mxu0 0.0
    %653 = vmatpush1.msra.mxu0 0.0
    %654 = vmatprep.subr.mxu0 0.0
    %655 = vmatpush1.msra.mxu0 0.0
    %656 = vmatprep.subr.mxu0 0.0
    %657 = vmatpush1.msra.mxu0 0.0
    %658 = vmatprep.subr.mxu0 0.0
    %659 = vmatpush1.msra.mxu0 %v623
    %660 = vmatprep.subr.mxu0 0.0
    %661 = vmatpush2.msra.mxu0 0.0
    %662 = vmatprep.subr.mxu0 0.0
    %663 = vmatpush2.msra.mxu0 0.0
    %664 = vmatprep.subr.mxu0 0.0
    %665 = vmatpush2.msra.mxu0 0.0
    %666 = vmatprep.subr.mxu0 0.0
    %667 = vmatpush2.msra.mxu0 0.0
    %668 = vmatprep.subr.mxu0 0.0
    %669 = vmatpush2.msra.mxu0 0.0
    %670 = vmatprep.subr.mxu0 0.0
    %671 = vmatpush2.msra.mxu0 0.0
    %672 = vmatprep.subr.mxu0 0.0
    %673 = vmatpush2.msra.mxu0 0.0
    %674 = vmatprep.subr.mxu0 0.0
    %675 = vmatpush2.msra.mxu0 0.0
    %676 = vmatprep.subr.mxu0 0.0
    %677 = vmatpush2.msra.mxu0 0.0
    %678 = vmatprep.subr.mxu0 0.0
    %679 = vmatpush2.msra.mxu0 0.0
    %680 = vmatprep.subr.mxu0 0.0
    %681 = vmatpush2.msra.mxu0 0.0
    %682 = vmatprep.subr.mxu0 0.0
    %683 = vmatpush2.msra.mxu0 0.0
    %684 = vmatprep.subr.mxu0 0.0
    %685 = vmatpush2.msra.mxu0 0.0
    %686 = vmatprep.subr.mxu0 0.0
    %687 = vmatpush2.msra.mxu0 0.0
    %688 = vmatprep.subr.mxu0 0.0
    %689 = vmatpush2.msra.mxu0 0.0
    %690 = vmatprep.subr.mxu0 0.0
    %691 = vmatpush2.msra.mxu0 0.0
    %692 = vmatprep.mubr.f32.mxu0 0.0
    %693 = vmatmul.mubr.f32.gmra.mxu0 %v626
    %v694 = vpop.f32.mrf.mxu0
    %v695 = vadd.f32 0.0, %v694
    %v696 = vpop.f32.mrf.mxu0
    %697 = vdwg.mxu0
    %698 = vrot.lane.b32.xlu0 %v242, 64
    %v699 = vpop.permute.xlu0 %698
    %v702 = vsel %vm249, %v619, 0
    %704 = vmatprep.subr.mxu0 0.0
    %705 = vmatpush1.msra.mxu0 0.0
    %706 = vmatprep.subr.mxu0 0.0
    %707 = vmatpush1.msra.mxu0 0.0
    %708 = vmatprep.subr.mxu0 0.0
    %709 = vmatpush1.msra.mxu0 0.0
    %710 = vmatprep.subr.mxu0 0.0
    %711 = vmatpush1.msra.mxu0 0.0
    %712 = vmatprep.subr.mxu0 0.0
    %713 = vmatpush1.msra.mxu0 0.0
    %714 = vmatprep.subr.mxu0 0.0
    %715 = vmatpush1.msra.mxu0 0.0
    %716 = vmatprep.subr.mxu0 0.0
    %717 = vmatpush1.msra.mxu0 0.0
    %718 = vmatprep.subr.mxu0 0.0
    %719 = vmatpush1.msra.mxu0 0.0
    %720 = vmatprep.subr.mxu0 0.0
    %721 = vmatpush1.msra.mxu0 0.0
    %722 = vmatprep.subr.mxu0 0.0
    %723 = vmatpush1.msra.mxu0 0.0
    %724 = vmatprep.subr.mxu0 0.0
    %725 = vmatpush1.msra.mxu0 0.0
    %726 = vmatprep.subr.mxu0 0.0
    %727 = vmatpush1.msra.mxu0 0.0
    %728 = vmatprep.subr.mxu0 0.0
    %729 = vmatpush1.msra.mxu0 0.0
    %730 = vmatprep.subr.mxu0 0.0
    %731 = vmatpush1.msra.mxu0 0.0
    %732 = vmatprep.subr.mxu0 0.0
    %733 = vmatpush1.msra.mxu0 0.0
    %734 = vmatprep.subr.mxu0 0.0
    %735 = vmatpush1.msra.mxu0 %v699
    %736 = vmatprep.subr.mxu0 0.0
    %737 = vmatpush2.msra.mxu0 0.0
    %738 = vmatprep.subr.mxu0 0.0
    %739 = vmatpush2.msra.mxu0 0.0
    %740 = vmatprep.subr.mxu0 0.0
    %741 = vmatpush2.msra.mxu0 0.0
    %742 = vmatprep.subr.mxu0 0.0
    %743 = vmatpush2.msra.mxu0 0.0
    %744 = vmatprep.subr.mxu0 0.0
    %745 = vmatpush2.msra.mxu0 0.0
    %746 = vmatprep.subr.mxu0 0.0
    %747 = vmatpush2.msra.mxu0 0.0
    %748 = vmatprep.subr.mxu0 0.0
    %749 = vmatpush2.msra.mxu0 0.0
    %750 = vmatprep.subr.mxu0 0.0
    %751 = vmatpush2.msra.mxu0 0.0
    %752 = vmatprep.subr.mxu0 0.0
    %753 = vmatpush2.msra.mxu0 0.0
    %754 = vmatprep.subr.mxu0 0.0
    %755 = vmatpush2.msra.mxu0 0.0
    %756 = vmatprep.subr.mxu0 0.0
    %757 = vmatpush2.msra.mxu0 0.0
    %758 = vmatprep.subr.mxu0 0.0
    %759 = vmatpush2.msra.mxu0 0.0
    %760 = vmatprep.subr.mxu0 0.0
    %761 = vmatpush2.msra.mxu0 0.0
    %762 = vmatprep.subr.mxu0 0.0
    %763 = vmatpush2.msra.mxu0 0.0
    %764 = vmatprep.subr.mxu0 0.0
    %765 = vmatpush2.msra.mxu0 0.0
    %766 = vmatprep.subr.mxu0 0.0
    %767 = vmatpush2.msra.mxu0 0.0
    %768 = vmatprep.mubr.f32.mxu0 0.0
    %769 = vmatmul.mubr.f32.gmra.mxu0 %v702
    %v770 = vpop.f32.mrf.mxu0
    %v771 = vadd.f32 0.0, %v770
    %v772 = vpop.f32.mrf.mxu0
    %773 = vdwg.mxu0
    %774 = vrot.lane.b32.xlu0 %v244, 64
    %v775 = vpop.permute.xlu0 %774
    %v778 = vsel %vm249, %v620, 0
    %780 = vmatprep.subr.mxu0 0.0
    %781 = vmatpush1.msra.mxu0 0.0
    %782 = vmatprep.subr.mxu0 0.0
    %783 = vmatpush1.msra.mxu0 0.0
    %784 = vmatprep.subr.mxu0 0.0
    %785 = vmatpush1.msra.mxu0 0.0
    %786 = vmatprep.subr.mxu0 0.0
    %787 = vmatpush1.msra.mxu0 0.0
    %788 = vmatprep.subr.mxu0 0.0
    %789 = vmatpush1.msra.mxu0 0.0
    %790 = vmatprep.subr.mxu0 0.0
    %791 = vmatpush1.msra.mxu0 0.0
    %792 = vmatprep.subr.mxu0 0.0
    %793 = vmatpush1.msra.mxu0 0.0
    %794 = vmatprep.subr.mxu0 0.0
    %795 = vmatpush1.msra.mxu0 0.0
    %796 = vmatprep.subr.mxu0 0.0
    %797 = vmatpush1.msra.mxu0 0.0
    %798 = vmatprep.subr.mxu0 0.0
    %799 = vmatpush1.msra.mxu0 0.0
    %800 = vmatprep.subr.mxu0 0.0
    %801 = vmatpush1.msra.mxu0 0.0
    %802 = vmatprep.subr.mxu0 0.0
    %803 = vmatpush1.msra.mxu0 0.0
    %804 = vmatprep.subr.mxu0 0.0
    %805 = vmatpush1.msra.mxu0 0.0
    %806 = vmatprep.subr.mxu0 0.0
    %807 = vmatpush1.msra.mxu0 0.0
    %808 = vmatprep.subr.mxu0 0.0
    %809 = vmatpush1.msra.mxu0 0.0
    %810 = vmatprep.subr.mxu0 0.0
    %811 = vmatpush1.msra.mxu0 %v775
    %812 = vmatprep.subr.mxu0 0.0
    %813 = vmatpush2.msra.mxu0 0.0
    %814 = vmatprep.subr.mxu0 0.0
    %815 = vmatpush2.msra.mxu0 0.0
    %816 = vmatprep.subr.mxu0 0.0
    %817 = vmatpush2.msra.mxu0 0.0
    %818 = vmatprep.subr.mxu0 0.0
    %819 = vmatpush2.msra.mxu0 0.0
    %820 = vmatprep.subr.mxu0 0.0
    %821 = vmatpush2.msra.mxu0 0.0
    %822 = vmatprep.subr.mxu0 0.0
    %823 = vmatpush2.msra.mxu0 0.0
    %824 = vmatprep.subr.mxu0 0.0
    %825 = vmatpush2.msra.mxu0 0.0
    %826 = vmatprep.subr.mxu0 0.0
    %827 = vmatpush2.msra.mxu0 0.0
    %828 = vmatprep.subr.mxu0 0.0
    %829 = vmatpush2.msra.mxu0 0.0
    %830 = vmatprep.subr.mxu0 0.0
    %831 = vmatpush2.msra.mxu0 0.0
    %832 = vmatprep.subr.mxu0 0.0
    %833 = vmatpush2.msra.mxu0 0.0
    %834 = vmatprep.subr.mxu0 0.0
    %835 = vmatpush2.msra.mxu0 0.0
    %836 = vmatprep.subr.mxu0 0.0
    %837 = vmatpush2.msra.mxu0 0.0
    %838 = vmatprep.subr.mxu0 0.0
    %839 = vmatpush2.msra.mxu0 0.0
    %840 = vmatprep.subr.mxu0 0.0
    %841 = vmatpush2.msra.mxu0 0.0
    %842 = vmatprep.subr.mxu0 0.0
    %843 = vmatpush2.msra.mxu0 0.0
    %844 = vmatprep.mubr.f32.mxu0 0.0
    %845 = vmatmul.mubr.f32.gmra.mxu0 %v778
    %v846 = vpop.f32.mrf.mxu0
    %v847 = vadd.f32 0.0, %v846
    %v848 = vpop.f32.mrf.mxu0
    %849 = vdwg.mxu0
    %850 = vrot.lane.b32.xlu0 %v246, 64
    %v851 = vpop.permute.xlu0 %850
    %v854 = vsel %vm249, %v621, 0
    %856 = vmatprep.subr.mxu0 0.0
    %857 = vmatpush1.msra.mxu0 0.0
    %858 = vmatprep.subr.mxu0 0.0
    %859 = vmatpush1.msra.mxu0 0.0
    %860 = vmatprep.subr.mxu0 0.0
    %861 = vmatpush1.msra.mxu0 0.0
    %862 = vmatprep.subr.mxu0 0.0
    %863 = vmatpush1.msra.mxu0 0.0
    %864 = vmatprep.subr.mxu0 0.0
    %865 = vmatpush1.msra.mxu0 0.0
    %866 = vmatprep.subr.mxu0 0.0
    %867 = vmatpush1.msra.mxu0 0.0
    %868 = vmatprep.subr.mxu0 0.0
    %869 = vmatpush1.msra.mxu0 0.0
    %870 = vmatprep.subr.mxu0 0.0
    %871 = vmatpush1.msra.mxu0 0.0
    %872 = vmatprep.subr.mxu0 0.0
    %873 = vmatpush1.msra.mxu0 0.0
    %874 = vmatprep.subr.mxu0 0.0
    %875 = vmatpush1.msra.mxu0 0.0
    %876 = vmatprep.subr.mxu0 0.0
    %877 = vmatpush1.msra.mxu0 0.0
    %878 = vmatprep.subr.mxu0 0.0
    %879 = vmatpush1.msra.mxu0 0.0
    %880 = vmatprep.subr.mxu0 0.0
    %881 = vmatpush1.msra.mxu0 0.0
    %882 = vmatprep.subr.mxu0 0.0
    %883 = vmatpush1.msra.mxu0 0.0
    %884 = vmatprep.subr.mxu0 0.0
    %885 = vmatpush1.msra.mxu0 0.0
    %886 = vmatprep.subr.mxu0 0.0
    %887 = vmatpush1.msra.mxu0 %v851
    %888 = vmatprep.subr.mxu0 0.0
    %889 = vmatpush2.msra.mxu0 0.0
    %890 = vmatprep.subr.mxu0 0.0
    %891 = vmatpush2.msra.mxu0 0.0
    %892 = vmatprep.subr.mxu0 0.0
    %893 = vmatpush2.msra.mxu0 0.0
    %894 = vmatprep.subr.mxu0 0.0
    %895 = vmatpush2.msra.mxu0 0.0
    %896 = vmatprep.subr.mxu0 0.0
    %897 = vmatpush2.msra.mxu0 0.0
    %898 = vmatprep.subr.mxu0 0.0
    %899 = vmatpush2.msra.mxu0 0.0
    %900 = vmatprep.subr.mxu0 0.0
    %901 = vmatpush2.msra.mxu0 0.0
    %902 = vmatprep.subr.mxu0 0.0
    %903 = vmatpush2.msra.mxu0 0.0
    %904 = vmatprep.subr.mxu0 0.0
    %905 = vmatpush2.msra.mxu0 0.0
    %906 = vmatprep.subr.mxu0 0.0
    %907 = vmatpush2.msra.mxu0 0.0
    %908 = vmatprep.subr.mxu0 0.0
    %909 = vmatpush2.msra.mxu0 0.0
    %910 = vmatprep.subr.mxu0 0.0
    %911 = vmatpush2.msra.mxu0 0.0
    %912 = vmatprep.subr.mxu0 0.0
    %913 = vmatpush2.msra.mxu0 0.0
    %914 = vmatprep.subr.mxu0 0.0
    %915 = vmatpush2.msra.mxu0 0.0
    %916 = vmatprep.subr.mxu0 0.0
    %917 = vmatpush2.msra.mxu0 0.0
    %918 = vmatprep.subr.mxu0 0.0
    %919 = vmatpush2.msra.mxu0 0.0
    %920 = vmatprep.mubr.f32.mxu0 0.0
    %921 = vmatmul.mubr.f32.gmra.mxu0 %v854
    %v922 = vpop.f32.mrf.mxu0
    %v923 = vadd.f32 0.0, %v922
    %v924 = vpop.f32.mrf.mxu0
    %925 = vdwg.mxu0
    %927 = vrot.lane.b32.xlu0 %v771, 8
    %v928 = vpop.permute.xlu0 %927
    %931 = vrot.lane.b32.xlu0 %v847, 16
    %v932 = vpop.permute.xlu0 %931
    %935 = vrot.lane.b32.xlu0 %v923, 24
    %v936 = vpop.permute.xlu0 %935
    %v938 = vsel %vm249, %v695, %v928
    %vm939 = vcmask 130048
    %v940 = vsel %vm939, %v938, %v932
    %vm941 = vcmask 195584
    %v942 = vsel %vm941, %v940, %v936
    %944 = vrot.lane.b32.xlu0 %v237, 120
    %v945 = vpop.permute.xlu0 %944
    %946 = vrot.lane.b32.xlu0 %v237, 112
    %v947 = vpop.permute.xlu0 %946
    %948 = vrot.lane.b32.xlu0 %v237, 104
    %v949 = vpop.permute.xlu0 %948
    %950 = vrot.lane.b32.xlu0 %v237, 96
    %v951 = vpop.permute.xlu0 %950
    %v952 = vsel %vm249, %v237, 0
    %v954 = vsel %vm249, %v951, 0
    %956 = vmatprep.subr.mxu0 0.0
    %957 = vmatpush1.xpose.msra.mxu0 0.0
    %958 = vmatprep.subr.mxu0 0.0
    %959 = vmatpush1.xpose.msra.mxu0 0.0
    %960 = vmatprep.subr.mxu0 0.0
    %961 = vmatpush1.xpose.msra.mxu0 0.0
    %962 = vmatprep.subr.mxu0 0.0
    %963 = vmatpush1.xpose.msra.mxu0 0.0
    %964 = vmatprep.subr.mxu0 0.0
    %965 = vmatpush1.xpose.msra.mxu0 0.0
    %966 = vmatprep.subr.mxu0 0.0
    %967 = vmatpush1.xpose.msra.mxu0 0.0
    %968 = vmatprep.subr.mxu0 0.0
    %969 = vmatpush1.xpose.msra.mxu0 0.0
    %970 = vmatprep.subr.mxu0 0.0
    %971 = vmatpush1.xpose.msra.mxu0 0.0
    %972 = vmatprep.subr.mxu0 0.0
    %973 = vmatpush1.xpose.msra.mxu0 0.0
    %974 = vmatprep.subr.mxu0 0.0
    %975 = vmatpush1.xpose.msra.mxu0 0.0
    %976 = vmatprep.subr.mxu0 0.0
    %977 = vmatpush1.xpose.msra.mxu0 0.0
    %978 = vmatprep.subr.mxu0 0.0
    %979 = vmatpush1.xpose.msra.mxu0 0.0
    %980 = vmatprep.subr.mxu0 0.0
    %981 = vmatpush1.xpose.msra.mxu0 0.0
    %982 = vmatprep.subr.mxu0 0.0
    %983 = vmatpush1.xpose.msra.mxu0 0.0
    %984 = vmatprep.subr.mxu0 0.0
    %985 = vmatpush1.xpose.msra.mxu0 0.0
    %986 = vmatprep.subr.mxu0 0.0
    %987 = vmatpush1.xpose.msra.mxu0 %v954
    %988 = vmatprep.subr.mxu0 0.0
    %989 = vmatpush2.xpose.msra.mxu0 0.0
    %990 = vmatprep.subr.mxu0 0.0
    %991 = vmatpush2.xpose.msra.mxu0 0.0
    %992 = vmatprep.subr.mxu0 0.0
    %993 = vmatpush2.xpose.msra.mxu0 0.0
    %994 = vmatprep.subr.mxu0 0.0
    %995 = vmatpush2.xpose.msra.mxu0 0.0
    %996 = vmatprep.subr.mxu0 0.0
    %997 = vmatpush2.xpose.msra.mxu0 0.0
    %998 = vmatprep.subr.mxu0 0.0
    %999 = vmatpush2.xpose.msra.mxu0 0.0
    %1000 = vmatprep.subr.mxu0 0.0
    %1001 = vmatpush2.xpose.msra.mxu0 0.0
    %1002 = vmatprep.subr.mxu0 0.0
    %1003 = vmatpush2.xpose.msra.mxu0 0.0
    %1004 = vmatprep.subr.mxu0 0.0
    %1005 = vmatpush2.xpose.msra.mxu0 0.0
    %1006 = vmatprep.subr.mxu0 0.0
    %1007 = vmatpush2.xpose.msra.mxu0 0.0
    %1008 = vmatprep.subr.mxu0 0.0
    %1009 = vmatpush2.xpose.msra.mxu0 0.0
    %1010 = vmatprep.subr.mxu0 0.0
    %1011 = vmatpush2.xpose.msra.mxu0 0.0
    %1012 = vmatprep.subr.mxu0 0.0
    %1013 = vmatpush2.xpose.msra.mxu0 0.0
    %1014 = vmatprep.subr.mxu0 0.0
    %1015 = vmatpush2.xpose.msra.mxu0 0.0
    %1016 = vmatprep.subr.mxu0 0.0
    %1017 = vmatpush2.xpose.msra.mxu0 0.0
    %1018 = vmatprep.subr.mxu0 0.0
    %1019 = vmatpush2.xpose.msra.mxu0 0.0
    %1020 = vmatprep.mubr.f32.mxu0 0.0
    %1021 = vmatmul.mubr.f32.gmra.mxu0 %v952
    %v1022 = vpop.f32.mrf.mxu0
    %v1023 = vadd.f32 0.0, %v1022
    %v1024 = vpop.f32.mrf.mxu0
    %1025 = vdwg.mxu0
    %1026 = vrot.lane.b32.xlu0 %v945, 96
    %v1027 = vpop.permute.xlu0 %1026
    %v1028 = vsel %vm249, %v945, 0
    %v1030 = vsel %vm249, %v1027, 0
    %1032 = vmatprep.subr.mxu0 0.0
    %1033 = vmatpush1.xpose.msra.mxu0 0.0
    %1034 = vmatprep.subr.mxu0 0.0
    %1035 = vmatpush1.xpose.msra.mxu0 0.0
    %1036 = vmatprep.subr.mxu0 0.0
    %1037 = vmatpush1.xpose.msra.mxu0 0.0
    %1038 = vmatprep.subr.mxu0 0.0
    %1039 = vmatpush1.xpose.msra.mxu0 0.0
    %1040 = vmatprep.subr.mxu0 0.0
    %1041 = vmatpush1.xpose.msra.mxu0 0.0
    %1042 = vmatprep.subr.mxu0 0.0
    %1043 = vmatpush1.xpose.msra.mxu0 0.0
    %1044 = vmatprep.subr.mxu0 0.0
    %1045 = vmatpush1.xpose.msra.mxu0 0.0
    %1046 = vmatprep.subr.mxu0 0.0
    %1047 = vmatpush1.xpose.msra.mxu0 0.0
    %1048 = vmatprep.subr.mxu0 0.0
    %1049 = vmatpush1.xpose.msra.mxu0 0.0
    %1050 = vmatprep.subr.mxu0 0.0
    %1051 = vmatpush1.xpose.msra.mxu0 0.0
    %1052 = vmatprep.subr.mxu0 0.0
    %1053 = vmatpush1.xpose.msra.mxu0 0.0
    %1054 = vmatprep.subr.mxu0 0.0
    %1055 = vmatpush1.xpose.msra.mxu0 0.0
    %1056 = vmatprep.subr.mxu0 0.0
    %1057 = vmatpush1.xpose.msra.mxu0 0.0
    %1058 = vmatprep.subr.mxu0 0.0
    %1059 = vmatpush1.xpose.msra.mxu0 0.0
    %1060 = vmatprep.subr.mxu0 0.0
    %1061 = vmatpush1.xpose.msra.mxu0 0.0
    %1062 = vmatprep.subr.mxu0 0.0
    %1063 = vmatpush1.xpose.msra.mxu0 %v1030
    %1064 = vmatprep.subr.mxu0 0.0
    %1065 = vmatpush2.xpose.msra.mxu0 0.0
    %1066 = vmatprep.subr.mxu0 0.0
    %1067 = vmatpush2.xpose.msra.mxu0 0.0
    %1068 = vmatprep.subr.mxu0 0.0
    %1069 = vmatpush2.xpose.msra.mxu0 0.0
    %1070 = vmatprep.subr.mxu0 0.0
    %1071 = vmatpush2.xpose.msra.mxu0 0.0
    %1072 = vmatprep.subr.mxu0 0.0
    %1073 = vmatpush2.xpose.msra.mxu0 0.0
    %1074 = vmatprep.subr.mxu0 0.0
    %1075 = vmatpush2.xpose.msra.mxu0 0.0
    %1076 = vmatprep.subr.mxu0 0.0
    %1077 = vmatpush2.xpose.msra.mxu0 0.0
    %1078 = vmatprep.subr.mxu0 0.0
    %1079 = vmatpush2.xpose.msra.mxu0 0.0
    %1080 = vmatprep.subr.mxu0 0.0
    %1081 = vmatpush2.xpose.msra.mxu0 0.0
    %1082 = vmatprep.subr.mxu0 0.0
    %1083 = vmatpush2.xpose.msra.mxu0 0.0
    %1084 = vmatprep.subr.mxu0 0.0
    %1085 = vmatpush2.xpose.msra.mxu0 0.0
    %1086 = vmatprep.subr.mxu0 0.0
    %1087 = vmatpush2.xpose.msra.mxu0 0.0
    %1088 = vmatprep.subr.mxu0 0.0
    %1089 = vmatpush2.xpose.msra.mxu0 0.0
    %1090 = vmatprep.subr.mxu0 0.0
    %1091 = vmatpush2.xpose.msra.mxu0 0.0
    %1092 = vmatprep.subr.mxu0 0.0
    %1093 = vmatpush2.xpose.msra.mxu0 0.0
    %1094 = vmatprep.subr.mxu0 0.0
    %1095 = vmatpush2.xpose.msra.mxu0 0.0
    %1096 = vmatprep.mubr.f32.mxu0 0.0
    %1097 = vmatmul.mubr.f32.gmra.mxu0 %v1028
    %v1098 = vpop.f32.mrf.mxu0
    %v1099 = vadd.f32 0.0, %v1098
    %v1100 = vpop.f32.mrf.mxu0
    %1101 = vdwg.mxu0
    %1102 = vrot.lane.b32.xlu0 %v947, 96
    %v1103 = vpop.permute.xlu0 %1102
    %v1104 = vsel %vm249, %v947, 0
    %v1106 = vsel %vm249, %v1103, 0
    %1108 = vmatprep.subr.mxu0 0.0
    %1109 = vmatpush1.xpose.msra.mxu0 0.0
    %1110 = vmatprep.subr.mxu0 0.0
    %1111 = vmatpush1.xpose.msra.mxu0 0.0
    %1112 = vmatprep.subr.mxu0 0.0
    %1113 = vmatpush1.xpose.msra.mxu0 0.0
    %1114 = vmatprep.subr.mxu0 0.0
    %1115 = vmatpush1.xpose.msra.mxu0 0.0
    %1116 = vmatprep.subr.mxu0 0.0
    %1117 = vmatpush1.xpose.msra.mxu0 0.0
    %1118 = vmatprep.subr.mxu0 0.0
    %1119 = vmatpush1.xpose.msra.mxu0 0.0
    %1120 = vmatprep.subr.mxu0 0.0
    %1121 = vmatpush1.xpose.msra.mxu0 0.0
    %1122 = vmatprep.subr.mxu0 0.0
    %1123 = vmatpush1.xpose.msra.mxu0 0.0
    %1124 = vmatprep.subr.mxu0 0.0
    %1125 = vmatpush1.xpose.msra.mxu0 0.0
    %1126 = vmatprep.subr.mxu0 0.0
    %1127 = vmatpush1.xpose.msra.mxu0 0.0
    %1128 = vmatprep.subr.mxu0 0.0
    %1129 = vmatpush1.xpose.msra.mxu0 0.0
    %1130 = vmatprep.subr.mxu0 0.0
    %1131 = vmatpush1.xpose.msra.mxu0 0.0
    %1132 = vmatprep.subr.mxu0 0.0
    %1133 = vmatpush1.xpose.msra.mxu0 0.0
    %1134 = vmatprep.subr.mxu0 0.0
    %1135 = vmatpush1.xpose.msra.mxu0 0.0
    %1136 = vmatprep.subr.mxu0 0.0
    %1137 = vmatpush1.xpose.msra.mxu0 0.0
    %1138 = vmatprep.subr.mxu0 0.0
    %1139 = vmatpush1.xpose.msra.mxu0 %v1106
    %1140 = vmatprep.subr.mxu0 0.0
    %1141 = vmatpush2.xpose.msra.mxu0 0.0
    %1142 = vmatprep.subr.mxu0 0.0
    %1143 = vmatpush2.xpose.msra.mxu0 0.0
    %1144 = vmatprep.subr.mxu0 0.0
    %1145 = vmatpush2.xpose.msra.mxu0 0.0
    %1146 = vmatprep.subr.mxu0 0.0
    %1147 = vmatpush2.xpose.msra.mxu0 0.0
    %1148 = vmatprep.subr.mxu0 0.0
    %1149 = vmatpush2.xpose.msra.mxu0 0.0
    %1150 = vmatprep.subr.mxu0 0.0
    %1151 = vmatpush2.xpose.msra.mxu0 0.0
    %1152 = vmatprep.subr.mxu0 0.0
    %1153 = vmatpush2.xpose.msra.mxu0 0.0
    %1154 = vmatprep.subr.mxu0 0.0
    %1155 = vmatpush2.xpose.msra.mxu0 0.0
    %1156 = vmatprep.subr.mxu0 0.0
    %1157 = vmatpush2.xpose.msra.mxu0 0.0
    %1158 = vmatprep.subr.mxu0 0.0
    %1159 = vmatpush2.xpose.msra.mxu0 0.0
    %1160 = vmatprep.subr.mxu0 0.0
    %1161 = vmatpush2.xpose.msra.mxu0 0.0
    %1162 = vmatprep.subr.mxu0 0.0
    %1163 = vmatpush2.xpose.msra.mxu0 0.0
    %1164 = vmatprep.subr.mxu0 0.0
    %1165 = vmatpush2.xpose.msra.mxu0 0.0
    %1166 = vmatprep.subr.mxu0 0.0
    %1167 = vmatpush2.xpose.msra.mxu0 0.0
    %1168 = vmatprep.subr.mxu0 0.0
    %1169 = vmatpush2.xpose.msra.mxu0 0.0
    %1170 = vmatprep.subr.mxu0 0.0
    %1171 = vmatpush2.xpose.msra.mxu0 0.0
    %1172 = vmatprep.mubr.f32.mxu0 0.0
    %1173 = vmatmul.mubr.f32.gmra.mxu0 %v1104
    %v1174 = vpop.f32.mrf.mxu0
    %v1175 = vadd.f32 0.0, %v1174
    %v1176 = vpop.f32.mrf.mxu0
    %1177 = vdwg.mxu0
    %1178 = vrot.lane.b32.xlu0 %v949, 96
    %v1179 = vpop.permute.xlu0 %1178
    %v1180 = vsel %vm249, %v949, 0
    %v1182 = vsel %vm249, %v1179, 0
    %1184 = vmatprep.subr.mxu0 0.0
    %1185 = vmatpush1.xpose.msra.mxu0 0.0
    %1186 = vmatprep.subr.mxu0 0.0
    %1187 = vmatpush1.xpose.msra.mxu0 0.0
    %1188 = vmatprep.subr.mxu0 0.0
    %1189 = vmatpush1.xpose.msra.mxu0 0.0
    %1190 = vmatprep.subr.mxu0 0.0
    %1191 = vmatpush1.xpose.msra.mxu0 0.0
    %1192 = vmatprep.subr.mxu0 0.0
    %1193 = vmatpush1.xpose.msra.mxu0 0.0
    %1194 = vmatprep.subr.mxu0 0.0
    %1195 = vmatpush1.xpose.msra.mxu0 0.0
    %1196 = vmatprep.subr.mxu0 0.0
    %1197 = vmatpush1.xpose.msra.mxu0 0.0
    %1198 = vmatprep.subr.mxu0 0.0
    %1199 = vmatpush1.xpose.msra.mxu0 0.0
    %1200 = vmatprep.subr.mxu0 0.0
    %1201 = vmatpush1.xpose.msra.mxu0 0.0
    %1202 = vmatprep.subr.mxu0 0.0
    %1203 = vmatpush1.xpose.msra.mxu0 0.0
    %1204 = vmatprep.subr.mxu0 0.0
    %1205 = vmatpush1.xpose.msra.mxu0 0.0
    %1206 = vmatprep.subr.mxu0 0.0
    %1207 = vmatpush1.xpose.msra.mxu0 0.0
    %1208 = vmatprep.subr.mxu0 0.0
    %1209 = vmatpush1.xpose.msra.mxu0 0.0
    %1210 = vmatprep.subr.mxu0 0.0
    %1211 = vmatpush1.xpose.msra.mxu0 0.0
    %1212 = vmatprep.subr.mxu0 0.0
    %1213 = vmatpush1.xpose.msra.mxu0 0.0
    %1214 = vmatprep.subr.mxu0 0.0
    %1215 = vmatpush1.xpose.msra.mxu0 %v1182
    %1216 = vmatprep.subr.mxu0 0.0
    %1217 = vmatpush2.xpose.msra.mxu0 0.0
    %1218 = vmatprep.subr.mxu0 0.0
    %1219 = vmatpush2.xpose.msra.mxu0 0.0
    %1220 = vmatprep.subr.mxu0 0.0
    %1221 = vmatpush2.xpose.msra.mxu0 0.0
    %1222 = vmatprep.subr.mxu0 0.0
    %1223 = vmatpush2.xpose.msra.mxu0 0.0
    %1224 = vmatprep.subr.mxu0 0.0
    %1225 = vmatpush2.xpose.msra.mxu0 0.0
    %1226 = vmatprep.subr.mxu0 0.0
    %1227 = vmatpush2.xpose.msra.mxu0 0.0
    %1228 = vmatprep.subr.mxu0 0.0
    %1229 = vmatpush2.xpose.msra.mxu0 0.0
    %1230 = vmatprep.subr.mxu0 0.0
    %1231 = vmatpush2.xpose.msra.mxu0 0.0
    %1232 = vmatprep.subr.mxu0 0.0
    %1233 = vmatpush2.xpose.msra.mxu0 0.0
    %1234 = vmatprep.subr.mxu0 0.0
    %1235 = vmatpush2.xpose.msra.mxu0 0.0
    %1236 = vmatprep.subr.mxu0 0.0
    %1237 = vmatpush2.xpose.msra.mxu0 0.0
    %1238 = vmatprep.subr.mxu0 0.0
    %1239 = vmatpush2.xpose.msra.mxu0 0.0
    %1240 = vmatprep.subr.mxu0 0.0
    %1241 = vmatpush2.xpose.msra.mxu0 0.0
    %1242 = vmatprep.subr.mxu0 0.0
    %1243 = vmatpush2.xpose.msra.mxu0 0.0
    %1244 = vmatprep.subr.mxu0 0.0
    %1245 = vmatpush2.xpose.msra.mxu0 0.0
    %1246 = vmatprep.subr.mxu0 0.0
    %1247 = vmatpush2.xpose.msra.mxu0 0.0
    %1248 = vmatprep.mubr.f32.mxu0 0.0
    %1249 = vmatmul.mubr.f32.gmra.mxu0 %v1180
    %v1250 = vpop.f32.mrf.mxu0
    %v1251 = vadd.f32 0.0, %v1250
    %v1252 = vpop.f32.mrf.mxu0
    %1253 = vdwg.mxu0
    %v1254 = vmul.f32 %v1023, 0.35355338
    %v1255 = vmul.f32 %v1099, 0.35355338
    %v1256 = vmul.f32 %v1175, 0.35355338
    %v1257 = vmul.f32 %v1251, 0.35355338
    %v1258 = vsel %vm101, 1, 0
    %v1259 = vlaneseq
    %v1260 = vshrl.u32 %v1259, 7
    %v1261 = vsub.s32 0, %v1260
    %v1262 = vrot.slane %v1258, %v1261
    %vm1263 = vcmp.eq.s32.totalorder %v1262, 1
    %v1264 = vsel %vm1263, -1e+09, %v1254
    %v1265 = vsel %vm1263, -1e+09, %v1255
    %v1266 = vsel %vm1263, -1e+09, %v1256
    %v1267 = vsel %vm1263, -1e+09, %v1257
    %v1268 = vsel %vm249, %v1264, -inf
    %1269 = vmax.xlane.f32.xlu0 %v1268
    %v1270 = vpop.xlane.xlu0 %1269
    %v1271 = vsel %vm249, %v1265, -inf
    %1272 = vmax.xlane.f32.xlu0 %v1271
    %v1273 = vpop.xlane.xlu0 %1272
    %v1274 = vsel %vm249, %v1266, -inf
    %1275 = vmax.xlane.f32.xlu0 %v1274
    %v1276 = vpop.xlane.xlu0 %1275
    %v1277 = vsel %vm249, %v1267, -inf
    %1278 = vmax.xlane.f32.xlu0 %v1277
    %v1279 = vpop.xlane.xlu0 %1278
    %v1280 = vsub.f32 %v1264, %v1270
    %v1281 = vsub.f32 %v1265, %v1273
    %v1282 = vsub.f32 %v1266, %v1276
    %v1283 = vsub.f32 %v1267, %v1279
    %v1284 = vmul.f32 %v1280, 1.442695
    %v1285 = vpow.pop %v1284
    %v1286 = vmul.f32 %v1281, 1.442695
    %v1287 = vpow.pop %v1286
    %v1288 = vmul.f32 %v1282, 1.442695
    %v1289 = vpow.pop %v1288
    %v1290 = vmul.f32 %v1283, 1.442695
    %v1291 = vpow.pop %v1290
    %v1292 = vsel %vm249, %v1285, 0.0
    %1293 = vadd.xlane.f32.xlu0 %v1292
    %v1294 = vpop.xlane.xlu0 %1293
    %v1295 = vsel %vm249, %v1287, 0.0
    %1296 = vadd.xlane.f32.xlu0 %v1295
    %v1297 = vpop.xlane.xlu0 %1296
    %v1298 = vsel %vm249, %v1289, 0.0
    %1299 = vadd.xlane.f32.xlu0 %v1298
    %v1300 = vpop.xlane.xlu0 %1299
    %v1301 = vsel %vm249, %v1291, 0.0
    %1302 = vadd.xlane.f32.xlu0 %v1301
    %v1303 = vpop.xlane.xlu0 %1302
    %v1304 = vrcp.pop %v1294
    %v1305 = vrcp.pop %v1297
    %v1306 = vrcp.pop %v1300
    %v1307 = vrcp.pop %v1303
    %v1308 = vmul.f32 %v1294, %v1304
    %v1309 = vmul.f32 %v1297, %v1305
    %v1310 = vmul.f32 %v1300, %v1306
    %v1311 = vmul.f32 %v1303, %v1307
    %v1312 = vsub.f32 2.0, %v1308
    %v1313 = vsub.f32 2.0, %v1309
    %v1314 = vsub.f32 2.0, %v1310
    %v1315 = vsub.f32 2.0, %v1311
    %v1316 = vmul.f32 %v1304, %v1312
    %v1317 = vmul.f32 %v1305, %v1313
    %v1318 = vmul.f32 %v1306, %v1314
    %v1319 = vmul.f32 %v1307, %v1315
    %v1320 = vmul.f32 %v1285, %v1316
    %v1321 = vmul.f32 %v1287, %v1317
    %v1322 = vmul.f32 %v1289, %v1318
    %v1323 = vmul.f32 %v1291, %v1319
    %1324 = vrot.lane.b32.xlu0 %v237, 64
    %v1325 = vpop.permute.xlu0 %1324
    %v1328 = vsel %vm249, %v1320, 0
    %1330 = vmatprep.subr.mxu0 0.0
    %1331 = vmatpush1.msra.mxu0 0.0
    %1332 = vmatprep.subr.mxu0 0.0
    %1333 = vmatpush1.msra.mxu0 0.0
    %1334 = vmatprep.subr.mxu0 0.0
    %1335 = vmatpush1.msra.mxu0 0.0
    %1336 = vmatprep.subr.mxu0 0.0
    %1337 = vmatpush1.msra.mxu0 0.0
    %1338 = vmatprep.subr.mxu0 0.0
    %1339 = vmatpush1.msra.mxu0 0.0
    %1340 = vmatprep.subr.mxu0 0.0
    %1341 = vmatpush1.msra.mxu0 0.0
    %1342 = vmatprep.subr.mxu0 0.0
    %1343 = vmatpush1.msra.mxu0 0.0
    %1344 = vmatprep.subr.mxu0 0.0
    %1345 = vmatpush1.msra.mxu0 0.0
    %1346 = vmatprep.subr.mxu0 0.0
    %1347 = vmatpush1.msra.mxu0 0.0
    %1348 = vmatprep.subr.mxu0 0.0
    %1349 = vmatpush1.msra.mxu0 0.0
    %1350 = vmatprep.subr.mxu0 0.0
    %1351 = vmatpush1.msra.mxu0 0.0
    %1352 = vmatprep.subr.mxu0 0.0
    %1353 = vmatpush1.msra.mxu0 0.0
    %1354 = vmatprep.subr.mxu0 0.0
    %1355 = vmatpush1.msra.mxu0 0.0
    %1356 = vmatprep.subr.mxu0 0.0
    %1357 = vmatpush1.msra.mxu0 0.0
    %1358 = vmatprep.subr.mxu0 0.0
    %1359 = vmatpush1.msra.mxu0 0.0
    %1360 = vmatprep.subr.mxu0 0.0
    %1361 = vmatpush1.msra.mxu0 %v1325
    %1362 = vmatprep.subr.mxu0 0.0
    %1363 = vmatpush2.msra.mxu0 0.0
    %1364 = vmatprep.subr.mxu0 0.0
    %1365 = vmatpush2.msra.mxu0 0.0
    %1366 = vmatprep.subr.mxu0 0.0
    %1367 = vmatpush2.msra.mxu0 0.0
    %1368 = vmatprep.subr.mxu0 0.0
    %1369 = vmatpush2.msra.mxu0 0.0
    %1370 = vmatprep.subr.mxu0 0.0
    %1371 = vmatpush2.msra.mxu0 0.0
    %1372 = vmatprep.subr.mxu0 0.0
    %1373 = vmatpush2.msra.mxu0 0.0
    %1374 = vmatprep.subr.mxu0 0.0
    %1375 = vmatpush2.msra.mxu0 0.0
    %1376 = vmatprep.subr.mxu0 0.0
    %1377 = vmatpush2.msra.mxu0 0.0
    %1378 = vmatprep.subr.mxu0 0.0
    %1379 = vmatpush2.msra.mxu0 0.0
    %1380 = vmatprep.subr.mxu0 0.0
    %1381 = vmatpush2.msra.mxu0 0.0
    %1382 = vmatprep.subr.mxu0 0.0
    %1383 = vmatpush2.msra.mxu0 0.0
    %1384 = vmatprep.subr.mxu0 0.0
    %1385 = vmatpush2.msra.mxu0 0.0
    %1386 = vmatprep.subr.mxu0 0.0
    %1387 = vmatpush2.msra.mxu0 0.0
    %1388 = vmatprep.subr.mxu0 0.0
    %1389 = vmatpush2.msra.mxu0 0.0
    %1390 = vmatprep.subr.mxu0 0.0
    %1391 = vmatpush2.msra.mxu0 0.0
    %1392 = vmatprep.subr.mxu0 0.0
    %1393 = vmatpush2.msra.mxu0 0.0
    %1394 = vmatprep.mubr.f32.mxu0 0.0
    %1395 = vmatmul.mubr.f32.gmra.mxu0 %v1328
    %v1396 = vpop.f32.mrf.mxu0
    %v1397 = vadd.f32 0.0, %v1396
    %v1398 = vpop.f32.mrf.mxu0
    %1399 = vdwg.mxu0
    %1400 = vrot.lane.b32.xlu0 %v945, 64
    %v1401 = vpop.permute.xlu0 %1400
    %v1404 = vsel %vm249, %v1321, 0
    %1406 = vmatprep.subr.mxu0 0.0
    %1407 = vmatpush1.msra.mxu0 0.0
    %1408 = vmatprep.subr.mxu0 0.0
    %1409 = vmatpush1.msra.mxu0 0.0
    %1410 = vmatprep.subr.mxu0 0.0
    %1411 = vmatpush1.msra.mxu0 0.0
    %1412 = vmatprep.subr.mxu0 0.0
    %1413 = vmatpush1.msra.mxu0 0.0
    %1414 = vmatprep.subr.mxu0 0.0
    %1415 = vmatpush1.msra.mxu0 0.0
    %1416 = vmatprep.subr.mxu0 0.0
    %1417 = vmatpush1.msra.mxu0 0.0
    %1418 = vmatprep.subr.mxu0 0.0
    %1419 = vmatpush1.msra.mxu0 0.0
    %1420 = vmatprep.subr.mxu0 0.0
    %1421 = vmatpush1.msra.mxu0 0.0
    %1422 = vmatprep.subr.mxu0 0.0
    %1423 = vmatpush1.msra.mxu0 0.0
    %1424 = vmatprep.subr.mxu0 0.0
    %1425 = vmatpush1.msra.mxu0 0.0
    %1426 = vmatprep.subr.mxu0 0.0
    %1427 = vmatpush1.msra.mxu0 0.0
    %1428 = vmatprep.subr.mxu0 0.0
    %1429 = vmatpush1.msra.mxu0 0.0
    %1430 = vmatprep.subr.mxu0 0.0
    %1431 = vmatpush1.msra.mxu0 0.0
    %1432 = vmatprep.subr.mxu0 0.0
    %1433 = vmatpush1.msra.mxu0 0.0
    %1434 = vmatprep.subr.mxu0 0.0
    %1435 = vmatpush1.msra.mxu0 0.0
    %1436 = vmatprep.subr.mxu0 0.0
    %1437 = vmatpush1.msra.mxu0 %v1401
    %1438 = vmatprep.subr.mxu0 0.0
    %1439 = vmatpush2.msra.mxu0 0.0
    %1440 = vmatprep.subr.mxu0 0.0
    %1441 = vmatpush2.msra.mxu0 0.0
    %1442 = vmatprep.subr.mxu0 0.0
    %1443 = vmatpush2.msra.mxu0 0.0
    %1444 = vmatprep.subr.mxu0 0.0
    %1445 = vmatpush2.msra.mxu0 0.0
    %1446 = vmatprep.subr.mxu0 0.0
    %1447 = vmatpush2.msra.mxu0 0.0
    %1448 = vmatprep.subr.mxu0 0.0
    %1449 = vmatpush2.msra.mxu0 0.0
    %1450 = vmatprep.subr.mxu0 0.0
    %1451 = vmatpush2.msra.mxu0 0.0
    %1452 = vmatprep.subr.mxu0 0.0
    %1453 = vmatpush2.msra.mxu0 0.0
    %1454 = vmatprep.subr.mxu0 0.0
    %1455 = vmatpush2.msra.mxu0 0.0
    %1456 = vmatprep.subr.mxu0 0.0
    %1457 = vmatpush2.msra.mxu0 0.0
    %1458 = vmatprep.subr.mxu0 0.0
    %1459 = vmatpush2.msra.mxu0 0.0
    %1460 = vmatprep.subr.mxu0 0.0
    %1461 = vmatpush2.msra.mxu0 0.0
    %1462 = vmatprep.subr.mxu0 0.0
    %1463 = vmatpush2.msra.mxu0 0.0
    %1464 = vmatprep.subr.mxu0 0.0
    %1465 = vmatpush2.msra.mxu0 0.0
    %1466 = vmatprep.subr.mxu0 0.0
    %1467 = vmatpush2.msra.mxu0 0.0
    %1468 = vmatprep.subr.mxu0 0.0
    %1469 = vmatpush2.msra.mxu0 0.0
    %1470 = vmatprep.mubr.f32.mxu0 0.0
    %1471 = vmatmul.mubr.f32.gmra.mxu0 %v1404
    %v1472 = vpop.f32.mrf.mxu0
    %v1473 = vadd.f32 0.0, %v1472
    %v1474 = vpop.f32.mrf.mxu0
    %1475 = vdwg.mxu0
    %1476 = vrot.lane.b32.xlu0 %v947, 64
    %v1477 = vpop.permute.xlu0 %1476
    %v1480 = vsel %vm249, %v1322, 0
    %1482 = vmatprep.subr.mxu0 0.0
    %1483 = vmatpush1.msra.mxu0 0.0
    %1484 = vmatprep.subr.mxu0 0.0
    %1485 = vmatpush1.msra.mxu0 0.0
    %1486 = vmatprep.subr.mxu0 0.0
    %1487 = vmatpush1.msra.mxu0 0.0
    %1488 = vmatprep.subr.mxu0 0.0
    %1489 = vmatpush1.msra.mxu0 0.0
    %1490 = vmatprep.subr.mxu0 0.0
    %1491 = vmatpush1.msra.mxu0 0.0
    %1492 = vmatprep.subr.mxu0 0.0
    %1493 = vmatpush1.msra.mxu0 0.0
    %1494 = vmatprep.subr.mxu0 0.0
    %1495 = vmatpush1.msra.mxu0 0.0
    %1496 = vmatprep.subr.mxu0 0.0
    %1497 = vmatpush1.msra.mxu0 0.0
    %1498 = vmatprep.subr.mxu0 0.0
    %1499 = vmatpush1.msra.mxu0 0.0
    %1500 = vmatprep.subr.mxu0 0.0
    %1501 = vmatpush1.msra.mxu0 0.0
    %1502 = vmatprep.subr.mxu0 0.0
    %1503 = vmatpush1.msra.mxu0 0.0
    %1504 = vmatprep.subr.mxu0 0.0
    %1505 = vmatpush1.msra.mxu0 0.0
    %1506 = vmatprep.subr.mxu0 0.0
    %1507 = vmatpush1.msra.mxu0 0.0
    %1508 = vmatprep.subr.mxu0 0.0
    %1509 = vmatpush1.msra.mxu0 0.0
    %1510 = vmatprep.subr.mxu0 0.0
    %1511 = vmatpush1.msra.mxu0 0.0
    %1512 = vmatprep.subr.mxu0 0.0
    %1513 = vmatpush1.msra.mxu0 %v1477
    %1514 = vmatprep.subr.mxu0 0.0
    %1515 = vmatpush2.msra.mxu0 0.0
    %1516 = vmatprep.subr.mxu0 0.0
    %1517 = vmatpush2.msra.mxu0 0.0
    %1518 = vmatprep.subr.mxu0 0.0
    %1519 = vmatpush2.msra.mxu0 0.0
    %1520 = vmatprep.subr.mxu0 0.0
    %1521 = vmatpush2.msra.mxu0 0.0
    %1522 = vmatprep.subr.mxu0 0.0
    %1523 = vmatpush2.msra.mxu0 0.0
    %1524 = vmatprep.subr.mxu0 0.0
    %1525 = vmatpush2.msra.mxu0 0.0
    %1526 = vmatprep.subr.mxu0 0.0
    %1527 = vmatpush2.msra.mxu0 0.0
    %1528 = vmatprep.subr.mxu0 0.0
    %1529 = vmatpush2.msra.mxu0 0.0
    %1530 = vmatprep.subr.mxu0 0.0
    %1531 = vmatpush2.msra.mxu0 0.0
    %1532 = vmatprep.subr.mxu0 0.0
    %1533 = vmatpush2.msra.mxu0 0.0
    %1534 = vmatprep.subr.mxu0 0.0
    %1535 = vmatpush2.msra.mxu0 0.0
    %1536 = vmatprep.subr.mxu0 0.0
    %1537 = vmatpush2.msra.mxu0 0.0
    %1538 = vmatprep.subr.mxu0 0.0
    %1539 = vmatpush2.msra.mxu0 0.0
    %1540 = vmatprep.subr.mxu0 0.0
    %1541 = vmatpush2.msra.mxu0 0.0
    %1542 = vmatprep.subr.mxu0 0.0
    %1543 = vmatpush2.msra.mxu0 0.0
    %1544 = vmatprep.subr.mxu0 0.0
    %1545 = vmatpush2.msra.mxu0 0.0
    %1546 = vmatprep.mubr.f32.mxu0 0.0
    %1547 = vmatmul.mubr.f32.gmra.mxu0 %v1480
    %v1548 = vpop.f32.mrf.mxu0
    %v1549 = vadd.f32 0.0, %v1548
    %v1550 = vpop.f32.mrf.mxu0
    %1551 = vdwg.mxu0
    %1552 = vrot.lane.b32.xlu0 %v949, 64
    %v1553 = vpop.permute.xlu0 %1552
    %v1556 = vsel %vm249, %v1323, 0
    %1558 = vmatprep.subr.mxu0 0.0
    %1559 = vmatpush1.msra.mxu0 0.0
    %1560 = vmatprep.subr.mxu0 0.0
    %1561 = vmatpush1.msra.mxu0 0.0
    %1562 = vmatprep.subr.mxu0 0.0
    %1563 = vmatpush1.msra.mxu0 0.0
    %1564 = vmatprep.subr.mxu0 0.0
    %1565 = vmatpush1.msra.mxu0 0.0
    %1566 = vmatprep.subr.mxu0 0.0
    %1567 = vmatpush1.msra.mxu0 0.0
    %1568 = vmatprep.subr.mxu0 0.0
    %1569 = vmatpush1.msra.mxu0 0.0
    %1570 = vmatprep.subr.mxu0 0.0
    %1571 = vmatpush1.msra.mxu0 0.0
    %1572 = vmatprep.subr.mxu0 0.0
    %1573 = vmatpush1.msra.mxu0 0.0
    %1574 = vmatprep.subr.mxu0 0.0
    %1575 = vmatpush1.msra.mxu0 0.0
    %1576 = vmatprep.subr.mxu0 0.0
    %1577 = vmatpush1.msra.mxu0 0.0
    %1578 = vmatprep.subr.mxu0 0.0
    %1579 = vmatpush1.msra.mxu0 0.0
    %1580 = vmatprep.subr.mxu0 0.0
    %1581 = vmatpush1.msra.mxu0 0.0
    %1582 = vmatprep.subr.mxu0 0.0
    %1583 = vmatpush1.msra.mxu0 0.0
    %1584 = vmatprep.subr.mxu0 0.0
    %1585 = vmatpush1.msra.mxu0 0.0
    %1586 = vmatprep.subr.mxu0 0.0
    %1587 = vmatpush1.msra.mxu0 0.0
    %1588 = vmatprep.subr.mxu0 0.0
    %1589 = vmatpush1.msra.mxu0 %v1553
    %1590 = vmatprep.subr.mxu0 0.0
    %1591 = vmatpush2.msra.mxu0 0.0
    %1592 = vmatprep.subr.mxu0 0.0
    %1593 = vmatpush2.msra.mxu0 0.0
    %1594 = vmatprep.subr.mxu0 0.0
    %1595 = vmatpush2.msra.mxu0 0.0
    %1596 = vmatprep.subr.mxu0 0.0
    %1597 = vmatpush2.msra.mxu0 0.0
    %1598 = vmatprep.subr.mxu0 0.0
    %1599 = vmatpush2.msra.mxu0 0.0
    %1600 = vmatprep.subr.mxu0 0.0
    %1601 = vmatpush2.msra.mxu0 0.0
    %1602 = vmatprep.subr.mxu0 0.0
    %1603 = vmatpush2.msra.mxu0 0.0
    %1604 = vmatprep.subr.mxu0 0.0
    %1605 = vmatpush2.msra.mxu0 0.0
    %1606 = vmatprep.subr.mxu0 0.0
    %1607 = vmatpush2.msra.mxu0 0.0
    %1608 = vmatprep.subr.mxu0 0.0
    %1609 = vmatpush2.msra.mxu0 0.0
    %1610 = vmatprep.subr.mxu0 0.0
    %1611 = vmatpush2.msra.mxu0 0.0
    %1612 = vmatprep.subr.mxu0 0.0
    %1613 = vmatpush2.msra.mxu0 0.0
    %1614 = vmatprep.subr.mxu0 0.0
    %1615 = vmatpush2.msra.mxu0 0.0
    %1616 = vmatprep.subr.mxu0 0.0
    %1617 = vmatpush2.msra.mxu0 0.0
    %1618 = vmatprep.subr.mxu0 0.0
    %1619 = vmatpush2.msra.mxu0 0.0
    %1620 = vmatprep.subr.mxu0 0.0
    %1621 = vmatpush2.msra.mxu0 0.0
    %1622 = vmatprep.mubr.f32.mxu0 0.0
    %1623 = vmatmul.mubr.f32.gmra.mxu0 %v1556
    %v1624 = vpop.f32.mrf.mxu0
    %v1625 = vadd.f32 0.0, %v1624
    %v1626 = vpop.f32.mrf.mxu0
    %1627 = vdwg.mxu0
    %1629 = vrot.lane.b32.xlu0 %v1473, 8
    %v1630 = vpop.permute.xlu0 %1629
    %1633 = vrot.lane.b32.xlu0 %v1549, 16
    %v1634 = vpop.permute.xlu0 %1633
    %1637 = vrot.lane.b32.xlu0 %v1625, 24
    %v1638 = vpop.permute.xlu0 %1637
    %v1640 = vsel %vm249, %v1397, %v1630
    %v1641 = vsel %vm939, %v1640, %v1634
    %v1642 = vsel %vm941, %v1641, %v1638
    %v1643 = vld [vmem:[%s6] sm:$0xff]
    %v1644 = vld [vmem:[%s6 + $0x8] sm:$0xff]
    %v1645 = vld [vmem:[%s6 + $0x10] sm:$0xff]
    %v1646 = vld [vmem:[%s6 + $0x18] sm:$0xff]
    %v1648 = vsel %vm104, %v942, 0
    %v1651 = vsel %vm104, %v1642, 0
    %1653 = vmatprep.subr.mxu0 0.0
    %1654 = vmatpush1.msra.mxu0 0.0
    %1655 = vmatprep.subr.mxu0 0.0
    %1656 = vmatpush1.msra.mxu0 0.0
    %1657 = vmatprep.subr.mxu0 0.0
    %1658 = vmatpush1.msra.mxu0 0.0
    %1659 = vmatprep.subr.mxu0 0.0
    %1660 = vmatpush1.msra.mxu0 0.0
    %1661 = vmatprep.subr.mxu0 0.0
    %1662 = vmatpush1.msra.mxu0 0.0
    %1663 = vmatprep.subr.mxu0 0.0
    %1664 = vmatpush1.msra.mxu0 0.0
    %1665 = vmatprep.subr.mxu0 0.0
    %1666 = vmatpush1.msra.mxu0 0.0
    %1667 = vmatprep.subr.mxu0 0.0
    %1668 = vmatpush1.msra.mxu0 0.0
    %1669 = vmatprep.subr.mxu0 0.0
    %1670 = vmatpush1.msra.mxu0 0.0
    %1671 = vmatprep.subr.mxu0 0.0
    %1672 = vmatpush1.msra.mxu0 0.0
    %1673 = vmatprep.subr.mxu0 0.0
    %1674 = vmatpush1.msra.mxu0 0.0
    %1675 = vmatprep.subr.mxu0 0.0
    %1676 = vmatpush1.msra.mxu0 0.0
    %1677 = vmatprep.subr.mxu0 0.0
    %1678 = vmatpush1.msra.mxu0 %v1646
    %1679 = vmatprep.subr.mxu0 0.0
    %1680 = vmatpush1.msra.mxu0 %v1645
    %1681 = vmatprep.subr.mxu0 0.0
    %1682 = vmatpush1.msra.mxu0 %v1644
    %1683 = vmatprep.subr.mxu0 0.0
    %1684 = vmatpush1.msra.mxu0 %v1643
    %1685 = vmatprep.subr.mxu0 0.0
    %1686 = vmatpush2.msra.mxu0 0.0
    %1687 = vmatprep.subr.mxu0 0.0
    %1688 = vmatpush2.msra.mxu0 0.0
    %1689 = vmatprep.subr.mxu0 0.0
    %1690 = vmatpush2.msra.mxu0 0.0
    %1691 = vmatprep.subr.mxu0 0.0
    %1692 = vmatpush2.msra.mxu0 0.0
    %1693 = vmatprep.subr.mxu0 0.0
    %1694 = vmatpush2.msra.mxu0 0.0
    %1695 = vmatprep.subr.mxu0 0.0
    %1696 = vmatpush2.msra.mxu0 0.0
    %1697 = vmatprep.subr.mxu0 0.0
    %1698 = vmatpush2.msra.mxu0 0.0
    %1699 = vmatprep.subr.mxu0 0.0
    %1700 = vmatpush2.msra.mxu0 0.0
    %1701 = vmatprep.subr.mxu0 0.0
    %1702 = vmatpush2.msra.mxu0 0.0
    %1703 = vmatprep.subr.mxu0 0.0
    %1704 = vmatpush2.msra.mxu0 0.0
    %1705 = vmatprep.subr.mxu0 0.0
    %1706 = vmatpush2.msra.mxu0 0.0
    %1707 = vmatprep.subr.mxu0 0.0
    %1708 = vmatpush2.msra.mxu0 0.0
    %1709 = vmatprep.subr.mxu0 0.0
    %1710 = vmatpush2.msra.mxu0 0.0
    %1711 = vmatprep.subr.mxu0 0.0
    %1712 = vmatpush2.msra.mxu0 0.0
    %1713 = vmatprep.subr.mxu0 0.0
    %1714 = vmatpush2.msra.mxu0 0.0
    %1715 = vmatprep.subr.mxu0 0.0
    %1716 = vmatpush2.msra.mxu0 0.0
    %1717 = vmatprep.mubr.f32.mxu0 0.0
    %1718 = vmatmul.mubr.f32.gmra.mxu0 %v1648
    %v1719 = vpop.f32.mrf.mxu0
    %v1720 = vadd.f32 0.0, %v1719
    %v1721 = vpop.f32.mrf.mxu0
    %1722 = vmatprep.mubr.f32.mxu0 0.0
    %1723 = vmatmul.mubr.f32.gmra.mxu0 %v1651
    %v1724 = vpop.f32.mrf.mxu0
    %v1725 = vadd.f32 0.0, %v1724
    %v1726 = vpop.f32.mrf.mxu0
    %1727 = vdwg.mxu0
    %v1728 = vadd.f32 %v95, %v1720
    %v1729 = vadd.f32 %v96, %v1725
    %v1730 = vld [vmem:[%s7] sm:$0x1]
    %v1732 = vlaneseq
    %v1733 = vshrl.u32 %v1732, 7
    %v1734 = vsub.s32 0, %v1733
    %v1735 = vrot.slane %v1730, %v1734
    %v1737 = vadd.f32 %v1728, %v1735
    %v1738 = vadd.f32 %v1729, %v1735
    %v1739 = vld [vmem:[%s8] sm:$0x1]
    %v1740 = vld [vmem:[%s9] sm:$0x1]
    %v1741 = vsel %vm104, %v1737, 0.0
    %1742 = vadd.xlane.f32.xlu0 %v1741
    %v1743 = vpop.xlane.xlu0 %1742
    %v1744 = vsel %vm104, %v1738, 0.0
    %1745 = vadd.xlane.f32.xlu0 %v1744
    %v1746 = vpop.xlane.xlu0 %1745
    %v1747 = vmul.f32 %v1743, %v111
    %v1748 = vmul.f32 %v1746, %v111
    %v1749 = vsub.f32 %v1737, %v1747
    %v1750 = vsub.f32 %v1738, %v1748
    %v1751 = vmul.f32 %v1749, %v1749
    %v1752 = vmul.f32 %v1750, %v1750
    %v1753 = vsel %vm104, %v1751, 0.0
    %1754 = vadd.xlane.f32.xlu0 %v1753
    %v1755 = vpop.xlane.xlu0 %1754
    %v1756 = vsel %vm104, %v1752, 0.0
    %1757 = vadd.xlane.f32.xlu0 %v1756
    %v1758 = vpop.xlane.xlu0 %1757
    %v1759 = vmul.f32 %v1755, %v111
    %v1760 = vmul.f32 %v1758, %v111
    %v1761 = vadd.f32 %v1759, 1e-06
    %v1762 = vadd.f32 %v1760, 1e-06
    %v1763 = vrsqrt.pop %v1761
    %v1764 = vrsqrt.pop %v1762
    %v1765 = vmul.f32 %v1749, %v1763
    %v1766 = vmul.f32 %v1750, %v1764
    %v1768 = vlaneseq
    %v1769 = vshrl.u32 %v1768, 7
    %v1770 = vsub.s32 0, %v1769
    %v1771 = vrot.slane %v1739, %v1770
    %v1773 = vmul.f32 %v1765, %v1771
    %v1774 = vmul.f32 %v1766, %v1771
    %v1776 = vlaneseq
    %v1777 = vshrl.u32 %v1776, 7
    %v1778 = vsub.s32 0, %v1777
    %v1779 = vrot.slane %v1740, %v1778
    %v1781 = vadd.f32 %v1773, %v1779
    %v1782 = vadd.f32 %v1774, %v1779
    %v1783 = vld [vmem:[%s10] sm:$0xff]
    %v1784 = vld [vmem:[%s10 + $0x8] sm:$0xff]
    %v1785 = vld [vmem:[%s10 + $0x10] sm:$0xff]
    %v1786 = vld [vmem:[%s10 + $0x18] sm:$0xff]
    %v1787 = vld [vmem:[%s11] sm:$0x1]
    %v1789 = vlaneseq
    %v1790 = vshrl.u32 %v1789, 7
    %v1791 = vsub.s32 0, %v1790
    %v1792 = vrot.slane %v1787, %v1791
    %v1795 = vsel %vm104, %v1781, 0
    %v1798 = vsel %vm104, %v1782, 0
    %1800 = vmatprep.subr.mxu0 0.0
    %1801 = vmatpush1.msra.mxu0 0.0
    %1802 = vmatprep.subr.mxu0 0.0
    %1803 = vmatpush1.msra.mxu0 0.0
    %1804 = vmatprep.subr.mxu0 0.0
    %1805 = vmatpush1.msra.mxu0 0.0
    %1806 = vmatprep.subr.mxu0 0.0
    %1807 = vmatpush1.msra.mxu0 0.0
    %1808 = vmatprep.subr.mxu0 0.0
    %1809 = vmatpush1.msra.mxu0 0.0
    %1810 = vmatprep.subr.mxu0 0.0
    %1811 = vmatpush1.msra.mxu0 0.0
    %1812 = vmatprep.subr.mxu0 0.0
    %1813 = vmatpush1.msra.mxu0 0.0
    %1814 = vmatprep.subr.mxu0 0.0
    %1815 = vmatpush1.msra.mxu0 0.0
    %1816 = vmatprep.subr.mxu0 0.0
    %1817 = vmatpush1.msra.mxu0 0.0
    %1818 = vmatprep.subr.mxu0 0.0
    %1819 = vmatpush1.msra.mxu0 0.0
    %1820 = vmatprep.subr.mxu0 0.0
    %1821 = vmatpush1.msra.mxu0 0.0
    %1822 = vmatprep.subr.mxu0 0.0
    %1823 = vmatpush1.msra.mxu0 0.0
    %1824 = vmatprep.subr.mxu0 0.0
    %1825 = vmatpush1.msra.mxu0 %v1786
    %1826 = vmatprep.subr.mxu0 0.0
    %1827 = vmatpush1.msra.mxu0 %v1785
    %1828 = vmatprep.subr.mxu0 0.0
    %1829 = vmatpush1.msra.mxu0 %v1784
    %1830 = vmatprep.subr.mxu0 0.0
    %1831 = vmatpush1.msra.mxu0 %v1783
    %1832 = vmatprep.subr.mxu0 0.0
    %1833 = vmatpush2.msra.mxu0 0.0
    %1834 = vmatprep.subr.mxu0 0.0
    %1835 = vmatpush2.msra.mxu0 0.0
    %1836 = vmatprep.subr.mxu0 0.0
    %1837 = vmatpush2.msra.mxu0 0.0
    %1838 = vmatprep.subr.mxu0 0.0
    %1839 = vmatpush2.msra.mxu0 0.0
    %1840 = vmatprep.subr.mxu0 0.0
    %1841 = vmatpush2.msra.mxu0 0.0
    %1842 = vmatprep.subr.mxu0 0.0
    %1843 = vmatpush2.msra.mxu0 0.0
    %1844 = vmatprep.subr.mxu0 0.0
    %1845 = vmatpush2.msra.mxu0 0.0
    %1846 = vmatprep.subr.mxu0 0.0
    %1847 = vmatpush2.msra.mxu0 0.0
    %1848 = vmatprep.subr.mxu0 0.0
    %1849 = vmatpush2.msra.mxu0 0.0
    %1850 = vmatprep.subr.mxu0 0.0
    %1851 = vmatpush2.msra.mxu0 0.0
    %1852 = vmatprep.subr.mxu0 0.0
    %1853 = vmatpush2.msra.mxu0 0.0
    %1854 = vmatprep.subr.mxu0 0.0
    %1855 = vmatpush2.msra.mxu0 0.0
    %1856 = vmatprep.subr.mxu0 0.0
    %1857 = vmatpush2.msra.mxu0 0.0
    %1858 = vmatprep.subr.mxu0 0.0
    %1859 = vmatpush2.msra.mxu0 0.0
    %1860 = vmatprep.subr.mxu0 0.0
    %1861 = vmatpush2.msra.mxu0 0.0
    %1862 = vmatprep.subr.mxu0 0.0
    %1863 = vmatpush2.msra.mxu0 0.0
    %1864 = vmatprep.mubr.f32.mxu0 0.0
    %1865 = vmatmul.mubr.f32.gmra.mxu0 %v1795
    %v1866 = vpop.f32.mrf.mxu0
    %v1867 = vadd.f32 %v1792, %v1866
    %v1868 = vpop.f32.mrf.mxu0
    %1869 = vmatprep.mubr.f32.mxu0 0.0
    %1870 = vmatmul.mubr.f32.gmra.mxu0 %v1798
    %v1871 = vpop.f32.mrf.mxu0
    %v1872 = vadd.f32 %v1792, %v1871
    %v1873 = vpop.f32.mrf.mxu0
    %1874 = vdwg.mxu0
    %v1875 = vmax.f32 %v1867, 0.0
    %v1876 = vmax.f32 %v1872, 0.0
    %v1877 = vld [vmem:[%s12] sm:$0xff]
    %v1878 = vld [vmem:[%s12 + $0x8] sm:$0xff]
    %v1879 = vld [vmem:[%s12 + $0x10] sm:$0xff]
    %v1880 = vld [vmem:[%s12 + $0x18] sm:$0xff]
    %v1881 = vld [vmem:[%s12 + $0x20] sm:$0xff]
    %v1882 = vld [vmem:[%s12 + $0x28] sm:$0xff]
    %v1883 = vld [vmem:[%s12 + $0x30] sm:$0xff]
    %v1884 = vld [vmem:[%s12 + $0x38] sm:$0xff]
    %vm1885 = vcmask 523264
    %v1887 = vsel %vm1885, %v1875, 0
    %v1890 = vsel %vm1885, %v1876, 0
    %1892 = vmatprep.subr.mxu0 0.0
    %1893 = vmatpush1.msra.mxu0 0.0
    %1894 = vmatprep.subr.mxu0 0.0
    %1895 = vmatpush1.msra.mxu0 0.0
    %1896 = vmatprep.subr.mxu0 0.0
    %1897 = vmatpush1.msra.mxu0 0.0
    %1898 = vmatprep.subr.mxu0 0.0
    %1899 = vmatpush1.msra.mxu0 0.0
    %1900 = vmatprep.subr.mxu0 0.0
    %1901 = vmatpush1.msra.mxu0 0.0
    %1902 = vmatprep.subr.mxu0 0.0
    %1903 = vmatpush1.msra.mxu0 0.0
    %1904 = vmatprep.subr.mxu0 0.0
    %1905 = vmatpush1.msra.mxu0 0.0
    %1906 = vmatprep.subr.mxu0 0.0
    %1907 = vmatpush1.msra.mxu0 0.0
    %1908 = vmatprep.subr.mxu0 0.0
    %1909 = vmatpush1.msra.mxu0 %v1884
    %1910 = vmatprep.subr.mxu0 0.0
    %1911 = vmatpush1.msra.mxu0 %v1883
    %1912 = vmatprep.subr.mxu0 0.0
    %1913 = vmatpush1.msra.mxu0 %v1882
    %1914 = vmatprep.subr.mxu0 0.0
    %1915 = vmatpush1.msra.mxu0 %v1881
    %1916 = vmatprep.subr.mxu0 0.0
    %1917 = vmatpush1.msra.mxu0 %v1880
    %1918 = vmatprep.subr.mxu0 0.0
    %1919 = vmatpush1.msra.mxu0 %v1879
    %1920 = vmatprep.subr.mxu0 0.0
    %1921 = vmatpush1.msra.mxu0 %v1878
    %1922 = vmatprep.subr.mxu0 0.0
    %1923 = vmatpush1.msra.mxu0 %v1877
    %1924 = vmatprep.subr.mxu0 0.0
    %1925 = vmatpush2.msra.mxu0 0.0
    %1926 = vmatprep.subr.mxu0 0.0
    %1927 = vmatpush2.msra.mxu0 0.0
    %1928 = vmatprep.subr.mxu0 0.0
    %1929 = vmatpush2.msra.mxu0 0.0
    %1930 = vmatprep.subr.mxu0 0.0
    %1931 = vmatpush2.msra.mxu0 0.0
    %1932 = vmatprep.subr.mxu0 0.0
    %1933 = vmatpush2.msra.mxu0 0.0
    %1934 = vmatprep.subr.mxu0 0.0
    %1935 = vmatpush2.msra.mxu0 0.0
    %1936 = vmatprep.subr.mxu0 0.0
    %1937 = vmatpush2.msra.mxu0 0.0
    %1938 = vmatprep.subr.mxu0 0.0
    %1939 = vmatpush2.msra.mxu0 0.0
    %1940 = vmatprep.subr.mxu0 0.0
    %1941 = vmatpush2.msra.mxu0 0.0
    %1942 = vmatprep.subr.mxu0 0.0
    %1943 = vmatpush2.msra.mxu0 0.0
    %1944 = vmatprep.subr.mxu0 0.0
    %1945 = vmatpush2.msra.mxu0 0.0
    %1946 = vmatprep.subr.mxu0 0.0
    %1947 = vmatpush2.msra.mxu0 0.0
    %1948 = vmatprep.subr.mxu0 0.0
    %1949 = vmatpush2.msra.mxu0 0.0
    %1950 = vmatprep.subr.mxu0 0.0
    %1951 = vmatpush2.msra.mxu0 0.0
    %1952 = vmatprep.subr.mxu0 0.0
    %1953 = vmatpush2.msra.mxu0 0.0
    %1954 = vmatprep.subr.mxu0 0.0
    %1955 = vmatpush2.msra.mxu0 0.0
    %1956 = vmatprep.mubr.f32.mxu0 0.0
    %1957 = vmatmul.mubr.f32.gmra.mxu0 %v1887
    %v1958 = vpop.f32.mrf.mxu0
    %v1959 = vadd.f32 0.0, %v1958
    %v1960 = vpop.f32.mrf.mxu0
    %1961 = vmatprep.mubr.f32.mxu0 0.0
    %1962 = vmatmul.mubr.f32.gmra.mxu0 %v1890
    %v1963 = vpop.f32.mrf.mxu0
    %v1964 = vadd.f32 0.0, %v1963
    %v1965 = vpop.f32.mrf.mxu0
    %1966 = vdwg.mxu0
    %v1967 = vadd.f32 %v1737, %v1959
    %v1968 = vadd.f32 %v1738, %v1964
    %v1969 = vld [vmem:[%s13] sm:$0x1]
    %v1971 = vlaneseq
    %v1972 = vshrl.u32 %v1971, 7
    %v1973 = vsub.s32 0, %v1972
    %v1974 = vrot.slane %v1969, %v1973
    %v1976 = vadd.f32 %v1967, %v1974
    %v1977 = vadd.f32 %v1968, %v1974
    %s1978 = scalar_lea.vmem %s2, 1
    %v1979 = vld [vmem:[%s1978] sm:$0x1]
    %s1980 = scalar_lea.vmem [#allocation7], 1
    %v1981 = vld [vmem:[%s1980] sm:$0x1]
    %v1982 = vsel %vm104, %v1976, 0.0
    %1983 = vadd.xlane.f32.xlu0 %v1982
    %v1984 = vpop.xlane.xlu0 %1983
    %v1985 = vsel %vm104, %v1977, 0.0
    %1986 = vadd.xlane.f32.xlu0 %v1985
    %v1987 = vpop.xlane.xlu0 %1986
    %v1988 = vmul.f32 %v1984, %v111
    %v1989 = vmul.f32 %v1987, %v111
    %v1990 = vsub.f32 %v1976, %v1988
    %v1991 = vsub.f32 %v1977, %v1989
    %v1992 = vmul.f32 %v1990, %v1990
    %v1993 = vmul.f32 %v1991, %v1991
    %v1994 = vsel %vm104, %v1992, 0.0
    %1995 = vadd.xlane.f32.xlu0 %v1994
    %v1996 = vpop.xlane.xlu0 %1995
    %v1997 = vsel %vm104, %v1993, 0.0
    %1998 = vadd.xlane.f32.xlu0 %v1997
    %v1999 = vpop.xlane.xlu0 %1998
    %v2000 = vmul.f32 %v1996, %v111
    %v2001 = vmul.f32 %v1999, %v111
    %v2002 = vadd.f32 %v2000, 1e-06
    %v2003 = vadd.f32 %v2001, 1e-06
    %v2004 = vrsqrt.pop %v2002
    %v2005 = vrsqrt.pop %v2003
    %v2006 = vmul.f32 %v1990, %v2004
    %v2007 = vmul.f32 %v1991, %v2005
    %v2009 = vlaneseq
    %v2010 = vshrl.u32 %v2009, 7
    %v2011 = vsub.s32 0, %v2010
    %v2012 = vrot.slane %v1979, %v2011
    %v2014 = vmul.f32 %v2006, %v2012
    %v2015 = vmul.f32 %v2007, %v2012
    %v2017 = vlaneseq
    %v2018 = vshrl.u32 %v2017, 7
    %v2019 = vsub.s32 0, %v2018
    %v2020 = vrot.slane %v1981, %v2019
    %v2022 = vadd.f32 %v2014, %v2020
    %v2023 = vadd.f32 %v2015, %v2020
    %s2024 = scalar_lea.vmem %s4, 32
    %v2025 = vld [vmem:[%s2024] sm:$0xff]
    %v2026 = vld [vmem:[%s2024 + $0x8] sm:$0xff]
    %v2027 = vld [vmem:[%s2024 + $0x10] sm:$0xff]
    %v2028 = vld [vmem:[%s2024 + $0x18] sm:$0xff]
    %s2029 = scalar_lea.vmem %s5, 1
    %v2030 = vld [vmem:[%s2029] sm:$0x1]
    %v2032 = vlaneseq
    %v2033 = vshrl.u32 %v2032, 7
    %v2034 = vsub.s32 0, %v2033
    %v2035 = vrot.slane %v2030, %v2034
    %v2038 = vsel %vm104, %v2022, 0
    %v2041 = vsel %vm104, %v2023, 0
    %2043 = vmatprep.subr.mxu0 0.0
    %2044 = vmatpush1.msra.mxu0 0.0
    %2045 = vmatprep.subr.mxu0 0.0
    %2046 = vmatpush1.msra.mxu0 0.0
    %2047 = vmatprep.subr.mxu0 0.0
    %2048 = vmatpush1.msra.mxu0 0.0
    %2049 = vmatprep.subr.mxu0 0.0
    %2050 = vmatpush1.msra.mxu0 0.0
    %2051 = vmatprep.subr.mxu0 0.0
    %2052 = vmatpush1.msra.mxu0 0.0
    %2053 = vmatprep.subr.mxu0 0.0
    %2054 = vmatpush1.msra.mxu0 0.0
    %2055 = vmatprep.subr.mxu0 0.0
    %2056 = vmatpush1.msra.mxu0 0.0
    %2057 = vmatprep.subr.mxu0 0.0
    %2058 = vmatpush1.msra.mxu0 0.0
    %2059 = vmatprep.subr.mxu0 0.0
    %2060 = vmatpush1.msra.mxu0 0.0
    %2061 = vmatprep.subr.mxu0 0.0
    %2062 = vmatpush1.msra.mxu0 0.0
    %2063 = vmatprep.subr.mxu0 0.0
    %2064 = vmatpush1.msra.mxu0 0.0
    %2065 = vmatprep.subr.mxu0 0.0
    %2066 = vmatpush1.msra.mxu0 0.0
    %2067 = vmatprep.subr.mxu0 0.0
    %2068 = vmatpush1.msra.mxu0 %v2028
    %2069 = vmatprep.subr.mxu0 0.0
    %2070 = vmatpush1.msra.mxu0 %v2027
    %2071 = vmatprep.subr.mxu0 0.0
    %2072 = vmatpush1.msra.mxu0 %v2026
    %2073 = vmatprep.subr.mxu0 0.0
    %2074 = vmatpush1.msra.mxu0 %v2025
    %2075 = vmatprep.subr.mxu0 0.0
    %2076 = vmatpush2.msra.mxu0 0.0
    %2077 = vmatprep.subr.mxu0 0.0
    %2078 = vmatpush2.msra.mxu0 0.0
    %2079 = vmatprep.subr.mxu0 0.0
    %2080 = vmatpush2.msra.mxu0 0.0
    %2081 = vmatprep.subr.mxu0 0.0
    %2082 = vmatpush2.msra.mxu0 0.0
    %2083 = vmatprep.subr.mxu0 0.0
    %2084 = vmatpush2.msra.mxu0 0.0
    %2085 = vmatprep.subr.mxu0 0.0
    %2086 = vmatpush2.msra.mxu0 0.0
    %2087 = vmatprep.subr.mxu0 0.0
    %2088 = vmatpush2.msra.mxu0 0.0
    %2089 = vmatprep.subr.mxu0 0.0
    %2090 = vmatpush2.msra.mxu0 0.0
    %2091 = vmatprep.subr.mxu0 0.0
    %2092 = vmatpush2.msra.mxu0 0.0
    %2093 = vmatprep.subr.mxu0 0.0
    %2094 = vmatpush2.msra.mxu0 0.0
    %2095 = vmatprep.subr.mxu0 0.0
    %2096 = vmatpush2.msra.mxu0 0.0
    %2097 = vmatprep.subr.mxu0 0.0
    %2098 = vmatpush2.msra.mxu0 0.0
    %2099 = vmatprep.subr.mxu0 0.0
    %2100 = vmatpush2.msra.mxu0 0.0
    %2101 = vmatprep.subr.mxu0 0.0
    %2102 = vmatpush2.msra.mxu0 0.0
    %2103 = vmatprep.subr.mxu0 0.0
    %2104 = vmatpush2.msra.mxu0 0.0
    %2105 = vmatprep.subr.mxu0 0.0
    %2106 = vmatpush2.msra.mxu0 0.0
    %2107 = vmatprep.mubr.f32.mxu0 0.0
    %2108 = vmatmul.mubr.f32.gmra.mxu0 %v2038
    %v2109 = vpop.f32.mrf.mxu0
    %v2110 = vadd.f32 %v2035, %v2109
    %v2111 = vpop.f32.mrf.mxu0
    %2112 = vmatprep.mubr.f32.mxu0 0.0
    %2113 = vmatmul.mubr.f32.gmra.mxu0 %v2041
    %v2114 = vpop.f32.mrf.mxu0
    %v2115 = vadd.f32 %v2035, %v2114
    %v2116 = vpop.f32.mrf.mxu0
    %2117 = vdwg.mxu0
    %2119 = vrot.lane.b32.xlu0 %v2110, 120
    %v2120 = vpop.permute.xlu0 %2119
    %2121 = vrot.lane.b32.xlu0 %v2110, 112
    %v2122 = vpop.permute.xlu0 %2121
    %2123 = vrot.lane.b32.xlu0 %v2110, 104
    %v2124 = vpop.permute.xlu0 %2123
    %2125 = vrot.lane.b32.xlu0 %v2110, 96
    %v2126 = vpop.permute.xlu0 %2125
    %v2127 = vsel %vm249, %v2110, 0
    %v2129 = vsel %vm249, %v2126, 0
    %2131 = vmatprep.subr.mxu0 0.0
    %2132 = vmatpush1.xpose.msra.mxu0 0.0
    %2133 = vmatprep.subr.mxu0 0.0
    %2134 = vmatpush1.xpose.msra.mxu0 0.0
    %2135 = vmatprep.subr.mxu0 0.0
    %2136 = vmatpush1.xpose.msra.mxu0 0.0
    %2137 = vmatprep.subr.mxu0 0.0
    %2138 = vmatpush1.xpose.msra.mxu0 0.0
    %2139 = vmatprep.subr.mxu0 0.0
    %2140 = vmatpush1.xpose.msra.mxu0 0.0
    %2141 = vmatprep.subr.mxu0 0.0
    %2142 = vmatpush1.xpose.msra.mxu0 0.0
    %2143 = vmatprep.subr.mxu0 0.0
    %2144 = vmatpush1.xpose.msra.mxu0 0.0
    %2145 = vmatprep.subr.mxu0 0.0
    %2146 = vmatpush1.xpose.msra.mxu0 0.0
    %2147 = vmatprep.subr.mxu0 0.0
    %2148 = vmatpush1.xpose.msra.mxu0 0.0
    %2149 = vmatprep.subr.mxu0 0.0
    %2150 = vmatpush1.xpose.msra.mxu0 0.0
    %2151 = vmatprep.subr.mxu0 0.0
    %2152 = vmatpush1.xpose.msra.mxu0 0.0
    %2153 = vmatprep.subr.mxu0 0.0
    %2154 = vmatpush1.xpose.msra.mxu0 0.0
    %2155 = vmatprep.subr.mxu0 0.0
    %2156 = vmatpush1.xpose.msra.mxu0 0.0
    %2157 = vmatprep.subr.mxu0 0.0
    %2158 = vmatpush1.xpose.msra.mxu0 0.0
    %2159 = vmatprep.subr.mxu0 0.0
    %2160 = vmatpush1.xpose.msra.mxu0 0.0
    %2161 = vmatprep.subr.mxu0 0.0
    %2162 = vmatpush1.xpose.msra.mxu0 %v2129
    %2163 = vmatprep.subr.mxu0 0.0
    %2164 = vmatpush2.xpose.msra.mxu0 0.0
    %2165 = vmatprep.subr.mxu0 0.0
    %2166 = vmatpush2.xpose.msra.mxu0 0.0
    %2167 = vmatprep.subr.mxu0 0.0
    %2168 = vmatpush2.xpose.msra.mxu0 0.0
    %2169 = vmatprep.subr.mxu0 0.0
    %2170 = vmatpush2.xpose.msra.mxu0 0.0
    %2171 = vmatprep.subr.mxu0 0.0
    %2172 = vmatpush2.xpose.msra.mxu0 0.0
    %2173 = vmatprep.subr.mxu0 0.0
    %2174 = vmatpush2.xpose.msra.mxu0 0.0
    %2175 = vmatprep.subr.mxu0 0.0
    %2176 = vmatpush2.xpose.msra.mxu0 0.0
    %2177 = vmatprep.subr.mxu0 0.0
    %2178 = vmatpush2.xpose.msra.mxu0 0.0
    %2179 = vmatprep.subr.mxu0 0.0
    %2180 = vmatpush2.xpose.msra.mxu0 0.0
    %2181 = vmatprep.subr.mxu0 0.0
    %2182 = vmatpush2.xpose.msra.mxu0 0.0
    %2183 = vmatprep.subr.mxu0 0.0
    %2184 = vmatpush2.xpose.msra.mxu0 0.0
    %2185 = vmatprep.subr.mxu0 0.0
    %2186 = vmatpush2.xpose.msra.mxu0 0.0
    %2187 = vmatprep.subr.mxu0 0.0
    %2188 = vmatpush2.xpose.msra.mxu0 0.0
    %2189 = vmatprep.subr.mxu0 0.0
    %2190 = vmatpush2.xpose.msra.mxu0 0.0
    %2191 = vmatprep.subr.mxu0 0.0
    %2192 = vmatpush2.xpose.msra.mxu0 0.0
    %2193 = vmatprep.subr.mxu0 0.0
    %2194 = vmatpush2.xpose.msra.mxu0 0.0
    %2195 = vmatprep.mubr.f32.mxu0 0.0
    %2196 = vmatmul.mubr.f32.gmra.mxu0 %v2127
    %v2197 = vpop.f32.mrf.mxu0
    %v2198 = vadd.f32 0.0, %v2197
    %v2199 = vpop.f32.mrf.mxu0
    %2200 = vdwg.mxu0
    %2201 = vrot.lane.b32.xlu0 %v2120, 96
    %v2202 = vpop.permute.xlu0 %2201
    %v2203 = vsel %vm249, %v2120, 0
    %v2205 = vsel %vm249, %v2202, 0
    %2207 = vmatprep.subr.mxu0 0.0
    %2208 = vmatpush1.xpose.msra.mxu0 0.0
    %2209 = vmatprep.subr.mxu0 0.0
    %2210 = vmatpush1.xpose.msra.mxu0 0.0
    %2211 = vmatprep.subr.mxu0 0.0
    %2212 = vmatpush1.xpose.msra.mxu0 0.0
    %2213 = vmatprep.subr.mxu0 0.0
    %2214 = vmatpush1.xpose.msra.mxu0 0.0
    %2215 = vmatprep.subr.mxu0 0.0
    %2216 = vmatpush1.xpose.msra.mxu0 0.0
    %2217 = vmatprep.subr.mxu0 0.0
    %2218 = vmatpush1.xpose.msra.mxu0 0.0
    %2219 = vmatprep.subr.mxu0 0.0
    %2220 = vmatpush1.xpose.msra.mxu0 0.0
    %2221 = vmatprep.subr.mxu0 0.0
    %2222 = vmatpush1.xpose.msra.mxu0 0.0
    %2223 = vmatprep.subr.mxu0 0.0
    %2224 = vmatpush1.xpose.msra.mxu0 0.0
    %2225 = vmatprep.subr.mxu0 0.0
    %2226 = vmatpush1.xpose.msra.mxu0 0.0
    %2227 = vmatprep.subr.mxu0 0.0
    %2228 = vmatpush1.xpose.msra.mxu0 0.0
    %2229 = vmatprep.subr.mxu0 0.0
    %2230 = vmatpush1.xpose.msra.mxu0 0.0
    %2231 = vmatprep.subr.mxu0 0.0
    %2232 = vmatpush1.xpose.msra.mxu0 0.0
    %2233 = vmatprep.subr.mxu0 0.0
    %2234 = vmatpush1.xpose.msra.mxu0 0.0
    %2235 = vmatprep.subr.mxu0 0.0
    %2236 = vmatpush1.xpose.msra.mxu0 0.0
    %2237 = vmatprep.subr.mxu0 0.0
    %2238 = vmatpush1.xpose.msra.mxu0 %v2205
    %2239 = vmatprep.subr.mxu0 0.0
    %2240 = vmatpush2.xpose.msra.mxu0 0.0
    %2241 = vmatprep.subr.mxu0 0.0
    %2242 = vmatpush2.xpose.msra.mxu0 0.0
    %2243 = vmatprep.subr.mxu0 0.0
    %2244 = vmatpush2.xpose.msra.mxu0 0.0
    %2245 = vmatprep.subr.mxu0 0.0
    %2246 = vmatpush2.xpose.msra.mxu0 0.0
    %2247 = vmatprep.subr.mxu0 0.0
    %2248 = vmatpush2.xpose.msra.mxu0 0.0
    %2249 = vmatprep.subr.mxu0 0.0
    %2250 = vmatpush2.xpose.msra.mxu0 0.0
    %2251 = vmatprep.subr.mxu0 0.0
    %2252 = vmatpush2.xpose.msra.mxu0 0.0
    %2253 = vmatprep.subr.mxu0 0.0
    %2254 = vmatpush2.xpose.msra.mxu0 0.0
    %2255 = vmatprep.subr.mxu0 0.0
    %2256 = vmatpush2.xpose.msra.mxu0 0.0
    %2257 = vmatprep.subr.mxu0 0.0
    %2258 = vmatpush2.xpose.msra.mxu0 0.0
    %2259 = vmatprep.subr.mxu0 0.0
    %2260 = vmatpush2.xpose.msra.mxu0 0.0
    %2261 = vmatprep.subr.mxu0 0.0
    %2262 = vmatpush2.xpose.msra.mxu0 0.0
    %2263 = vmatprep.subr.mxu0 0.0
    %2264 = vmatpush2.xpose.msra.mxu0 0.0
    %2265 = vmatprep.subr.mxu0 0.0
    %2266 = vmatpush2.xpose.msra.mxu0 0.0
    %2267 = vmatprep.subr.mxu0 0.0
    %2268 = vmatpush2.xpose.msra.mxu0 0.0
    %2269 = vmatprep.subr.mxu0 0.0
    %2270 = vmatpush2.xpose.msra.mxu0 0.0
    %2271 = vmatprep.mubr.f32.mxu0 0.0
    %2272 = vmatmul.mubr.f32.gmra.mxu0 %v2203
    %v2273 = vpop.f32.mrf.mxu0
    %v2274 = vadd.f32 0.0, %v2273
    %v2275 = vpop.f32.mrf.mxu0
    %2276 = vdwg.mxu0
    %2277 = vrot.lane.b32.xlu0 %v2122, 96
    %v2278 = vpop.permute.xlu0 %2277
    %v2279 = vsel %vm249, %v2122, 0
    %v2281 = vsel %vm249, %v2278, 0
    %2283 = vmatprep.subr.mxu0 0.0
    %2284 = vmatpush1.xpose.msra.mxu0 0.0
    %2285 = vmatprep.subr.mxu0 0.0
    %2286 = vmatpush1.xpose.msra.mxu0 0.0
    %2287 = vmatprep.subr.mxu0 0.0
    %2288 = vmatpush1.xpose.msra.mxu0 0.0
    %2289 = vmatprep.subr.mxu0 0.0
    %2290 = vmatpush1.xpose.msra.mxu0 0.0
    %2291 = vmatprep.subr.mxu0 0.0
    %2292 = vmatpush1.xpose.msra.mxu0 0.0
    %2293 = vmatprep.subr.mxu0 0.0
    %2294 = vmatpush1.xpose.msra.mxu0 0.0
    %2295 = vmatprep.subr.mxu0 0.0
    %2296 = vmatpush1.xpose.msra.mxu0 0.0
    %2297 = vmatprep.subr.mxu0 0.0
    %2298 = vmatpush1.xpose.msra.mxu0 0.0
    %2299 = vmatprep.subr.mxu0 0.0
    %2300 = vmatpush1.xpose.msra.mxu0 0.0
    %2301 = vmatprep.subr.mxu0 0.0
    %2302 = vmatpush1.xpose.msra.mxu0 0.0
    %2303 = vmatprep.subr.mxu0 0.0
    %2304 = vmatpush1.xpose.msra.mxu0 0.0
    %2305 = vmatprep.subr.mxu0 0.0
    %2306 = vmatpush1.xpose.msra.mxu0 0.0
    %2307 = vmatprep.subr.mxu0 0.0
    %2308 = vmatpush1.xpose.msra.mxu0 0.0
    %2309 = vmatprep.subr.mxu0 0.0
    %2310 = vmatpush1.xpose.msra.mxu0 0.0
    %2311 = vmatprep.subr.mxu0 0.0
    %2312 = vmatpush1.xpose.msra.mxu0 0.0
    %2313 = vmatprep.subr.mxu0 0.0
    %2314 = vmatpush1.xpose.msra.mxu0 %v2281
    %2315 = vmatprep.subr.mxu0 0.0
    %2316 = vmatpush2.xpose.msra.mxu0 0.0
    %2317 = vmatprep.subr.mxu0 0.0
    %2318 = vmatpush2.xpose.msra.mxu0 0.0
    %2319 = vmatprep.subr.mxu0 0.0
    %2320 = vmatpush2.xpose.msra.mxu0 0.0
    %2321 = vmatprep.subr.mxu0 0.0
    %2322 = vmatpush2.xpose.msra.mxu0 0.0
    %2323 = vmatprep.subr.mxu0 0.0
    %2324 = vmatpush2.xpose.msra.mxu0 0.0
    %2325 = vmatprep.subr.mxu0 0.0
    %2326 = vmatpush2.xpose.msra.mxu0 0.0
    %2327 = vmatprep.subr.mxu0 0.0
    %2328 = vmatpush2.xpose.msra.mxu0 0.0
    %2329 = vmatprep.subr.mxu0 0.0
    %2330 = vmatpush2.xpose.msra.mxu0 0.0
    %2331 = vmatprep.subr.mxu0 0.0
    %2332 = vmatpush2.xpose.msra.mxu0 0.0
    %2333 = vmatprep.subr.mxu0 0.0
    %2334 = vmatpush2.xpose.msra.mxu0 0.0
    %2335 = vmatprep.subr.mxu0 0.0
    %2336 = vmatpush2.xpose.msra.mxu0 0.0
    %2337 = vmatprep.subr.mxu0 0.0
    %2338 = vmatpush2.xpose.msra.mxu0 0.0
    %2339 = vmatprep.subr.mxu0 0.0
    %2340 = vmatpush2.xpose.msra.mxu0 0.0
    %2341 = vmatprep.subr.mxu0 0.0
    %2342 = vmatpush2.xpose.msra.mxu0 0.0
    %2343 = vmatprep.subr.mxu0 0.0
    %2344 = vmatpush2.xpose.msra.mxu0 0.0
    %2345 = vmatprep.subr.mxu0 0.0
    %2346 = vmatpush2.xpose.msra.mxu0 0.0
    %2347 = vmatprep.mubr.f32.mxu0 0.0
    %2348 = vmatmul.mubr.f32.gmra.mxu0 %v2279
    %v2349 = vpop.f32.mrf.mxu0
    %v2350 = vadd.f32 0.0, %v2349
    %v2351 = vpop.f32.mrf.mxu0
    %2352 = vdwg.mxu0
    %2353 = vrot.lane.b32.xlu0 %v2124, 96
    %v2354 = vpop.permute.xlu0 %2353
    %v2355 = vsel %vm249, %v2124, 0
    %v2357 = vsel %vm249, %v2354, 0
    %2359 = vmatprep.subr.mxu0 0.0
    %2360 = vmatpush1.xpose.msra.mxu0 0.0
    %2361 = vmatprep.subr.mxu0 0.0
    %2362 = vmatpush1.xpose.msra.mxu0 0.0
    %2363 = vmatprep.subr.mxu0 0.0
    %2364 = vmatpush1.xpose.msra.mxu0 0.0
    %2365 = vmatprep.subr.mxu0 0.0
    %2366 = vmatpush1.xpose.msra.mxu0 0.0
    %2367 = vmatprep.subr.mxu0 0.0
    %2368 = vmatpush1.xpose.msra.mxu0 0.0
    %2369 = vmatprep.subr.mxu0 0.0
    %2370 = vmatpush1.xpose.msra.mxu0 0.0
    %2371 = vmatprep.subr.mxu0 0.0
    %2372 = vmatpush1.xpose.msra.mxu0 0.0
    %2373 = vmatprep.subr.mxu0 0.0
    %2374 = vmatpush1.xpose.msra.mxu0 0.0
    %2375 = vmatprep.subr.mxu0 0.0
    %2376 = vmatpush1.xpose.msra.mxu0 0.0
    %2377 = vmatprep.subr.mxu0 0.0
    %2378 = vmatpush1.xpose.msra.mxu0 0.0
    %2379 = vmatprep.subr.mxu0 0.0
    %2380 = vmatpush1.xpose.msra.mxu0 0.0
    %2381 = vmatprep.subr.mxu0 0.0
    %2382 = vmatpush1.xpose.msra.mxu0 0.0
    %2383 = vmatprep.subr.mxu0 0.0
    %2384 = vmatpush1.xpose.msra.mxu0 0.0
    %2385 = vmatprep.subr.mxu0 0.0
    %2386 = vmatpush1.xpose.msra.mxu0 0.0
    %2387 = vmatprep.subr.mxu0 0.0
    %2388 = vmatpush1.xpose.msra.mxu0 0.0
    %2389 = vmatprep.subr.mxu0 0.0
    %2390 = vmatpush1.xpose.msra.mxu0 %v2357
    %2391 = vmatprep.subr.mxu0 0.0
    %2392 = vmatpush2.xpose.msra.mxu0 0.0
    %2393 = vmatprep.subr.mxu0 0.0
    %2394 = vmatpush2.xpose.msra.mxu0 0.0
    %2395 = vmatprep.subr.mxu0 0.0
    %2396 = vmatpush2.xpose.msra.mxu0 0.0
    %2397 = vmatprep.subr.mxu0 0.0
    %2398 = vmatpush2.xpose.msra.mxu0 0.0
    %2399 = vmatprep.subr.mxu0 0.0
    %2400 = vmatpush2.xpose.msra.mxu0 0.0
    %2401 = vmatprep.subr.mxu0 0.0
    %2402 = vmatpush2.xpose.msra.mxu0 0.0
    %2403 = vmatprep.subr.mxu0 0.0
    %2404 = vmatpush2.xpose.msra.mxu0 0.0
    %2405 = vmatprep.subr.mxu0 0.0
    %2406 = vmatpush2.xpose.msra.mxu0 0.0
    %2407 = vmatprep.subr.mxu0 0.0
    %2408 = vmatpush2.xpose.msra.mxu0 0.0
    %2409 = vmatprep.subr.mxu0 0.0
    %2410 = vmatpush2.xpose.msra.mxu0 0.0
    %2411 = vmatprep.subr.mxu0 0.0
    %2412 = vmatpush2.xpose.msra.mxu0 0.0
    %2413 = vmatprep.subr.mxu0 0.0
    %2414 = vmatpush2.xpose.msra.mxu0 0.0
    %2415 = vmatprep.subr.mxu0 0.0
    %2416 = vmatpush2.xpose.msra.mxu0 0.0
    %2417 = vmatprep.subr.mxu0 0.0
    %2418 = vmatpush2.xpose.msra.mxu0 0.0
    %2419 = vmatprep.subr.mxu0 0.0
    %2420 = vmatpush2.xpose.msra.mxu0 0.0
    %2421 = vmatprep.subr.mxu0 0.0
    %2422 = vmatpush2.xpose.msra.mxu0 0.0
    %2423 = vmatprep.mubr.f32.mxu0 0.0
    %2424 = vmatmul.mubr.f32.gmra.mxu0 %v2355
    %v2425 = vpop.f32.mrf.mxu0
    %v2426 = vadd.f32 0.0, %v2425
    %v2427 = vpop.f32.mrf.mxu0
    %2428 = vdwg.mxu0
    %v2429 = vmul.f32 %v2198, 0.35355338
    %v2430 = vmul.f32 %v2274, 0.35355338
    %v2431 = vmul.f32 %v2350, 0.35355338
    %v2432 = vmul.f32 %v2426, 0.35355338
    %v2433 = vsel %vm561, -1e+09, %v2429
    %v2434 = vsel %vm561, -1e+09, %v2430
    %v2435 = vsel %vm561, -1e+09, %v2431
    %v2436 = vsel %vm561, -1e+09, %v2432
    %v2437 = vsel %vm249, %v2433, -inf
    %2438 = vmax.xlane.f32.xlu0 %v2437
    %v2439 = vpop.xlane.xlu0 %2438
    %v2440 = vsel %vm249, %v2434, -inf
    %2441 = vmax.xlane.f32.xlu0 %v2440
    %v2442 = vpop.xlane.xlu0 %2441
    %v2443 = vsel %vm249, %v2435, -inf
    %2444 = vmax.xlane.f32.xlu0 %v2443
    %v2445 = vpop.xlane.xlu0 %2444
    %v2446 = vsel %vm249, %v2436, -inf
    %2447 = vmax.xlane.f32.xlu0 %v2446
    %v2448 = vpop.xlane.xlu0 %2447
    %v2449 = vsub.f32 %v2433, %v2439
    %v2450 = vsub.f32 %v2434, %v2442
    %v2451 = vsub.f32 %v2435, %v2445
    %v2452 = vsub.f32 %v2436, %v2448
    %v2453 = vmul.f32 %v2449, 1.442695
    %v2454 = vpow.pop %v2453
    %v2455 = vmul.f32 %v2450, 1.442695
    %v2456 = vpow.pop %v2455
    %v2457 = vmul.f32 %v2451, 1.442695
    %v2458 = vpow.pop %v2457
    %v2459 = vmul.f32 %v2452, 1.442695
    %v2460 = vpow.pop %v2459
    %v2461 = vsel %vm249, %v2454, 0.0
    %2462 = vadd.xlane.f32.xlu0 %v2461
    %v2463 = vpop.xlane.xlu0 %2462
    %v2464 = vsel %vm249, %v2456, 0.0
    %2465 = vadd.xlane.f32.xlu0 %v2464
    %v2466 = vpop.xlane.xlu0 %2465
    %v2467 = vsel %vm249, %v2458, 0.0
    %2468 = vadd.xlane.f32.xlu0 %v2467
    %v2469 = vpop.xlane.xlu0 %2468
    %v2470 = vsel %vm249, %v2460, 0.0
    %2471 = vadd.xlane.f32.xlu0 %v2470
    %v2472 = vpop.xlane.xlu0 %2471
    %v2473 = vrcp.pop %v2463
    %v2474 = vrcp.pop %v2466
    %v2475 = vrcp.pop %v2469
    %v2476 = vrcp.pop %v2472
    %v2477 = vmul.f32 %v2463, %v2473
    %v2478 = vmul.f32 %v2466, %v2474
    %v2479 = vmul.f32 %v2469, %v2475
    %v2480 = vmul.f32 %v2472, %v2476
    %v2481 = vsub.f32 2.0, %v2477
    %v2482 = vsub.f32 2.0, %v2478
    %v2483 = vsub.f32 2.0, %v2479
    %v2484 = vsub.f32 2.0, %v2480
    %v2485 = vmul.f32 %v2473, %v2481
    %v2486 = vmul.f32 %v2474, %v2482
    %v2487 = vmul.f32 %v2475, %v2483
    %v2488 = vmul.f32 %v2476, %v2484
    %v2489 = vmul.f32 %v2454, %v2485
    %v2490 = vmul.f32 %v2456, %v2486
    %v2491 = vmul.f32 %v2458, %v2487
    %v2492 = vmul.f32 %v2460, %v2488
    %2493 = vrot.lane.b32.xlu0 %v2110, 64
    %v2494 = vpop.permute.xlu0 %2493
    %v2497 = vsel %vm249, %v2489, 0
    %2499 = vmatprep.subr.mxu0 0.0
    %2500 = vmatpush1.msra.mxu0 0.0
    %2501 = vmatprep.subr.mxu0 0.0
    %2502 = vmatpush1.msra.mxu0 0.0
    %2503 = vmatprep.subr.mxu0 0.0
    %2504 = vmatpush1.msra.mxu0 0.0
    %2505 = vmatprep.subr.mxu0 0.0
    %2506 = vmatpush1.msra.mxu0 0.0
    %2507 = vmatprep.subr.mxu0 0.0
    %2508 = vmatpush1.msra.mxu0 0.0
    %2509 = vmatprep.subr.mxu0 0.0
    %2510 = vmatpush1.msra.mxu0 0.0
    %2511 = vmatprep.subr.mxu0 0.0
    %2512 = vmatpush1.msra.mxu0 0.0
    %2513 = vmatprep.subr.mxu0 0.0
    %2514 = vmatpush1.msra.mxu0 0.0
    %2515 = vmatprep.subr.mxu0 0.0
    %2516 = vmatpush1.msra.mxu0 0.0
    %2517 = vmatprep.subr.mxu0 0.0
    %2518 = vmatpush1.msra.mxu0 0.0
    %2519 = vmatprep.subr.mxu0 0.0
    %2520 = vmatpush1.msra.mxu0 0.0
    %2521 = vmatprep.subr.mxu0 0.0
    %2522 = vmatpush1.msra.mxu0 0.0
    %2523 = vmatprep.subr.mxu0 0.0
    %2524 = vmatpush1.msra.mxu0 0.0
    %2525 = vmatprep.subr.mxu0 0.0
    %2526 = vmatpush1.msra.mxu0 0.0
    %2527 = vmatprep.subr.mxu0 0.0
    %2528 = vmatpush1.msra.mxu0 0.0
    %2529 = vmatprep.subr.mxu0 0.0
    %2530 = vmatpush1.msra.mxu0 %v2494
    %2531 = vmatprep.subr.mxu0 0.0
    %2532 = vmatpush2.msra.mxu0 0.0
    %2533 = vmatprep.subr.mxu0 0.0
    %2534 = vmatpush2.msra.mxu0 0.0
    %2535 = vmatprep.subr.mxu0 0.0
    %2536 = vmatpush2.msra.mxu0 0.0
    %2537 = vmatprep.subr.mxu0 0.0
    %2538 = vmatpush2.msra.mxu0 0.0
    %2539 = vmatprep.subr.mxu0 0.0
    %2540 = vmatpush2.msra.mxu0 0.0
    %2541 = vmatprep.subr.mxu0 0.0
    %2542 = vmatpush2.msra.mxu0 0.0
    %2543 = vmatprep.subr.mxu0 0.0
    %2544 = vmatpush2.msra.mxu0 0.0
    %2545 = vmatprep.subr.mxu0 0.0
    %2546 = vmatpush2.msra.mxu0 0.0
    %2547 = vmatprep.subr.mxu0 0.0
    %2548 = vmatpush2.msra.mxu0 0.0
    %2549 = vmatprep.subr.mxu0 0.0
    %2550 = vmatpush2.msra.mxu0 0.0
    %2551 = vmatprep.subr.mxu0 0.0
    %2552 = vmatpush2.msra.mxu0 0.0
    %2553 = vmatprep.subr.mxu0 0.0
    %2554 = vmatpush2.msra.mxu0 0.0
    %2555 = vmatprep.subr.mxu0 0.0
    %2556 = vmatpush2.msra.mxu0 0.0
    %2557 = vmatprep.subr.mxu0 0.0
    %2558 = vmatpush2.msra.mxu0 0.0
    %2559 = vmatprep.subr.mxu0 0.0
    %2560 = vmatpush2.msra.mxu0 0.0
    %2561 = vmatprep.subr.mxu0 0.0
    %2562 = vmatpush2.msra.mxu0 0.0
    %2563 = vmatprep.mubr.f32.mxu0 0.0
    %2564 = vmatmul.mubr.f32.gmra.mxu0 %v2497
    %v2565 = vpop.f32.mrf.mxu0
    %v2566 = vadd.f32 0.0, %v2565
    %v2567 = vpop.f32.mrf.mxu0
    %2568 = vdwg.mxu0
    %2569 = vrot.lane.b32.xlu0 %v2120, 64
    %v2570 = vpop.permute.xlu0 %2569
    %v2573 = vsel %vm249, %v2490, 0
    %2575 = vmatprep.subr.mxu0 0.0
    %2576 = vmatpush1.msra.mxu0 0.0
    %2577 = vmatprep.subr.mxu0 0.0
    %2578 = vmatpush1.msra.mxu0 0.0
    %2579 = vmatprep.subr.mxu0 0.0
    %2580 = vmatpush1.msra.mxu0 0.0
    %2581 = vmatprep.subr.mxu0 0.0
    %2582 = vmatpush1.msra.mxu0 0.0
    %2583 = vmatprep.subr.mxu0 0.0
    %2584 = vmatpush1.msra.mxu0 0.0
    %2585 = vmatprep.subr.mxu0 0.0
    %2586 = vmatpush1.msra.mxu0 0.0
    %2587 = vmatprep.subr.mxu0 0.0
    %2588 = vmatpush1.msra.mxu0 0.0
    %2589 = vmatprep.subr.mxu0 0.0
    %2590 = vmatpush1.msra.mxu0 0.0
    %2591 = vmatprep.subr.mxu0 0.0
    %2592 = vmatpush1.msra.mxu0 0.0
    %2593 = vmatprep.subr.mxu0 0.0
    %2594 = vmatpush1.msra.mxu0 0.0
    %2595 = vmatprep.subr.mxu0 0.0
    %2596 = vmatpush1.msra.mxu0 0.0
    %2597 = vmatprep.subr.mxu0 0.0
    %2598 = vmatpush1.msra.mxu0 0.0
    %2599 = vmatprep.subr.mxu0 0.0
    %2600 = vmatpush1.msra.mxu0 0.0
    %2601 = vmatprep.subr.mxu0 0.0
    %2602 = vmatpush1.msra.mxu0 0.0
    %2603 = vmatprep.subr.mxu0 0.0
    %2604 = vmatpush1.msra.mxu0 0.0
    %2605 = vmatprep.subr.mxu0 0.0
    %2606 = vmatpush1.msra.mxu0 %v2570
    %2607 = vmatprep.subr.mxu0 0.0
    %2608 = vmatpush2.msra.mxu0 0.0
    %2609 = vmatprep.subr.mxu0 0.0
    %2610 = vmatpush2.msra.mxu0 0.0
    %2611 = vmatprep.subr.mxu0 0.0
    %2612 = vmatpush2.msra.mxu0 0.0
    %2613 = vmatprep.subr.mxu0 0.0
    %2614 = vmatpush2.msra.mxu0 0.0
    %2615 = vmatprep.subr.mxu0 0.0
    %2616 = vmatpush2.msra.mxu0 0.0
    %2617 = vmatprep.subr.mxu0 0.0
    %2618 = vmatpush2.msra.mxu0 0.0
    %2619 = vmatprep.subr.mxu0 0.0
    %2620 = vmatpush2.msra.mxu0 0.0
    %2621 = vmatprep.subr.mxu0 0.0
    %2622 = vmatpush2.msra.mxu0 0.0
    %2623 = vmatprep.subr.mxu0 0.0
    %2624 = vmatpush2.msra.mxu0 0.0
    %2625 = vmatprep.subr.mxu0 0.0
    %2626 = vmatpush2.msra.mxu0 0.0
    %2627 = vmatprep.subr.mxu0 0.0
    %2628 = vmatpush2.msra.mxu0 0.0
    %2629 = vmatprep.subr.mxu0 0.0
    %2630 = vmatpush2.msra.mxu0 0.0
    %2631 = vmatprep.subr.mxu0 0.0
    %2632 = vmatpush2.msra.mxu0 0.0
    %2633 = vmatprep.subr.mxu0 0.0
    %2634 = vmatpush2.msra.mxu0 0.0
    %2635 = vmatprep.subr.mxu0 0.0
    %2636 = vmatpush2.msra.mxu0 0.0
    %2637 = vmatprep.subr.mxu0 0.0
    %2638 = vmatpush2.msra.mxu0 0.0
    %2639 = vmatprep.mubr.f32.mxu0 0.0
    %2640 = vmatmul.mubr.f32.gmra.mxu0 %v2573
    %v2641 = vpop.f32.mrf.mxu0
    %v2642 = vadd.f32 0.0, %v2641
    %v2643 = vpop.f32.mrf.mxu0
    %2644 = vdwg.mxu0
    %2645 = vrot.lane.b32.xlu0 %v2122, 64
    %v2646 = vpop.permute.xlu0 %2645
    %v2649 = vsel %vm249, %v2491, 0
    %2651 = vmatprep.subr.mxu0 0.0
    %2652 = vmatpush1.msra.mxu0 0.0
    %2653 = vmatprep.subr.mxu0 0.0
    %2654 = vmatpush1.msra.mxu0 0.0
    %2655 = vmatprep.subr.mxu0 0.0
    %2656 = vmatpush1.msra.mxu0 0.0
    %2657 = vmatprep.subr.mxu0 0.0
    %2658 = vmatpush1.msra.mxu0 0.0
    %2659 = vmatprep.subr.mxu0 0.0
    %2660 = vmatpush1.msra.mxu0 0.0
    %2661 = vmatprep.subr.mxu0 0.0
    %2662 = vmatpush1.msra.mxu0 0.0
    %2663 = vmatprep.subr.mxu0 0.0
    %2664 = vmatpush1.msra.mxu0 0.0
    %2665 = vmatprep.subr.mxu0 0.0
    %2666 = vmatpush1.msra.mxu0 0.0
    %2667 = vmatprep.subr.mxu0 0.0
    %2668 = vmatpush1.msra.mxu0 0.0
    %2669 = vmatprep.subr.mxu0 0.0
    %2670 = vmatpush1.msra.mxu0 0.0
    %2671 = vmatprep.subr.mxu0 0.0
    %2672 = vmatpush1.msra.mxu0 0.0
    %2673 = vmatprep.subr.mxu0 0.0
    %2674 = vmatpush1.msra.mxu0 0.0
    %2675 = vmatprep.subr.mxu0 0.0
    %2676 = vmatpush1.msra.mxu0 0.0
    %2677 = vmatprep.subr.mxu0 0.0
    %2678 = vmatpush1.msra.mxu0 0.0
    %2679 = vmatprep.subr.mxu0 0.0
    %2680 = vmatpush1.msra.mxu0 0.0
    %2681 = vmatprep.subr.mxu0 0.0
    %2682 = vmatpush1.msra.mxu0 %v2646
    %2683 = vmatprep.subr.mxu0 0.0
    %2684 = vmatpush2.msra.mxu0 0.0
    %2685 = vmatprep.subr.mxu0 0.0
    %2686 = vmatpush2.msra.mxu0 0.0
    %2687 = vmatprep.subr.mxu0 0.0
    %2688 = vmatpush2.msra.mxu0 0.0
    %2689 = vmatprep.subr.mxu0 0.0
    %2690 = vmatpush2.msra.mxu0 0.0
    %2691 = vmatprep.subr.mxu0 0.0
    %2692 = vmatpush2.msra.mxu0 0.0
    %2693 = vmatprep.subr.mxu0 0.0
    %2694 = vmatpush2.msra.mxu0 0.0
    %2695 = vmatprep.subr.mxu0 0.0
    %2696 = vmatpush2.msra.mxu0 0.0
    %2697 = vmatprep.subr.mxu0 0.0
    %2698 = vmatpush2.msra.mxu0 0.0
    %2699 = vmatprep.subr.mxu0 0.0
    %2700 = vmatpush2.msra.mxu0 0.0
    %2701 = vmatprep.subr.mxu0 0.0
    %2702 = vmatpush2.msra.mxu0 0.0
    %2703 = vmatprep.subr.mxu0 0.0
    %2704 = vmatpush2.msra.mxu0 0.0
    %2705 = vmatprep.subr.mxu0 0.0
    %2706 = vmatpush2.msra.mxu0 0.0
    %2707 = vmatprep.subr.mxu0 0.0
    %2708 = vmatpush2.msra.mxu0 0.0
    %2709 = vmatprep.subr.mxu0 0.0
    %2710 = vmatpush2.msra.mxu0 0.0
    %2711 = vmatprep.subr.mxu0 0.0
    %2712 = vmatpush2.msra.mxu0 0.0
    %2713 = vmatprep.subr.mxu0 0.0
    %2714 = vmatpush2.msra.mxu0 0.0
    %2715 = vmatprep.mubr.f32.mxu0 0.0
    %2716 = vmatmul.mubr.f32.gmra.mxu0 %v2649
    %v2717 = vpop.f32.mrf.mxu0
    %v2718 = vadd.f32 0.0, %v2717
    %v2719 = vpop.f32.mrf.mxu0
    %2720 = vdwg.mxu0
    %2721 = vrot.lane.b32.xlu0 %v2124, 64
    %v2722 = vpop.permute.xlu0 %2721
    %v2725 = vsel %vm249, %v2492, 0
    %2727 = vmatprep.subr.mxu0 0.0
    %2728 = vmatpush1.msra.mxu0 0.0
    %2729 = vmatprep.subr.mxu0 0.0
    %2730 = vmatpush1.msra.mxu0 0.0
    %2731 = vmatprep.subr.mxu0 0.0
    %2732 = vmatpush1.msra.mxu0 0.0
    %2733 = vmatprep.subr.mxu0 0.0
    %2734 = vmatpush1.msra.mxu0 0.0
    %2735 = vmatprep.subr.mxu0 0.0
    %2736 = vmatpush1.msra.mxu0 0.0
    %2737 = vmatprep.subr.mxu0 0.0
    %2738 = vmatpush1.msra.mxu0 0.0
    %2739 = vmatprep.subr.mxu0 0.0
    %2740 = vmatpush1.msra.mxu0 0.0
    %2741 = vmatprep.subr.mxu0 0.0
    %2742 = vmatpush1.msra.mxu0 0.0
    %2743 = vmatprep.subr.mxu0 0.0
    %2744 = vmatpush1.msra.mxu0 0.0
    %2745 = vmatprep.subr.mxu0 0.0
    %2746 = vmatpush1.msra.mxu0 0.0
    %2747 = vmatprep.subr.mxu0 0.0
    %2748 = vmatpush1.msra.mxu0 0.0
    %2749 = vmatprep.subr.mxu0 0.0
    %2750 = vmatpush1.msra.mxu0 0.0
    %2751 = vmatprep.subr.mxu0 0.0
    %2752 = vmatpush1.msra.mxu0 0.0
    %2753 = vmatprep.subr.mxu0 0.0
    %2754 = vmatpush1.msra.mxu0 0.0
    %2755 = vmatprep.subr.mxu0 0.0
    %2756 = vmatpush1.msra.mxu0 0.0
    %2757 = vmatprep.subr.mxu0 0.0
    %2758 = vmatpush1.msra.mxu0 %v2722
    %2759 = vmatprep.subr.mxu0 0.0
    %2760 = vmatpush2.msra.mxu0 0.0
    %2761 = vmatprep.subr.mxu0 0.0
    %2762 = vmatpush2.msra.mxu0 0.0
    %2763 = vmatprep.subr.mxu0 0.0
    %2764 = vmatpush2.msra.mxu0 0.0
    %2765 = vmatprep.subr.mxu0 0.0
    %2766 = vmatpush2.msra.mxu0 0.0
    %2767 = vmatprep.subr.mxu0 0.0
    %2768 = vmatpush2.msra.mxu0 0.0
    %2769 = vmatprep.subr.mxu0 0.0
    %2770 = vmatpush2.msra.mxu0 0.0
    %2771 = vmatprep.subr.mxu0 0.0
    %2772 = vmatpush2.msra.mxu0 0.0
    %2773 = vmatprep.subr.mxu0 0.0
    %2774 = vmatpush2.msra.mxu0 0.0
    %2775 = vmatprep.subr.mxu0 0.0
    %2776 = vmatpush2.msra.mxu0 0.0
    %2777 = vmatprep.subr.mxu0 0.0
    %2778 = vmatpush2.msra.mxu0 0.0
    %2779 = vmatprep.subr.mxu0 0.0
    %2780 = vmatpush2.msra.mxu0 0.0
    %2781 = vmatprep.subr.mxu0 0.0
    %2782 = vmatpush2.msra.mxu0 0.0
    %2783 = vmatprep.subr.mxu0 0.0
    %2784 = vmatpush2.msra.mxu0 0.0
    %2785 = vmatprep.subr.mxu0 0.0
    %2786 = vmatpush2.msra.mxu0 0.0
    %2787 = vmatprep.subr.mxu0 0.0
    %2788 = vmatpush2.msra.mxu0 0.0
    %2789 = vmatprep.subr.mxu0 0.0
    %2790 = vmatpush2.msra.mxu0 0.0
    %2791 = vmatprep.mubr.f32.mxu0 0.0
    %2792 = vmatmul.mubr.f32.gmra.mxu0 %v2725
    %v2793 = vpop.f32.mrf.mxu0
    %v2794 = vadd.f32 0.0, %v2793
    %v2795 = vpop.f32.mrf.mxu0
    %2796 = vdwg.mxu0
    %2798 = vrot.lane.b32.xlu0 %v2642, 8
    %v2799 = vpop.permute.xlu0 %2798
    %2802 = vrot.lane.b32.xlu0 %v2718, 16
    %v2803 = vpop.permute.xlu0 %2802
    %2806 = vrot.lane.b32.xlu0 %v2794, 24
    %v2807 = vpop.permute.xlu0 %2806
    %v2809 = vsel %vm249, %v2566, %v2799
    %v2810 = vsel %vm939, %v2809, %v2803
    %v2811 = vsel %vm941, %v2810, %v2807
    %2813 = vrot.lane.b32.xlu0 %v2115, 120
    %v2814 = vpop.permute.xlu0 %2813
    %2815 = vrot.lane.b32.xlu0 %v2115, 112
    %v2816 = vpop.permute.xlu0 %2815
    %2817 = vrot.lane.b32.xlu0 %v2115, 104
    %v2818 = vpop.permute.xlu0 %2817
    %2819 = vrot.lane.b32.xlu0 %v2115, 96
    %v2820 = vpop.permute.xlu0 %2819
    %v2821 = vsel %vm249, %v2115, 0
    %v2823 = vsel %vm249, %v2820, 0
    %2825 = vmatprep.subr.mxu0 0.0
    %2826 = vmatpush1.xpose.msra.mxu0 0.0
    %2827 = vmatprep.subr.mxu0 0.0
    %2828 = vmatpush1.xpose.msra.mxu0 0.0
    %2829 = vmatprep.subr.mxu0 0.0
    %2830 = vmatpush1.xpose.msra.mxu0 0.0
    %2831 = vmatprep.subr.mxu0 0.0
    %2832 = vmatpush1.xpose.msra.mxu0 0.0
    %2833 = vmatprep.subr.mxu0 0.0
    %2834 = vmatpush1.xpose.msra.mxu0 0.0
    %2835 = vmatprep.subr.mxu0 0.0
    %2836 = vmatpush1.xpose.msra.mxu0 0.0
    %2837 = vmatprep.subr.mxu0 0.0
    %2838 = vmatpush1.xpose.msra.mxu0 0.0
    %2839 = vmatprep.subr.mxu0 0.0
    %2840 = vmatpush1.xpose.msra.mxu0 0.0
    %2841 = vmatprep.subr.mxu0 0.0
    %2842 = vmatpush1.xpose.msra.mxu0 0.0
    %2843 = vmatprep.subr.mxu0 0.0
    %2844 = vmatpush1.xpose.msra.mxu0 0.0
    %2845 = vmatprep.subr.mxu0 0.0
    %2846 = vmatpush1.xpose.msra.mxu0 0.0
    %2847 = vmatprep.subr.mxu0 0.0
    %2848 = vmatpush1.xpose.msra.mxu0 0.0
    %2849 = vmatprep.subr.mxu0 0.0
    %2850 = vmatpush1.xpose.msra.mxu0 0.0
    %2851 = vmatprep.subr.mxu0 0.0
    %2852 = vmatpush1.xpose.msra.mxu0 0.0
    %2853 = vmatprep.subr.mxu0 0.0
    %2854 = vmatpush1.xpose.msra.mxu0 0.0
    %2855 = vmatprep.subr.mxu0 0.0
    %2856 = vmatpush1.xpose.msra.mxu0 %v2823
    %2857 = vmatprep.subr.mxu0 0.0
    %2858 = vmatpush2.xpose.msra.mxu0 0.0
    %2859 = vmatprep.subr.mxu0 0.0
    %2860 = vmatpush2.xpose.msra.mxu0 0.0
    %2861 = vmatprep.subr.mxu0 0.0
    %2862 = vmatpush2.xpose.msra.mxu0 0.0
    %2863 = vmatprep.subr.mxu0 0.0
    %2864 = vmatpush2.xpose.msra.mxu0 0.0
    %2865 = vmatprep.subr.mxu0 0.0
    %2866 = vmatpush2.xpose.msra.mxu0 0.0
    %2867 = vmatprep.subr.mxu0 0.0
    %2868 = vmatpush2.xpose.msra.mxu0 0.0
    %2869 = vmatprep.subr.mxu0 0.0
    %2870 = vmatpush2.xpose.msra.mxu0 0.0
    %2871 = vmatprep.subr.mxu0 0.0
    %2872 = vmatpush2.xpose.msra.mxu0 0.0
    %2873 = vmatprep.subr.mxu0 0.0
    %2874 = vmatpush2.xpose.msra.mxu0 0.0
    %2875 = vmatprep.subr.mxu0 0.0
    %2876 = vmatpush2.xpose.msra.mxu0 0.0
    %2877 = vmatprep.subr.mxu0 0.0
    %2878 = vmatpush2.xpose.msra.mxu0 0.0
    %2879 = vmatprep.subr.mxu0 0.0
    %2880 = vmatpush2.xpose.msra.mxu0 0.0
    %2881 = vmatprep.subr.mxu0 0.0
    %2882 = vmatpush2.xpose.msra.mxu0 0.0
    %2883 = vmatprep.subr.mxu0 0.0
    %2884 = vmatpush2.xpose.msra.mxu0 0.0
    %2885 = vmatprep.subr.mxu0 0.0
    %2886 = vmatpush2.xpose.msra.mxu0 0.0
    %2887 = vmatprep.subr.mxu0 0.0
    %2888 = vmatpush2.xpose.msra.mxu0 0.0
    %2889 = vmatprep.mubr.f32.mxu0 0.0
    %2890 = vmatmul.mubr.f32.gmra.mxu0 %v2821
    %v2891 = vpop.f32.mrf.mxu0
    %v2892 = vadd.f32 0.0, %v2891
    %v2893 = vpop.f32.mrf.mxu0
    %2894 = vdwg.mxu0
    %2895 = vrot.lane.b32.xlu0 %v2814, 96
    %v2896 = vpop.permute.xlu0 %2895
    %v2897 = vsel %vm249, %v2814, 0
    %v2899 = vsel %vm249, %v2896, 0
    %2901 = vmatprep.subr.mxu0 0.0
    %2902 = vmatpush1.xpose.msra.mxu0 0.0
    %2903 = vmatprep.subr.mxu0 0.0
    %2904 = vmatpush1.xpose.msra.mxu0 0.0
    %2905 = vmatprep.subr.mxu0 0.0
    %2906 = vmatpush1.xpose.msra.mxu0 0.0
    %2907 = vmatprep.subr.mxu0 0.0
    %2908 = vmatpush1.xpose.msra.mxu0 0.0
    %2909 = vmatprep.subr.mxu0 0.0
    %2910 = vmatpush1.xpose.msra.mxu0 0.0
    %2911 = vmatprep.subr.mxu0 0.0
    %2912 = vmatpush1.xpose.msra.mxu0 0.0
    %2913 = vmatprep.subr.mxu0 0.0
    %2914 = vmatpush1.xpose.msra.mxu0 0.0
    %2915 = vmatprep.subr.mxu0 0.0
    %2916 = vmatpush1.xpose.msra.mxu0 0.0
    %2917 = vmatprep.subr.mxu0 0.0
    %2918 = vmatpush1.xpose.msra.mxu0 0.0
    %2919 = vmatprep.subr.mxu0 0.0
    %2920 = vmatpush1.xpose.msra.mxu0 0.0
    %2921 = vmatprep.subr.mxu0 0.0
    %2922 = vmatpush1.xpose.msra.mxu0 0.0
    %2923 = vmatprep.subr.mxu0 0.0
    %2924 = vmatpush1.xpose.msra.mxu0 0.0
    %2925 = vmatprep.subr.mxu0 0.0
    %2926 = vmatpush1.xpose.msra.mxu0 0.0
    %2927 = vmatprep.subr.mxu0 0.0
    %2928 = vmatpush1.xpose.msra.mxu0 0.0
    %2929 = vmatprep.subr.mxu0 0.0
    %2930 = vmatpush1.xpose.msra.mxu0 0.0
    %2931 = vmatprep.subr.mxu0 0.0
    %2932 = vmatpush1.xpose.msra.mxu0 %v2899
    %2933 = vmatprep.subr.mxu0 0.0
    %2934 = vmatpush2.xpose.msra.mxu0 0.0
    %2935 = vmatprep.subr.mxu0 0.0
    %2936 = vmatpush2.xpose.msra.mxu0 0.0
    %2937 = vmatprep.subr.mxu0 0.0
    %2938 = vmatpush2.xpose.msra.mxu0 0.0
    %2939 = vmatprep.subr.mxu0 0.0
    %2940 = vmatpush2.xpose.msra.mxu0 0.0
    %2941 = vmatprep.subr.mxu0 0.0
    %2942 = vmatpush2.xpose.msra.mxu0 0.0
    %2943 = vmatprep.subr.mxu0 0.0
    %2944 = vmatpush2.xpose.msra.mxu0 0.0
    %2945 = vmatprep.subr.mxu0 0.0
    %2946 = vmatpush2.xpose.msra.mxu0 0.0
    %2947 = vmatprep.subr.mxu0 0.0
    %2948 = vmatpush2.xpose.msra.mxu0 0.0
    %2949 = vmatprep.subr.mxu0 0.0
    %2950 = vmatpush2.xpose.msra.mxu0 0.0
    %2951 = vmatprep.subr.mxu0 0.0
    %2952 = vmatpush2.xpose.msra.mxu0 0.0
    %2953 = vmatprep.subr.mxu0 0.0
    %2954 = vmatpush2.xpose.msra.mxu0 0.0
    %2955 = vmatprep.subr.mxu0 0.0
    %2956 = vmatpush2.xpose.msra.mxu0 0.0
    %2957 = vmatprep.subr.mxu0 0.0
    %2958 = vmatpush2.xpose.msra.mxu0 0.0
    %2959 = vmatprep.subr.mxu0 0.0
    %2960 = vmatpush2.xpose.msra.mxu0 0.0
    %2961 = vmatprep.subr.mxu0 0.0
    %2962 = vmatpush2.xpose.msra.mxu0 0.0
    %2963 = vmatprep.subr.mxu0 0.0
    %2964 = vmatpush2.xpose.msra.mxu0 0.0
    %2965 = vmatprep.mubr.f32.mxu0 0.0
    %2966 = vmatmul.mubr.f32.gmra.mxu0 %v2897
    %v2967 = vpop.f32.mrf.mxu0
    %v2968 = vadd.f32 0.0, %v2967
    %v2969 = vpop.f32.mrf.mxu0
    %2970 = vdwg.mxu0
    %2971 = vrot.lane.b32.xlu0 %v2816, 96
    %v2972 = vpop.permute.xlu0 %2971
    %v2973 = vsel %vm249, %v2816, 0
    %v2975 = vsel %vm249, %v2972, 0
    %2977 = vmatprep.subr.mxu0 0.0
    %2978 = vmatpush1.xpose.msra.mxu0 0.0
    %2979 = vmatprep.subr.mxu0 0.0
    %2980 = vmatpush1.xpose.msra.mxu0 0.0
    %2981 = vmatprep.subr.mxu0 0.0
    %2982 = vmatpush1.xpose.msra.mxu0 0.0
    %2983 = vmatprep.subr.mxu0 0.0
    %2984 = vmatpush1.xpose.msra.mxu0 0.0
    %2985 = vmatprep.subr.mxu0 0.0
    %2986 = vmatpush1.xpose.msra.mxu0 0.0
    %2987 = vmatprep.subr.mxu0 0.0
    %2988 = vmatpush1.xpose.msra.mxu0 0.0
    %2989 = vmatprep.subr.mxu0 0.0
    %2990 = vmatpush1.xpose.msra.mxu0 0.0
    %2991 = vmatprep.subr.mxu0 0.0
    %2992 = vmatpush1.xpose.msra.mxu0 0.0
    %2993 = vmatprep.subr.mxu0 0.0
    %2994 = vmatpush1.xpose.msra.mxu0 0.0
    %2995 = vmatprep.subr.mxu0 0.0
    %2996 = vmatpush1.xpose.msra.mxu0 0.0
    %2997 = vmatprep.subr.mxu0 0.0
    %2998 = vmatpush1.xpose.msra.mxu0 0.0
    %2999 = vmatprep.subr.mxu0 0.0
    %3000 = vmatpush1.xpose.msra.mxu0 0.0
    %3001 = vmatprep.subr.mxu0 0.0
    %3002 = vmatpush1.xpose.msra.mxu0 0.0
    %3003 = vmatprep.subr.mxu0 0.0
    %3004 = vmatpush1.xpose.msra.mxu0 0.0
    %3005 = vmatprep.subr.mxu0 0.0
    %3006 = vmatpush1.xpose.msra.mxu0 0.0
    %3007 = vmatprep.subr.mxu0 0.0
    %3008 = vmatpush1.xpose.msra.mxu0 %v2975
    %3009 = vmatprep.subr.mxu0 0.0
    %3010 = vmatpush2.xpose.msra.mxu0 0.0
    %3011 = vmatprep.subr.mxu0 0.0
    %3012 = vmatpush2.xpose.msra.mxu0 0.0
    %3013 = vmatprep.subr.mxu0 0.0
    %3014 = vmatpush2.xpose.msra.mxu0 0.0
    %3015 = vmatprep.subr.mxu0 0.0
    %3016 = vmatpush2.xpose.msra.mxu0 0.0
    %3017 = vmatprep.subr.mxu0 0.0
    %3018 = vmatpush2.xpose.msra.mxu0 0.0
    %3019 = vmatprep.subr.mxu0 0.0
    %3020 = vmatpush2.xpose.msra.mxu0 0.0
    %3021 = vmatprep.subr.mxu0 0.0
    %3022 = vmatpush2.xpose.msra.mxu0 0.0
    %3023 = vmatprep.subr.mxu0 0.0
    %3024 = vmatpush2.xpose.msra.mxu0 0.0
    %3025 = vmatprep.subr.mxu0 0.0
    %3026 = vmatpush2.xpose.msra.mxu0 0.0
    %3027 = vmatprep.subr.mxu0 0.0
    %3028 = vmatpush2.xpose.msra.mxu0 0.0
    %3029 = vmatprep.subr.mxu0 0.0
    %3030 = vmatpush2.xpose.msra.mxu0 0.0
    %3031 = vmatprep.subr.mxu0 0.0
    %3032 = vmatpush2.xpose.msra.mxu0 0.0
    %3033 = vmatprep.subr.mxu0 0.0
    %3034 = vmatpush2.xpose.msra.mxu0 0.0
    %3035 = vmatprep.subr.mxu0 0.0
    %3036 = vmatpush2.xpose.msra.mxu0 0.0
    %3037 = vmatprep.subr.mxu0 0.0
    %3038 = vmatpush2.xpose.msra.mxu0 0.0
    %3039 = vmatprep.subr.mxu0 0.0
    %3040 = vmatpush2.xpose.msra.mxu0 0.0
    %3041 = vmatprep.mubr.f32.mxu0 0.0
    %3042 = vmatmul.mubr.f32.gmra.mxu0 %v2973
    %v3043 = vpop.f32.mrf.mxu0
    %v3044 = vadd.f32 0.0, %v3043
    %v3045 = vpop.f32.mrf.mxu0
    %3046 = vdwg.mxu0
    %3047 = vrot.lane.b32.xlu0 %v2818, 96
    %v3048 = vpop.permute.xlu0 %3047
    %v3049 = vsel %vm249, %v2818, 0
    %v3051 = vsel %vm249, %v3048, 0
    %3053 = vmatprep.subr.mxu0 0.0
    %3054 = vmatpush1.xpose.msra.mxu0 0.0
    %3055 = vmatprep.subr.mxu0 0.0
    %3056 = vmatpush1.xpose.msra.mxu0 0.0
    %3057 = vmatprep.subr.mxu0 0.0
    %3058 = vmatpush1.xpose.msra.mxu0 0.0
    %3059 = vmatprep.subr.mxu0 0.0
    %3060 = vmatpush1.xpose.msra.mxu0 0.0
    %3061 = vmatprep.subr.mxu0 0.0
    %3062 = vmatpush1.xpose.msra.mxu0 0.0
    %3063 = vmatprep.subr.mxu0 0.0
    %3064 = vmatpush1.xpose.msra.mxu0 0.0
    %3065 = vmatprep.subr.mxu0 0.0
    %3066 = vmatpush1.xpose.msra.mxu0 0.0
    %3067 = vmatprep.subr.mxu0 0.0
    %3068 = vmatpush1.xpose.msra.mxu0 0.0
    %3069 = vmatprep.subr.mxu0 0.0
    %3070 = vmatpush1.xpose.msra.mxu0 0.0
    %3071 = vmatprep.subr.mxu0 0.0
    %3072 = vmatpush1.xpose.msra.mxu0 0.0
    %3073 = vmatprep.subr.mxu0 0.0
    %3074 = vmatpush1.xpose.msra.mxu0 0.0
    %3075 = vmatprep.subr.mxu0 0.0
    %3076 = vmatpush1.xpose.msra.mxu0 0.0
    %3077 = vmatprep.subr.mxu0 0.0
    %3078 = vmatpush1.xpose.msra.mxu0 0.0
    %3079 = vmatprep.subr.mxu0 0.0
    %3080 = vmatpush1.xpose.msra.mxu0 0.0
    %3081 = vmatprep.subr.mxu0 0.0
    %3082 = vmatpush1.xpose.msra.mxu0 0.0
    %3083 = vmatprep.subr.mxu0 0.0
    %3084 = vmatpush1.xpose.msra.mxu0 %v3051
    %3085 = vmatprep.subr.mxu0 0.0
    %3086 = vmatpush2.xpose.msra.mxu0 0.0
    %3087 = vmatprep.subr.mxu0 0.0
    %3088 = vmatpush2.xpose.msra.mxu0 0.0
    %3089 = vmatprep.subr.mxu0 0.0
    %3090 = vmatpush2.xpose.msra.mxu0 0.0
    %3091 = vmatprep.subr.mxu0 0.0
    %3092 = vmatpush2.xpose.msra.mxu0 0.0
    %3093 = vmatprep.subr.mxu0 0.0
    %3094 = vmatpush2.xpose.msra.mxu0 0.0
    %3095 = vmatprep.subr.mxu0 0.0
    %3096 = vmatpush2.xpose.msra.mxu0 0.0
    %3097 = vmatprep.subr.mxu0 0.0
    %3098 = vmatpush2.xpose.msra.mxu0 0.0
    %3099 = vmatprep.subr.mxu0 0.0
    %3100 = vmatpush2.xpose.msra.mxu0 0.0
    %3101 = vmatprep.subr.mxu0 0.0
    %3102 = vmatpush2.xpose.msra.mxu0 0.0
    %3103 = vmatprep.subr.mxu0 0.0
    %3104 = vmatpush2.xpose.msra.mxu0 0.0
    %3105 = vmatprep.subr.mxu0 0.0
    %3106 = vmatpush2.xpose.msra.mxu0 0.0
    %3107 = vmatprep.subr.mxu0 0.0
    %3108 = vmatpush2.xpose.msra.mxu0 0.0
    %3109 = vmatprep.subr.mxu0 0.0
    %3110 = vmatpush2.xpose.msra.mxu0 0.0
    %3111 = vmatprep.subr.mxu0 0.0
    %3112 = vmatpush2.xpose.msra.mxu0 0.0
    %3113 = vmatprep.subr.mxu0 0.0
    %3114 = vmatpush2.xpose.msra.mxu0 0.0
    %3115 = vmatprep.subr.mxu0 0.0
    %3116 = vmatpush2.xpose.msra.mxu0 0.0
    %3117 = vmatprep.mubr.f32.mxu0 0.0
    %3118 = vmatmul.mubr.f32.gmra.mxu0 %v3049
    %v3119 = vpop.f32.mrf.mxu0
    %v3120 = vadd.f32 0.0, %v3119
    %v3121 = vpop.f32.mrf.mxu0
    %3122 = vdwg.mxu0
    %v3123 = vmul.f32 %v2892, 0.35355338
    %v3124 = vmul.f32 %v2968, 0.35355338
    %v3125 = vmul.f32 %v3044, 0.35355338
    %v3126 = vmul.f32 %v3120, 0.35355338
    %v3127 = vsel %vm1263, -1e+09, %v3123
    %v3128 = vsel %vm1263, -1e+09, %v3124
    %v3129 = vsel %vm1263, -1e+09, %v3125
    %v3130 = vsel %vm1263, -1e+09, %v3126
    %v3131 = vsel %vm249, %v3127, -inf
    %3132 = vmax.xlane.f32.xlu0 %v3131
    %v3133 = vpop.xlane.xlu0 %3132
    %v3134 = vsel %vm249, %v3128, -inf
    %3135 = vmax.xlane.f32.xlu0 %v3134
    %v3136 = vpop.xlane.xlu0 %3135
    %v3137 = vsel %vm249, %v3129, -inf
    %3138 = vmax.xlane.f32.xlu0 %v3137
    %v3139 = vpop.xlane.xlu0 %3138
    %v3140 = vsel %vm249, %v3130, -inf
    %3141 = vmax.xlane.f32.xlu0 %v3140
    %v3142 = vpop.xlane.xlu0 %3141
    %v3143 = vsub.f32 %v3127, %v3133
    %v3144 = vsub.f32 %v3128, %v3136
    %v3145 = vsub.f32 %v3129, %v3139
    %v3146 = vsub.f32 %v3130, %v3142
    %v3147 = vmul.f32 %v3143, 1.442695
    %v3148 = vpow.pop %v3147
    %v3149 = vmul.f32 %v3144, 1.442695
    %v3150 = vpow.pop %v3149
    %v3151 = vmul.f32 %v3145, 1.442695
    %v3152 = vpow.pop %v3151
    %v3153 = vmul.f32 %v3146, 1.442695
    %v3154 = vpow.pop %v3153
    %v3155 = vsel %vm249, %v3148, 0.0
    %3156 = vadd.xlane.f32.xlu0 %v3155
    %v3157 = vpop.xlane.xlu0 %3156
    %v3158 = vsel %vm249, %v3150, 0.0
    %3159 = vadd.xlane.f32.xlu0 %v3158
    %v3160 = vpop.xlane.xlu0 %3159
    %v3161 = vsel %vm249, %v3152, 0.0
    %3162 = vadd.xlane.f32.xlu0 %v3161
    %v3163 = vpop.xlane.xlu0 %3162
    %v3164 = vsel %vm249, %v3154, 0.0
    %3165 = vadd.xlane.f32.xlu0 %v3164
    %v3166 = vpop.xlane.xlu0 %3165
    %v3167 = vrcp.pop %v3157
    %v3168 = vrcp.pop %v3160
    %v3169 = vrcp.pop %v3163
    %v3170 = vrcp.pop %v3166
    %v3171 = vmul.f32 %v3157, %v3167
    %v3172 = vmul.f32 %v3160, %v3168
    %v3173 = vmul.f32 %v3163, %v3169
    %v3174 = vmul.f32 %v3166, %v3170
    %v3175 = vsub.f32 2.0, %v3171
    %v3176 = vsub.f32 2.0, %v3172
    %v3177 = vsub.f32 2.0, %v3173
    %v3178 = vsub.f32 2.0, %v3174
    %v3179 = vmul.f32 %v3167, %v3175
    %v3180 = vmul.f32 %v3168, %v3176
    %v3181 = vmul.f32 %v3169, %v3177
    %v3182 = vmul.f32 %v3170, %v3178
    %v3183 = vmul.f32 %v3148, %v3179
    %v3184 = vmul.f32 %v3150, %v3180
    %v3185 = vmul.f32 %v3152, %v3181
    %v3186 = vmul.f32 %v3154, %v3182
    %3187 = vrot.lane.b32.xlu0 %v2115, 64
    %v3188 = vpop.permute.xlu0 %3187
    %v3191 = vsel %vm249, %v3183, 0
    %3193 = vmatprep.subr.mxu0 0.0
    %3194 = vmatpush1.msra.mxu0 0.0
    %3195 = vmatprep.subr.mxu0 0.0
    %3196 = vmatpush1.msra.mxu0 0.0
    %3197 = vmatprep.subr.mxu0 0.0
    %3198 = vmatpush1.msra.mxu0 0.0
    %3199 = vmatprep.subr.mxu0 0.0
    %3200 = vmatpush1.msra.mxu0 0.0
    %3201 = vmatprep.subr.mxu0 0.0
    %3202 = vmatpush1.msra.mxu0 0.0
    %3203 = vmatprep.subr.mxu0 0.0
    %3204 = vmatpush1.msra.mxu0 0.0
    %3205 = vmatprep.subr.mxu0 0.0
    %3206 = vmatpush1.msra.mxu0 0.0
    %3207 = vmatprep.subr.mxu0 0.0
    %3208 = vmatpush1.msra.mxu0 0.0
    %3209 = vmatprep.subr.mxu0 0.0
    %3210 = vmatpush1.msra.mxu0 0.0
    %3211 = vmatprep.subr.mxu0 0.0
    %3212 = vmatpush1.msra.mxu0 0.0
    %3213 = vmatprep.subr.mxu0 0.0
    %3214 = vmatpush1.msra.mxu0 0.0
    %3215 = vmatprep.subr.mxu0 0.0
    %3216 = vmatpush1.msra.mxu0 0.0
    %3217 = vmatprep.subr.mxu0 0.0
    %3218 = vmatpush1.msra.mxu0 0.0
    %3219 = vmatprep.subr.mxu0 0.0
    %3220 = vmatpush1.msra.mxu0 0.0
    %3221 = vmatprep.subr.mxu0 0.0
    %3222 = vmatpush1.msra.mxu0 0.0
    %3223 = vmatprep.subr.mxu0 0.0
    %3224 = vmatpush1.msra.mxu0 %v3188
    %3225 = vmatprep.subr.mxu0 0.0
    %3226 = vmatpush2.msra.mxu0 0.0
    %3227 = vmatprep.subr.mxu0 0.0
    %3228 = vmatpush2.msra.mxu0 0.0
    %3229 = vmatprep.subr.mxu0 0.0
    %3230 = vmatpush2.msra.mxu0 0.0
    %3231 = vmatprep.subr.mxu0 0.0
    %3232 = vmatpush2.msra.mxu0 0.0
    %3233 = vmatprep.subr.mxu0 0.0
    %3234 = vmatpush2.msra.mxu0 0.0
    %3235 = vmatprep.subr.mxu0 0.0
    %3236 = vmatpush2.msra.mxu0 0.0
    %3237 = vmatprep.subr.mxu0 0.0
    %3238 = vmatpush2.msra.mxu0 0.0
    %3239 = vmatprep.subr.mxu0 0.0
    %3240 = vmatpush2.msra.mxu0 0.0
    %3241 = vmatprep.subr.mxu0 0.0
    %3242 = vmatpush2.msra.mxu0 0.0
    %3243 = vmatprep.subr.mxu0 0.0
    %3244 = vmatpush2.msra.mxu0 0.0
    %3245 = vmatprep.subr.mxu0 0.0
    %3246 = vmatpush2.msra.mxu0 0.0
    %3247 = vmatprep.subr.mxu0 0.0
    %3248 = vmatpush2.msra.mxu0 0.0
    %3249 = vmatprep.subr.mxu0 0.0
    %3250 = vmatpush2.msra.mxu0 0.0
    %3251 = vmatprep.subr.mxu0 0.0
    %3252 = vmatpush2.msra.mxu0 0.0
    %3253 = vmatprep.subr.mxu0 0.0
    %3254 = vmatpush2.msra.mxu0 0.0
    %3255 = vmatprep.subr.mxu0 0.0
    %3256 = vmatpush2.msra.mxu0 0.0
    %3257 = vmatprep.mubr.f32.mxu0 0.0
    %3258 = vmatmul.mubr.f32.gmra.mxu0 %v3191
    %v3259 = vpop.f32.mrf.mxu0
    %v3260 = vadd.f32 0.0, %v3259
    %v3261 = vpop.f32.mrf.mxu0
    %3262 = vdwg.mxu0
    %3263 = vrot.lane.b32.xlu0 %v2814, 64
    %v3264 = vpop.permute.xlu0 %3263
    %v3267 = vsel %vm249, %v3184, 0
    %3269 = vmatprep.subr.mxu0 0.0
    %3270 = vmatpush1.msra.mxu0 0.0
    %3271 = vmatprep.subr.mxu0 0.0
    %3272 = vmatpush1.msra.mxu0 0.0
    %3273 = vmatprep.subr.mxu0 0.0
    %3274 = vmatpush1.msra.mxu0 0.0
    %3275 = vmatprep.subr.mxu0 0.0
    %3276 = vmatpush1.msra.mxu0 0.0
    %3277 = vmatprep.subr.mxu0 0.0
    %3278 = vmatpush1.msra.mxu0 0.0
    %3279 = vmatprep.subr.mxu0 0.0
    %3280 = vmatpush1.msra.mxu0 0.0
    %3281 = vmatprep.subr.mxu0 0.0
    %3282 = vmatpush1.msra.mxu0 0.0
    %3283 = vmatprep.subr.mxu0 0.0
    %3284 = vmatpush1.msra.mxu0 0.0
    %3285 = vmatprep.subr.mxu0 0.0
    %3286 = vmatpush1.msra.mxu0 0.0
    %3287 = vmatprep.subr.mxu0 0.0
    %3288 = vmatpush1.msra.mxu0 0.0
    %3289 = vmatprep.subr.mxu0 0.0
    %3290 = vmatpush1.msra.mxu0 0.0
    %3291 = vmatprep.subr.mxu0 0.0
    %3292 = vmatpush1.msra.mxu0 0.0
    %3293 = vmatprep.subr.mxu0 0.0
    %3294 = vmatpush1.msra.mxu0 0.0
    %3295 = vmatprep.subr.mxu0 0.0
    %3296 = vmatpush1.msra.mxu0 0.0
    %3297 = vmatprep.subr.mxu0 0.0
    %3298 = vmatpush1.msra.mxu0 0.0
    %3299 = vmatprep.subr.mxu0 0.0
    %3300 = vmatpush1.msra.mxu0 %v3264
    %3301 = vmatprep.subr.mxu0 0.0
    %3302 = vmatpush2.msra.mxu0 0.0
    %3303 = vmatprep.subr.mxu0 0.0
    %3304 = vmatpush2.msra.mxu0 0.0
    %3305 = vmatprep.subr.mxu0 0.0
    %3306 = vmatpush2.msra.mxu0 0.0
    %3307 = vmatprep.subr.mxu0 0.0
    %3308 = vmatpush2.msra.mxu0 0.0
    %3309 = vmatprep.subr.mxu0 0.0
    %3310 = vmatpush2.msra.mxu0 0.0
    %3311 = vmatprep.subr.mxu0 0.0
    %3312 = vmatpush2.msra.mxu0 0.0
    %3313 = vmatprep.subr.mxu0 0.0
    %3314 = vmatpush2.msra.mxu0 0.0
    %3315 = vmatprep.subr.mxu0 0.0
    %3316 = vmatpush2.msra.mxu0 0.0
    %3317 = vmatprep.subr.mxu0 0.0
    %3318 = vmatpush2.msra.mxu0 0.0
    %3319 = vmatprep.subr.mxu0 0.0
    %3320 = vmatpush2.msra.mxu0 0.0
    %3321 = vmatprep.subr.mxu0 0.0
    %3322 = vmatpush2.msra.mxu0 0.0
    %3323 = vmatprep.subr.mxu0 0.0
    %3324 = vmatpush2.msra.mxu0 0.0
    %3325 = vmatprep.subr.mxu0 0.0
    %3326 = vmatpush2.msra.mxu0 0.0
    %3327 = vmatprep.subr.mxu0 0.0
    %3328 = vmatpush2.msra.mxu0 0.0
    %3329 = vmatprep.subr.mxu0 0.0
    %3330 = vmatpush2.msra.mxu0 0.0
    %3331 = vmatprep.subr.mxu0 0.0
    %3332 = vmatpush2.msra.mxu0 0.0
    %3333 = vmatprep.mubr.f32.mxu0 0.0
    %3334 = vmatmul.mubr.f32.gmra.mxu0 %v3267
    %v3335 = vpop.f32.mrf.mxu0
    %v3336 = vadd.f32 0.0, %v3335
    %v3337 = vpop.f32.mrf.mxu0
    %3338 = vdwg.mxu0
    %3339 = vrot.lane.b32.xlu0 %v2816, 64
    %v3340 = vpop.permute.xlu0 %3339
    %v3343 = vsel %vm249, %v3185, 0
    %3345 = vmatprep.subr.mxu0 0.0
    %3346 = vmatpush1.msra.mxu0 0.0
    %3347 = vmatprep.subr.mxu0 0.0
    %3348 = vmatpush1.msra.mxu0 0.0
    %3349 = vmatprep.subr.mxu0 0.0
    %3350 = vmatpush1.msra.mxu0 0.0
    %3351 = vmatprep.subr.mxu0 0.0
    %3352 = vmatpush1.msra.mxu0 0.0
    %3353 = vmatprep.subr.mxu0 0.0
    %3354 = vmatpush1.msra.mxu0 0.0
    %3355 = vmatprep.subr.mxu0 0.0
    %3356 = vmatpush1.msra.mxu0 0.0
    %3357 = vmatprep.subr.mxu0 0.0
    %3358 = vmatpush1.msra.mxu0 0.0
    %3359 = vmatprep.subr.mxu0 0.0
    %3360 = vmatpush1.msra.mxu0 0.0
    %3361 = vmatprep.subr.mxu0 0.0
    %3362 = vmatpush1.msra.mxu0 0.0
    %3363 = vmatprep.subr.mxu0 0.0
    %3364 = vmatpush1.msra.mxu0 0.0
    %3365 = vmatprep.subr.mxu0 0.0
    %3366 = vmatpush1.msra.mxu0 0.0
    %3367 = vmatprep.subr.mxu0 0.0
    %3368 = vmatpush1.msra.mxu0 0.0
    %3369 = vmatprep.subr.mxu0 0.0
    %3370 = vmatpush1.msra.mxu0 0.0
    %3371 = vmatprep.subr.mxu0 0.0
    %3372 = vmatpush1.msra.mxu0 0.0
    %3373 = vmatprep.subr.mxu0 0.0
    %3374 = vmatpush1.msra.mxu0 0.0
    %3375 = vmatprep.subr.mxu0 0.0
    %3376 = vmatpush1.msra.mxu0 %v3340
    %3377 = vmatprep.subr.mxu0 0.0
    %3378 = vmatpush2.msra.mxu0 0.0
    %3379 = vmatprep.subr.mxu0 0.0
    %3380 = vmatpush2.msra.mxu0 0.0
    %3381 = vmatprep.subr.mxu0 0.0
    %3382 = vmatpush2.msra.mxu0 0.0
    %3383 = vmatprep.subr.mxu0 0.0
    %3384 = vmatpush2.msra.mxu0 0.0
    %3385 = vmatprep.subr.mxu0 0.0
    %3386 = vmatpush2.msra.mxu0 0.0
    %3387 = vmatprep.subr.mxu0 0.0
    %3388 = vmatpush2.msra.mxu0 0.0
    %3389 = vmatprep.subr.mxu0 0.0
    %3390 = vmatpush2.msra.mxu0 0.0
    %3391 = vmatprep.subr.mxu0 0.0
    %3392 = vmatpush2.msra.mxu0 0.0
    %3393 = vmatprep.subr.mxu0 0.0
    %3394 = vmatpush2.msra.mxu0 0.0
    %3395 = vmatprep.subr.mxu0 0.0
    %3396 = vmatpush2.msra.mxu0 0.0
    %3397 = vmatprep.subr.mxu0 0.0
    %3398 = vmatpush2.msra.mxu0 0.0
    %3399 = vmatprep.subr.mxu0 0.0
    %3400 = vmatpush2.msra.mxu0 0.0
    %3401 = vmatprep.subr.mxu0 0.0
    %3402 = vmatpush2.msra.mxu0 0.0
    %3403 = vmatprep.subr.mxu0 0.0
    %3404 = vmatpush2.msra.mxu0 0.0
    %3405 = vmatprep.subr.mxu0 0.0
    %3406 = vmatpush2.msra.mxu0 0.0
    %3407 = vmatprep.subr.mxu0 0.0
    %3408 = vmatpush2.msra.mxu0 0.0
    %3409 = vmatprep.mubr.f32.mxu0 0.0
    %3410 = vmatmul.mubr.f32.gmra.mxu0 %v3343
    %v3411 = vpop.f32.mrf.mxu0
    %v3412 = vadd.f32 0.0, %v3411
    %v3413 = vpop.f32.mrf.mxu0
    %3414 = vdwg.mxu0
    %3415 = vrot.lane.b32.xlu0 %v2818, 64
    %v3416 = vpop.permute.xlu0 %3415
    %v3419 = vsel %vm249, %v3186, 0
    %3421 = vmatprep.subr.mxu0 0.0
    %3422 = vmatpush1.msra.mxu0 0.0
    %3423 = vmatprep.subr.mxu0 0.0
    %3424 = vmatpush1.msra.mxu0 0.0
    %3425 = vmatprep.subr.mxu0 0.0
    %3426 = vmatpush1.msra.mxu0 0.0
    %3427 = vmatprep.subr.mxu0 0.0
    %3428 = vmatpush1.msra.mxu0 0.0
    %3429 = vmatprep.subr.mxu0 0.0
    %3430 = vmatpush1.msra.mxu0 0.0
    %3431 = vmatprep.subr.mxu0 0.0
    %3432 = vmatpush1.msra.mxu0 0.0
    %3433 = vmatprep.subr.mxu0 0.0
    %3434 = vmatpush1.msra.mxu0 0.0
    %3435 = vmatprep.subr.mxu0 0.0
    %3436 = vmatpush1.msra.mxu0 0.0
    %3437 = vmatprep.subr.mxu0 0.0
    %3438 = vmatpush1.msra.mxu0 0.0
    %3439 = vmatprep.subr.mxu0 0.0
    %3440 = vmatpush1.msra.mxu0 0.0
    %3441 = vmatprep.subr.mxu0 0.0
    %3442 = vmatpush1.msra.mxu0 0.0
    %3443 = vmatprep.subr.mxu0 0.0
    %3444 = vmatpush1.msra.mxu0 0.0
    %3445 = vmatprep.subr.mxu0 0.0
    %3446 = vmatpush1.msra.mxu0 0.0
    %3447 = vmatprep.subr.mxu0 0.0
    %3448 = vmatpush1.msra.mxu0 0.0
    %3449 = vmatprep.subr.mxu0 0.0
    %3450 = vmatpush1.msra.mxu0 0.0
    %3451 = vmatprep.subr.mxu0 0.0
    %3452 = vmatpush1.msra.mxu0 %v3416
    %3453 = vmatprep.subr.mxu0 0.0
    %3454 = vmatpush2.msra.mxu0 0.0
    %3455 = vmatprep.subr.mxu0 0.0
    %3456 = vmatpush2.msra.mxu0 0.0
    %3457 = vmatprep.subr.mxu0 0.0
    %3458 = vmatpush2.msra.mxu0 0.0
    %3459 = vmatprep.subr.mxu0 0.0
    %3460 = vmatpush2.msra.mxu0 0.0
    %3461 = vmatprep.subr.mxu0 0.0
    %3462 = vmatpush2.msra.mxu0 0.0
    %3463 = vmatprep.subr.mxu0 0.0
    %3464 = vmatpush2.msra.mxu0 0.0
    %3465 = vmatprep.subr.mxu0 0.0
    %3466 = vmatpush2.msra.mxu0 0.0
    %3467 = vmatprep.subr.mxu0 0.0
    %3468 = vmatpush2.msra.mxu0 0.0
    %3469 = vmatprep.subr.mxu0 0.0
    %3470 = vmatpush2.msra.mxu0 0.0
    %3471 = vmatprep.subr.mxu0 0.0
    %3472 = vmatpush2.msra.mxu0 0.0
    %3473 = vmatprep.subr.mxu0 0.0
    %3474 = vmatpush2.msra.mxu0 0.0
    %3475 = vmatprep.subr.mxu0 0.0
    %3476 = vmatpush2.msra.mxu0 0.0
    %3477 = vmatprep.subr.mxu0 0.0
    %3478 = vmatpush2.msra.mxu0 0.0
    %3479 = vmatprep.subr.mxu0 0.0
    %3480 = vmatpush2.msra.mxu0 0.0
    %3481 = vmatprep.subr.mxu0 0.0
    %3482 = vmatpush2.msra.mxu0 0.0
    %3483 = vmatprep.subr.mxu0 0.0
    %3484 = vmatpush2.msra.mxu0 0.0
    %3485 = vmatprep.mubr.f32.mxu0 0.0
    %3486 = vmatmul.mubr.f32.gmra.mxu0 %v3419
    %v3487 = vpop.f32.mrf.mxu0
    %v3488 = vadd.f32 0.0, %v3487
    %v3489 = vpop.f32.mrf.mxu0
    %3490 = vdwg.mxu0
    %3492 = vrot.lane.b32.xlu0 %v3336, 8
    %v3493 = vpop.permute.xlu0 %3492
    %3496 = vrot.lane.b32.xlu0 %v3412, 16
    %v3497 = vpop.permute.xlu0 %3496
    %3500 = vrot.lane.b32.xlu0 %v3488, 24
    %v3501 = vpop.permute.xlu0 %3500
    %v3503 = vsel %vm249, %v3260, %v3493
    %v3504 = vsel %vm939, %v3503, %v3497
    %v3505 = vsel %vm941, %v3504, %v3501
    %s3506 = scalar_lea.vmem %s6, 32
    %v3507 = vld [vmem:[%s3506] sm:$0xff]
    %v3508 = vld [vmem:[%s3506 + $0x8] sm:$0xff]
    %v3509 = vld [vmem:[%s3506 + $0x10] sm:$0xff]
    %v3510 = vld [vmem:[%s3506 + $0x18] sm:$0xff]
    %v3512 = vsel %vm104, %v2811, 0
    %v3515 = vsel %vm104, %v3505, 0
    %3517 = vmatprep.subr.mxu0 0.0
    %3518 = vmatpush1.msra.mxu0 0.0
    %3519 = vmatprep.subr.mxu0 0.0
    %3520 = vmatpush1.msra.mxu0 0.0
    %3521 = vmatprep.subr.mxu0 0.0
    %3522 = vmatpush1.msra.mxu0 0.0
    %3523 = vmatprep.subr.mxu0 0.0
    %3524 = vmatpush1.msra.mxu0 0.0
    %3525 = vmatprep.subr.mxu0 0.0
    %3526 = vmatpush1.msra.mxu0 0.0
    %3527 = vmatprep.subr.mxu0 0.0
    %3528 = vmatpush1.msra.mxu0 0.0
    %3529 = vmatprep.subr.mxu0 0.0
    %3530 = vmatpush1.msra.mxu0 0.0
    %3531 = vmatprep.subr.mxu0 0.0
    %3532 = vmatpush1.msra.mxu0 0.0
    %3533 = vmatprep.subr.mxu0 0.0
    %3534 = vmatpush1.msra.mxu0 0.0
    %3535 = vmatprep.subr.mxu0 0.0
    %3536 = vmatpush1.msra.mxu0 0.0
    %3537 = vmatprep.subr.mxu0 0.0
    %3538 = vmatpush1.msra.mxu0 0.0
    %3539 = vmatprep.subr.mxu0 0.0
    %3540 = vmatpush1.msra.mxu0 0.0
    %3541 = vmatprep.subr.mxu0 0.0
    %3542 = vmatpush1.msra.mxu0 %v3510
    %3543 = vmatprep.subr.mxu0 0.0
    %3544 = vmatpush1.msra.mxu0 %v3509
    %3545 = vmatprep.subr.mxu0 0.0
    %3546 = vmatpush1.msra.mxu0 %v3508
    %3547 = vmatprep.subr.mxu0 0.0
    %3548 = vmatpush1.msra.mxu0 %v3507
    %3549 = vmatprep.subr.mxu0 0.0
    %3550 = vmatpush2.msra.mxu0 0.0
    %3551 = vmatprep.subr.mxu0 0.0
    %3552 = vmatpush2.msra.mxu0 0.0
    %3553 = vmatprep.subr.mxu0 0.0
    %3554 = vmatpush2.msra.mxu0 0.0
    %3555 = vmatprep.subr.mxu0 0.0
    %3556 = vmatpush2.msra.mxu0 0.0
    %3557 = vmatprep.subr.mxu0 0.0
    %3558 = vmatpush2.msra.mxu0 0.0
    %3559 = vmatprep.subr.mxu0 0.0
    %3560 = vmatpush2.msra.mxu0 0.0
    %3561 = vmatprep.subr.mxu0 0.0
    %3562 = vmatpush2.msra.mxu0 0.0
    %3563 = vmatprep.subr.mxu0 0.0
    %3564 = vmatpush2.msra.mxu0 0.0
    %3565 = vmatprep.subr.mxu0 0.0
    %3566 = vmatpush2.msra.mxu0 0.0
    %3567 = vmatprep.subr.mxu0 0.0
    %3568 = vmatpush2.msra.mxu0 0.0
    %3569 = vmatprep.subr.mxu0 0.0
    %3570 = vmatpush2.msra.mxu0 0.0
    %3571 = vmatprep.subr.mxu0 0.0
    %3572 = vmatpush2.msra.mxu0 0.0
    %3573 = vmatprep.subr.mxu0 0.0
    %3574 = vmatpush2.msra.mxu0 0.0
    %3575 = vmatprep.subr.mxu0 0.0
    %3576 = vmatpush2.msra.mxu0 0.0
    %3577 = vmatprep.subr.mxu0 0.0
    %3578 = vmatpush2.msra.mxu0 0.0
    %3579 = vmatprep.subr.mxu0 0.0
    %3580 = vmatpush2.msra.mxu0 0.0
    %3581 = vmatprep.mubr.f32.mxu0 0.0
    %3582 = vmatmul.mubr.f32.gmra.mxu0 %v3512
    %v3583 = vpop.f32.mrf.mxu0
    %v3584 = vadd.f32 0.0, %v3583
    %v3585 = vpop.f32.mrf.mxu0
    %3586 = vmatprep.mubr.f32.mxu0 0.0
    %3587 = vmatmul.mubr.f32.gmra.mxu0 %v3515
    %v3588 = vpop.f32.mrf.mxu0
    %v3589 = vadd.f32 0.0, %v3588
    %v3590 = vpop.f32.mrf.mxu0
    %3591 = vdwg.mxu0
    %v3592 = vadd.f32 %v1976, %v3584
    %v3593 = vadd.f32 %v1977, %v3589
    %s3594 = scalar_lea.vmem %s7, 1
    %v3595 = vld [vmem:[%s3594] sm:$0x1]
    %v3597 = vlaneseq
    %v3598 = vshrl.u32 %v3597, 7
    %v3599 = vsub.s32 0, %v3598
    %v3600 = vrot.slane %v3595, %v3599
    %v3602 = vadd.f32 %v3592, %v3600
    %v3603 = vadd.f32 %v3593, %v3600
    %s3604 = scalar_lea.vmem %s8, 1
    %v3605 = vld [vmem:[%s3604] sm:$0x1]
    %s3606 = scalar_lea.vmem %s9, 1
    %v3607 = vld [vmem:[%s3606] sm:$0x1]
    %v3608 = vsel %vm104, %v3602, 0.0
    %3609 = vadd.xlane.f32.xlu0 %v3608
    %v3610 = vpop.xlane.xlu0 %3609
    %v3611 = vsel %vm104, %v3603, 0.0
    %3612 = vadd.xlane.f32.xlu0 %v3611
    %v3613 = vpop.xlane.xlu0 %3612
    %v3614 = vmul.f32 %v3610, %v111
    %v3615 = vmul.f32 %v3613, %v111
    %v3616 = vsub.f32 %v3602, %v3614
    %v3617 = vsub.f32 %v3603, %v3615
    %v3618 = vmul.f32 %v3616, %v3616
    %v3619 = vmul.f32 %v3617, %v3617
    %v3620 = vsel %vm104, %v3618, 0.0
    %3621 = vadd.xlane.f32.xlu0 %v3620
    %v3622 = vpop.xlane.xlu0 %3621
    %v3623 = vsel %vm104, %v3619, 0.0
    %3624 = vadd.xlane.f32.xlu0 %v3623
    %v3625 = vpop.xlane.xlu0 %3624
    %v3626 = vmul.f32 %v3622, %v111
    %v3627 = vmul.f32 %v3625, %v111
    %v3628 = vadd.f32 %v3626, 1e-06
    %v3629 = vadd.f32 %v3627, 1e-06
    %v3630 = vrsqrt.pop %v3628
    %v3631 = vrsqrt.pop %v3629
    %v3632 = vmul.f32 %v3616, %v3630
    %v3633 = vmul.f32 %v3617, %v3631
    %v3635 = vlaneseq
    %v3636 = vshrl.u32 %v3635, 7
    %v3637 = vsub.s32 0, %v3636
    %v3638 = vrot.slane %v3605, %v3637
    %v3640 = vmul.f32 %v3632, %v3638
    %v3641 = vmul.f32 %v3633, %v3638
    %v3643 = vlaneseq
    %v3644 = vshrl.u32 %v3643, 7
    %v3645 = vsub.s32 0, %v3644
    %v3646 = vrot.slane %v3607, %v3645
    %v3648 = vadd.f32 %v3640, %v3646
    %v3649 = vadd.f32 %v3641, %v3646
    %s3650 = scalar_lea.vmem %s10, 32
    %v3651 = vld [vmem:[%s3650] sm:$0xff]
    %v3652 = vld [vmem:[%s3650 + $0x8] sm:$0xff]
    %v3653 = vld [vmem:[%s3650 + $0x10] sm:$0xff]
    %v3654 = vld [vmem:[%s3650 + $0x18] sm:$0xff]
    %s3655 = scalar_lea.vmem %s11, 1
    %v3656 = vld [vmem:[%s3655] sm:$0x1]
    %v3658 = vlaneseq
    %v3659 = vshrl.u32 %v3658, 7
    %v3660 = vsub.s32 0, %v3659
    %v3661 = vrot.slane %v3656, %v3660
    %v3664 = vsel %vm104, %v3648, 0
    %v3667 = vsel %vm104, %v3649, 0
    %3669 = vmatprep.subr.mxu0 0.0
    %3670 = vmatpush1.msra.mxu0 0.0
    %3671 = vmatprep.subr.mxu0 0.0
    %3672 = vmatpush1.msra.mxu0 0.0
    %3673 = vmatprep.subr.mxu0 0.0
    %3674 = vmatpush1.msra.mxu0 0.0
    %3675 = vmatprep.subr.mxu0 0.0
    %3676 = vmatpush1.msra.mxu0 0.0
    %3677 = vmatprep.subr.mxu0 0.0
    %3678 = vmatpush1.msra.mxu0 0.0
    %3679 = vmatprep.subr.mxu0 0.0
    %3680 = vmatpush1.msra.mxu0 0.0
    %3681 = vmatprep.subr.mxu0 0.0
    %3682 = vmatpush1.msra.mxu0 0.0
    %3683 = vmatprep.subr.mxu0 0.0
    %3684 = vmatpush1.msra.mxu0 0.0
    %3685 = vmatprep.subr.mxu0 0.0
    %3686 = vmatpush1.msra.mxu0 0.0
    %3687 = vmatprep.subr.mxu0 0.0
    %3688 = vmatpush1.msra.mxu0 0.0
    %3689 = vmatprep.subr.mxu0 0.0
    %3690 = vmatpush1.msra.mxu0 0.0
    %3691 = vmatprep.subr.mxu0 0.0
    %3692 = vmatpush1.msra.mxu0 0.0
    %3693 = vmatprep.subr.mxu0 0.0
    %3694 = vmatpush1.msra.mxu0 %v3654
    %3695 = vmatprep.subr.mxu0 0.0
    %3696 = vmatpush1.msra.mxu0 %v3653
    %3697 = vmatprep.subr.mxu0 0.0
    %3698 = vmatpush1.msra.mxu0 %v3652
    %3699 = vmatprep.subr.mxu0 0.0
    %3700 = vmatpush1.msra.mxu0 %v3651
    %3701 = vmatprep.subr.mxu0 0.0
    %3702 = vmatpush2.msra.mxu0 0.0
    %3703 = vmatprep.subr.mxu0 0.0
    %3704 = vmatpush2.msra.mxu0 0.0
    %3705 = vmatprep.subr.mxu0 0.0
    %3706 = vmatpush2.msra.mxu0 0.0
    %3707 = vmatprep.subr.mxu0 0.0
    %3708 = vmatpush2.msra.mxu0 0.0
    %3709 = vmatprep.subr.mxu0 0.0
    %3710 = vmatpush2.msra.mxu0 0.0
    %3711 = vmatprep.subr.mxu0 0.0
    %3712 = vmatpush2.msra.mxu0 0.0
    %3713 = vmatprep.subr.mxu0 0.0
    %3714 = vmatpush2.msra.mxu0 0.0
    %3715 = vmatprep.subr.mxu0 0.0
    %3716 = vmatpush2.msra.mxu0 0.0
    %3717 = vmatprep.subr.mxu0 0.0
    %3718 = vmatpush2.msra.mxu0 0.0
    %3719 = vmatprep.subr.mxu0 0.0
    %3720 = vmatpush2.msra.mxu0 0.0
    %3721 = vmatprep.subr.mxu0 0.0
    %3722 = vmatpush2.msra.mxu0 0.0
    %3723 = vmatprep.subr.mxu0 0.0
    %3724 = vmatpush2.msra.mxu0 0.0
    %3725 = vmatprep.subr.mxu0 0.0
    %3726 = vmatpush2.msra.mxu0 0.0
    %3727 = vmatprep.subr.mxu0 0.0
    %3728 = vmatpush2.msra.mxu0 0.0
    %3729 = vmatprep.subr.mxu0 0.0
    %3730 = vmatpush2.msra.mxu0 0.0
    %3731 = vmatprep.subr.mxu0 0.0
    %3732 = vmatpush2.msra.mxu0 0.0
    %3733 = vmatprep.mubr.f32.mxu0 0.0
    %3734 = vmatmul.mubr.f32.gmra.mxu0 %v3664
    %v3735 = vpop.f32.mrf.mxu0
    %v3736 = vadd.f32 %v3661, %v3735
    %v3737 = vpop.f32.mrf.mxu0
    %3738 = vmatprep.mubr.f32.mxu0 0.0
    %3739 = vmatmul.mubr.f32.gmra.mxu0 %v3667
    %v3740 = vpop.f32.mrf.mxu0
    %v3741 = vadd.f32 %v3661, %v3740
    %v3742 = vpop.f32.mrf.mxu0
    %3743 = vdwg.mxu0
    %v3744 = vmax.f32 %v3736, 0.0
    %v3745 = vmax.f32 %v3741, 0.0
    %s3746 = scalar_lea.vmem %s12, 64
    %v3747 = vld [vmem:[%s3746] sm:$0xff]
    %v3748 = vld [vmem:[%s3746 + $0x8] sm:$0xff]
    %v3749 = vld [vmem:[%s3746 + $0x10] sm:$0xff]
    %v3750 = vld [vmem:[%s3746 + $0x18] sm:$0xff]
    %v3751 = vld [vmem:[%s3746 + $0x20] sm:$0xff]
    %v3752 = vld [vmem:[%s3746 + $0x28] sm:$0xff]
    %v3753 = vld [vmem:[%s3746 + $0x30] sm:$0xff]
    %v3754 = vld [vmem:[%s3746 + $0x38] sm:$0xff]
    %v3756 = vsel %vm1885, %v3744, 0
    %v3759 = vsel %vm1885, %v3745, 0
    %3761 = vmatprep.subr.mxu0 0.0
    %3762 = vmatpush1.msra.mxu0 0.0
    %3763 = vmatprep.subr.mxu0 0.0
    %3764 = vmatpush1.msra.mxu0 0.0
    %3765 = vmatprep.subr.mxu0 0.0
    %3766 = vmatpush1.msra.mxu0 0.0
    %3767 = vmatprep.subr.mxu0 0.0
    %3768 = vmatpush1.msra.mxu0 0.0
    %3769 = vmatprep.subr.mxu0 0.0
    %3770 = vmatpush1.msra.mxu0 0.0
    %3771 = vmatprep.subr.mxu0 0.0
    %3772 = vmatpush1.msra.mxu0 0.0
    %3773 = vmatprep.subr.mxu0 0.0
    %3774 = vmatpush1.msra.mxu0 0.0
    %3775 = vmatprep.subr.mxu0 0.0
    %3776 = vmatpush1.msra.mxu0 0.0
    %3777 = vmatprep.subr.mxu0 0.0
    %3778 = vmatpush1.msra.mxu0 %v3754
    %3779 = vmatprep.subr.mxu0 0.0
    %3780 = vmatpush1.msra.mxu0 %v3753
    %3781 = vmatprep.subr.mxu0 0.0
    %3782 = vmatpush1.msra.mxu0 %v3752
    %3783 = vmatprep.subr.mxu0 0.0
    %3784 = vmatpush1.msra.mxu0 %v3751
    %3785 = vmatprep.subr.mxu0 0.0
    %3786 = vmatpush1.msra.mxu0 %v3750
    %3787 = vmatprep.subr.mxu0 0.0
    %3788 = vmatpush1.msra.mxu0 %v3749
    %3789 = vmatprep.subr.mxu0 0.0
    %3790 = vmatpush1.msra.mxu0 %v3748
    %3791 = vmatprep.subr.mxu0 0.0
    %3792 = vmatpush1.msra.mxu0 %v3747
    %3793 = vmatprep.subr.mxu0 0.0
    %3794 = vmatpush2.msra.mxu0 0.0
    %3795 = vmatprep.subr.mxu0 0.0
    %3796 = vmatpush2.msra.mxu0 0.0
    %3797 = vmatprep.subr.mxu0 0.0
    %3798 = vmatpush2.msra.mxu0 0.0
    %3799 = vmatprep.subr.mxu0 0.0
    %3800 = vmatpush2.msra.mxu0 0.0
    %3801 = vmatprep.subr.mxu0 0.0
    %3802 = vmatpush2.msra.mxu0 0.0
    %3803 = vmatprep.subr.mxu0 0.0
    %3804 = vmatpush2.msra.mxu0 0.0
    %3805 = vmatprep.subr.mxu0 0.0
    %3806 = vmatpush2.msra.mxu0 0.0
    %3807 = vmatprep.subr.mxu0 0.0
    %3808 = vmatpush2.msra.mxu0 0.0
    %3809 = vmatprep.subr.mxu0 0.0
    %3810 = vmatpush2.msra.mxu0 0.0
    %3811 = vmatprep.subr.mxu0 0.0
    %3812 = vmatpush2.msra.mxu0 0.0
    %3813 = vmatprep.subr.mxu0 0.0
    %3814 = vmatpush2.msra.mxu0 0.0
    %3815 = vmatprep.subr.mxu0 0.0
    %3816 = vmatpush2.msra.mxu0 0.0
    %3817 = vmatprep.subr.mxu0 0.0
    %3818 = vmatpush2.msra.mxu0 0.0
    %3819 = vmatprep.subr.mxu0 0.0
    %3820 = vmatpush2.msra.mxu0 0.0
    %3821 = vmatprep.subr.mxu0 0.0
    %3822 = vmatpush2.msra.mxu0 0.0
    %3823 = vmatprep.subr.mxu0 0.0
    %3824 = vmatpush2.msra.mxu0 0.0
    %3825 = vmatprep.mubr.f32.mxu0 0.0
    %3826 = vmatmul.mubr.f32.gmra.mxu0 %v3756
    %v3827 = vpop.f32.mrf.mxu0
    %v3828 = vadd.f32 0.0, %v3827
    %v3829 = vpop.f32.mrf.mxu0
    %3830 = vmatprep.mubr.f32.mxu0 0.0
    %3831 = vmatmul.mubr.f32.gmra.mxu0 %v3759
    %v3832 = vpop.f32.mrf.mxu0
    %v3833 = vadd.f32 0.0, %v3832
    %v3834 = vpop.f32.mrf.mxu0
    %3835 = vdwg.mxu0
    %v3836 = vadd.f32 %v3602, %v3828
    %v3837 = vadd.f32 %v3603, %v3833
    %s3838 = scalar_lea.vmem %s13, 1
    %v3839 = vld [vmem:[%s3838] sm:$0x1]
    %v3841 = vlaneseq
    %v3842 = vshrl.u32 %v3841, 7
    %v3843 = vsub.s32 0, %v3842
    %v3844 = vrot.slane %v3839, %v3843
    %v3846 = vadd.f32 %v3836, %v3844
    %v3847 = vadd.f32 %v3837, %v3844
    %v3848 = vld [vmem:[%s14] sm:$0x1]
    %v3849 = vld [vmem:[%s15] sm:$0x1]
    %v3850 = vsel %vm104, %v3846, 0.0
    %3851 = vadd.xlane.f32.xlu0 %v3850
    %v3852 = vpop.xlane.xlu0 %3851
    %v3853 = vsel %vm104, %v3847, 0.0
    %3854 = vadd.xlane.f32.xlu0 %v3853
    %v3855 = vpop.xlane.xlu0 %3854
    %v3856 = vmul.f32 %v3852, %v111
    %v3857 = vmul.f32 %v3855, %v111
    %v3858 = vsub.f32 %v3846, %v3856
    %v3859 = vsub.f32 %v3847, %v3857
    %v3860 = vmul.f32 %v3858, %v3858
    %v3861 = vmul.f32 %v3859, %v3859
    %v3862 = vsel %vm104, %v3860, 0.0
    %3863 = vadd.xlane.f32.xlu0 %v3862
    %v3864 = vpop.xlane.xlu0 %3863
    %v3865 = vsel %vm104, %v3861, 0.0
    %3866 = vadd.xlane.f32.xlu0 %v3865
    %v3867 = vpop.xlane.xlu0 %3866
    %v3868 = vmul.f32 %v3864, %v111
    %v3869 = vmul.f32 %v3867, %v111
    %v3870 = vadd.f32 %v3868, 1e-06
    %v3871 = vadd.f32 %v3869, 1e-06
    %v3872 = vrsqrt.pop %v3870
    %v3873 = vrsqrt.pop %v3871
    %v3874 = vmul.f32 %v3858, %v3872
    %v3875 = vmul.f32 %v3859, %v3873
    %v3877 = vlaneseq
    %v3878 = vshrl.u32 %v3877, 7
    %v3879 = vsub.s32 0, %v3878
    %v3880 = vrot.slane %v3848, %v3879
    %v3882 = vmul.f32 %v3874, %v3880
    %v3883 = vmul.f32 %v3875, %v3880
    %v3885 = vlaneseq
    %v3886 = vshrl.u32 %v3885, 7
    %v3887 = vsub.s32 0, %v3886
    %v3888 = vrot.slane %v3849, %v3887
    %v3890 = vadd.f32 %v3882, %v3888
    %v3891 = vadd.f32 %v3883, %v3888
    %3892 = vst.msk [vmem:[#allocation8] sm:$0xff] %vm104, %v3890
    %3893 = vst.msk [vmem:[#allocation8 + $0x8] sm:$0xff] %vm104, %v3891
    // Predicated region
    $region78: #{tpu_custom_call.1} parent=1 // pred_check
      _
    $region79: #{tpu_custom_call.1} parent=1 // pred_check_branch
      %3895 = sbr.rel (0) target = $region81
    $region80: #{tpu_custom_call.1} parent=1 // pred_region
      %s3897 = ssub.s32 256, 256
      %3898 = vsyncadd [#allocation4], %s3897
      %s3899 = sshll.u32 [#allocation8], 4
      %s3900 = int_to_ptr.vmem [resolvable:$true] %s3899
      %3905 = dma.vmem_to_hbm [thread:$0]  %s3900, 256, %s16, [#allocation4], 128, 128, 8
    $region81: #{tpu_custom_call.1} parent=1 // pred_fallthru
      _
    // Predicated region
    $region82: #{tpu_custom_call.1} parent=1 // pred_check
      _
    $region83: #{tpu_custom_call.1} parent=1 // pred_check_branch
      %3907 = sbr.rel (0) target = $region85
    $region84: #{tpu_custom_call.1} parent=1 // pred_region
      %3908 = dma.done [#allocation4], 256
    $region85: #{tpu_custom_call.1} parent=1 // pred_fallthru
      _
    %3909 = vsyncpa [#allocation3], 1
    %3910 = vsyncpa [#allocation6], 1
    %3911 = vsyncpa [#allocation4], 1

</llo_original>
